<compile_context>
chip_gen: v7x
topology: tpu7x:2x2x1
jax: 0.10.0
libtpu: 0.0.40
codegen_flags: <defaults>
</compile_context>

<pallas_src>
import jax
import jax.numpy as jnp
from jax.experimental import pallas as pl
from jax.experimental.pallas import tpu as pltpu


# ----------------------------- kernel ---------------------------------------


def _reward_mlp_kernel(x_ref,
                       w1_ref, b1_ref,      # eval-BatchNorm already folded in
                       w2_ref, b2_ref,
                       w3_ref,
                       out_ref):
    # ---- Linear(D, 64) [BN folded] : bf16 MXU inputs, f32 accumulate ----
    h1 = jnp.dot(x_ref[...], w1_ref[...],
                 preferred_element_type=jnp.float32) + b1_ref[...]      # (TB, 64)
    h1 = jnp.maximum(h1, 0.0)
    # ---- Dropout(p=0.2): identity in eval ----

    # ---- Linear(64, 32) + ReLU (f32) ----
    h2 = jnp.dot(h1, w2_ref[...],
                 preferred_element_type=jnp.float32) + b2_ref[...]      # (TB, 32)
    h2 = jnp.maximum(h2, 0.0)
    # ---- Dropout(p=0.2): identity in eval ----

    # ---- Linear(32, 1) as VPU multiply + lane reduction -> lane-dense row ----
    y = jnp.sum(h2 * w3_ref[...], axis=-1)                              # (TB,)
    out_ref[...] = y[None, :]                                           # (1, TB)


# ----------------------------- tiling helpers --------------------------------


def _round_up(n, m):
    return ((n + m - 1) // m) * m


def _full_spec(arr):
    zeros = (0,) * arr.ndim
    return pl.BlockSpec(arr.shape, lambda i, zeros=zeros: zeros)


def _vmem_bytes_per_step(TB, D, x_itemsize):
    """Lane-padded VMEM footprint of one grid step (incl. intermediates)."""
    lanes_x = _round_up(max(D, 1), 128)
    x_tile = 2 * TB * lanes_x * x_itemsize     # double-buffered x tile
    h1 = TB * 128 * 4                          # (TB, 64) f32, lane-padded to 128
    h2 = TB * 128 * 4                          # (TB, 32) f32, lane-padded to 128
    y_out = 2 * 8 * TB * 4                     # (1, TB) f32, sublane-padded, dbl-buf
    slack = 2 * 1024 * 1024                    # weights + compiler temporaries
    return x_tile + h1 + h2 + y_out + slack


def _pick_batch_tile(B, D, x_itemsize):
    """Pick TB and a matching vmem_limit_bytes for the current TPU generation."""
    MIN_TB, MAX_TB = 256, 32768
    try:
        vmem_cap = int(pltpu.get_tpu_info().vmem_capacity_bytes)
    except Exception:
        vmem_cap = 64 * 1024 * 1024            # conservative fallback (v7x-sized)

    budget = int(0.45 * vmem_cap)              # keep well under physical VMEM
    lanes_x = _round_up(max(D, 1), 128)
    per_row = 2 * lanes_x * x_itemsize + 2 * 128 * 4 + 2 * 8 * 4
    slack = 2 * 1024 * 1024

    tb_cap = (max(budget - slack, per_row * MIN_TB) // per_row) // MIN_TB * MIN_TB
    tb_cap = max(MIN_TB, min(MAX_TB, tb_cap))

    TB = min(tb_cap, _round_up(B, MIN_TB))     # don't over-pad tiny batches
    # Prefer >= 2 grid steps so the "parallel" axis can shard across v7x's 2 TCs.
    if B > MIN_TB and pl.cdiv(B, TB) < 2:
        TB = max(MIN_TB, _round_up(pl.cdiv(B, 2), MIN_TB))

    vmem_need = _vmem_bytes_per_step(TB, D, x_itemsize)
    vmem_limit = min(int(0.9 * vmem_cap),
                     max(32 * 1024 * 1024, int(1.25 * vmem_need)))
    return TB, vmem_limit


# ----------------------------- wrapper ---------------------------------------


def reward_network_forward(x, params, *, x_dtype=jnp.bfloat16):
    """x: (B, D) float. Returns (B, 1) float32 (eval-mode forward)."""
    B, D = x.shape
    (w1, b1, bn_g, bn_b, bn_m, bn_v, w2, b2, w3, b3) = params

    # ---- Fold eval-mode BatchNorm into the first Linear ----
    scale = bn_g * jax.lax.rsqrt(bn_v + 1e-5)            # (1, 64)
    w1f = (w1 * scale).astype(x_dtype)                   # (D, 64)  bf16 MXU operand
    b1f = (b1 - bn_m) * scale + bn_b                     # (1, 64)  f32
    w3r = w3.reshape(1, -1)                              # (1, 32)  f32

    if x.dtype != x_dtype:
        # TODO(synk): callers that can produce x in bf16 upstream should do so
        #             to avoid this extra HBM pass over x.
        x = x.astype(x_dtype)

    x_itemsize = jnp.dtype(x_dtype).itemsize
    TB, vmem_limit = _pick_batch_tile(B, D, x_itemsize)
    n_tiles = pl.cdiv(B, TB)
    B_pad = n_tiles * TB                                  # only the OUTPUT is padded

    grid_spec = pltpu.PrefetchScalarGridSpec(
        num_scalar_prefetch=0,
        grid=(n_tiles,),
        in_specs=[
            # x tile (batch-tiled); trailing partial block reads OOB garbage
            # rows which are discarded by the wrapper-side slice.
            pl.BlockSpec((TB, D), lambda i: (i, 0)),
            _full_spec(w1f), _full_spec(b1f),
            _full_spec(w2), _full_spec(b2),
            _full_spec(w3r),
        ],
        # Lane-dense output: one (1, TB) row per grid step into (1, B_pad).
        out_specs=pl.BlockSpec((1, TB), lambda i: (0, i)),
    )

    out = pl.pallas_call(
        _reward_mlp_kernel,
        out_shape=jax.ShapeDtypeStruct((1, B_pad), jnp.float32),
        grid_spec=grid_spec,
        compiler_params=pltpu.CompilerParams(
            dimension_semantics=("parallel",),
            vmem_limit_bytes=vmem_limit),
    )(x, w1f, b1f, w2, b2, w3r)

    # Final bias added once here (kept out of the kernel); drop padded rows.
    return out.reshape(-1)[:B].reshape(B, 1) + b3.reshape(1, 1)


# ----------------------------- reference & test ------------------------------


def init_params(key, input_dim):
    """Deterministic synthetic parameters mirroring the PyTorch module shapes.
    Linear weights are stored transposed: (in_features, out_features)."""
    ks = jax.random.split(key, 10)

    def linear(kw, kb, fan_in, fan_out):
        bound = float(fan_in) ** -0.5
        w = jax.random.uniform(kw, (fan_in, fan_out), jnp.float32, -bound, bound)
        b = jax.random.uniform(kb, (1, fan_out), jnp.float32, -bound, bound)
        return w, b

    w1, b1 = linear(ks[0], ks[1], input_dim, 64)
    w2, b2 = linear(ks[2], ks[3], 64, 32)
    w3, b3 = linear(ks[4], ks[5], 32, 1)

    # BatchNorm1d(64): non-trivial running stats so the BN-folding is exercised.
    bn_g = jax.random.uniform(ks[6], (1, 64), jnp.float32, 0.5, 1.5)
    bn_b = 0.1 * jax.random.normal(ks[7], (1, 64), jnp.float32)
    bn_m = 0.1 * jax.random.normal(ks[8], (1, 64), jnp.float32)
    bn_v = jax.random.uniform(ks[9], (1, 64), jnp.float32, 0.5, 1.5)

    return (w1, b1, bn_g, bn_b, bn_m, bn_v, w2, b2, w3, b3)


def reference_forward(x, params):
    (w1, b1, bn_g, bn_b, bn_m, bn_v, w2, b2, w3, b3) = params
    h1 = x @ w1 + b1
    h1 = (h1 - bn_m) * jax.lax.rsqrt(bn_v + 1e-5) * bn_g + bn_b
    h1 = jnp.maximum(h1, 0.0)
    h2 = jnp.maximum(h1 @ w2 + b2, 0.0)
    return h2 @ w3 + b3


if __name__ == "__main__":
    key = jax.random.PRNGKey(0)
    k_x, k_p = jax.random.split(key)

    B, D = 8, 16                      # small shapes: batch=8, input_dim=16
    x = jax.random.normal(k_x, (B, D), jnp.float32)
    params = init_params(k_p, D)

    out = jax.block_until_ready(reward_network_forward(x, params))
    ref = reference_forward(x, params)
    assert out.shape == (B, 1)
    # Tolerance loosened for bf16 streaming of x / w1 (accumulation in f32).
    assert jnp.allclose(out, ref, atol=2e-2, rtol=2e-2), float(jnp.max(jnp.abs(out - ref)))

    # Second (still small) case: forces >=2 grid steps / the megacore-split path.
    B2 = 512
    x2 = jax.random.normal(jax.random.PRNGKey(1), (B2, D), jnp.float32)
    out2 = jax.block_until_ready(reward_network_forward(x2, params))
    ref2 = reference_forward(x2, params)
    assert out2.shape == (B2, 1)
    assert jnp.allclose(out2, ref2, atol=2e-2, rtol=2e-2), float(jnp.max(jnp.abs(out2 - ref2)))

    print("KERNEL_OK")
</pallas_src>

<mosaic_0001>
module attributes {stable_mosaic.version = 11 : i64} {
  func.func @_reward_mlp_kernel(%arg0: i32, %arg1: memref<256x16xbf16, #tpu.memory_space<vmem>>, %arg2: memref<16x64xbf16, #tpu.memory_space<vmem>>, %arg3: memref<1x64xf32, #tpu.memory_space<vmem>>, %arg4: memref<64x32xf32, #tpu.memory_space<vmem>>, %arg5: memref<1x32xf32, #tpu.memory_space<vmem>>, %arg6: memref<1x32xf32, #tpu.memory_space<vmem>>, %arg7: memref<1x256xf32, #tpu.memory_space<vmem>>) attributes {dimension_semantics = [#tpu.dimension_semantics<parallel>], iteration_bounds = array<i64: 1>, scalar_prefetch = 0 : i64, scratch_operands = 0 : i64, tpu.core_type = #tpu.core_type<tc>, window_params = [{transform_indices = @transform_0, window_bounds = array<i64: 256, 16>}, {pipeline_mode = #tpu.pipeline_mode<synchronous>, transform_indices = @transform_1, window_bounds = array<i64: 16, 64>}, {pipeline_mode = #tpu.pipeline_mode<synchronous>, transform_indices = @transform_2, window_bounds = array<i64: 1, 64>}, {pipeline_mode = #tpu.pipeline_mode<synchronous>, transform_indices = @transform_3, window_bounds = array<i64: 64, 32>}, {pipeline_mode = #tpu.pipeline_mode<synchronous>, transform_indices = @transform_4, window_bounds = array<i64: 1, 32>}, {pipeline_mode = #tpu.pipeline_mode<synchronous>, transform_indices = @transform_5, window_bounds = array<i64: 1, 32>}, {transform_indices = @transform_6, window_bounds = array<i64: 1, 256>}]} {
    %c0 = arith.constant 0 : index
    %c0_0 = arith.constant 0 : index
    %0 = vector.load %arg1[%c0, %c0_0] : memref<256x16xbf16, #tpu.memory_space<vmem>>, vector<256x16xbf16>
    %c0_1 = arith.constant 0 : index
    %c0_2 = arith.constant 0 : index
    %1 = vector.load %arg2[%c0_1, %c0_2] : memref<16x64xbf16, #tpu.memory_space<vmem>>, vector<16x64xbf16>
    %cst = arith.constant dense<0.000000e+00> : vector<256x64xf32>
    %2 = tpu.matmul %0, %1, %cst {dimension_numbers = #tpu.dot_dimension_numbers<[1], [0], [0], [1], [0, 0, 1, 1], [], []>} : vector<256x16xbf16>, vector<16x64xbf16>, vector<256x64xf32> -> vector<256x64xf32>
    %c0_3 = arith.constant 0 : index
    %c0_4 = arith.constant 0 : index
    %3 = vector.load %arg3[%c0_3, %c0_4] : memref<1x64xf32, #tpu.memory_space<vmem>>, vector<1x64xf32>
    %4 = vector.broadcast %3 : vector<1x64xf32> to vector<256x64xf32>
    %5 = arith.addf %2, %4 : vector<256x64xf32>
    %cst_5 = arith.constant 0.000000e+00 : f32
    %6 = vector.broadcast %cst_5 : f32 to vector<256x64xf32>
    %7 = arith.maximumf %5, %6 : vector<256x64xf32>
    %c0_6 = arith.constant 0 : index
    %c0_7 = arith.constant 0 : index
    %8 = vector.load %arg4[%c0_6, %c0_7] : memref<64x32xf32, #tpu.memory_space<vmem>>, vector<64x32xf32>
    %cst_8 = arith.constant dense<0.000000e+00> : vector<256x32xf32>
    %9 = tpu.matmul %7, %8, %cst_8 {dimension_numbers = #tpu.dot_dimension_numbers<[1], [0], [0], [1], [0, 0, 1, 1], [], []>} : vector<256x64xf32>, vector<64x32xf32>, vector<256x32xf32> -> vector<256x32xf32>
    %c0_9 = arith.constant 0 : index
    %c0_10 = arith.constant 0 : index
    %10 = vector.load %arg5[%c0_9, %c0_10] : memref<1x32xf32, #tpu.memory_space<vmem>>, vector<1x32xf32>
    %11 = vector.broadcast %10 : vector<1x32xf32> to vector<256x32xf32>
    %12 = arith.addf %9, %11 : vector<256x32xf32>
    %cst_11 = arith.constant 0.000000e+00 : f32
    %13 = vector.broadcast %cst_11 : f32 to vector<256x32xf32>
    %14 = arith.maximumf %12, %13 : vector<256x32xf32>
    %c0_12 = arith.constant 0 : index
    %c0_13 = arith.constant 0 : index
    %15 = vector.load %arg6[%c0_12, %c0_13] : memref<1x32xf32, #tpu.memory_space<vmem>>, vector<1x32xf32>
    %16 = vector.broadcast %15 : vector<1x32xf32> to vector<256x32xf32>
    %17 = arith.mulf %14, %16 : vector<256x32xf32>
    %cst_14 = arith.constant dense<0.000000e+00> : vector<256xf32>
    %18 = vector.multi_reduction <add>, %17, %cst_14 [1] : vector<256x32xf32> to vector<256xf32>
    %19 = vector.shape_cast %18 : vector<256xf32> to vector<1x256xf32>
    %c0_15 = arith.constant 0 : index
    %c0_16 = arith.constant 0 : index
    %20 = vector.load %arg7[%c0_15, %c0_16] : memref<1x256xf32, #tpu.memory_space<vmem>>, vector<1x256xf32>
    tpu.vector_store %arg7[%c0_15, %c0_16], %19 {strides = array<i32>} : memref<1x256xf32, #tpu.memory_space<vmem>>, vector<1x256xf32>,
    return
  }
  func.func @transform_0(%arg0: i32) -> (i32, i32) {
    %c0_i32 = arith.constant 0 : i32
    %c0_i32_0 = arith.constant 0 : i32
    return %arg0, %c0_i32 : i32, i32
  }
  func.func @transform_1(%arg0: i32) -> (i32, i32) {
    %c0_i32 = arith.constant 0 : i32
    %c0_i32_0 = arith.constant 0 : i32
    %c0_i32_1 = arith.constant 0 : i32
    return %c0_i32, %c0_i32_0 : i32, i32
  }
  func.func @transform_2(%arg0: i32) -> (i32, i32) {
    %c0_i32 = arith.constant 0 : i32
    %c0_i32_0 = arith.constant 0 : i32
    %c0_i32_1 = arith.constant 0 : i32
    return %c0_i32, %c0_i32_0 : i32, i32
  }
  func.func @transform_3(%arg0: i32) -> (i32, i32) {
    %c0_i32 = arith.constant 0 : i32
    %c0_i32_0 = arith.constant 0 : i32
    %c0_i32_1 = arith.constant 0 : i32
    return %c0_i32, %c0_i32_0 : i32, i32
  }
  func.func @transform_4(%arg0: i32) -> (i32, i32) {
    %c0_i32 = arith.constant 0 : i32
    %c0_i32_0 = arith.constant 0 : i32
    %c0_i32_1 = arith.constant 0 : i32
    return %c0_i32, %c0_i32_0 : i32, i32
  }
  func.func @transform_5(%arg0: i32) -> (i32, i32) {
    %c0_i32 = arith.constant 0 : i32
    %c0_i32_0 = arith.constant 0 : i32
    %c0_i32_1 = arith.constant 0 : i32
    return %c0_i32, %c0_i32_0 : i32, i32
  }
  func.func @transform_6(%arg0: i32) -> (i32, i32) {
    %c0_i32 = arith.constant 0 : i32
    %c0_i32_0 = arith.constant 0 : i32
    return %c0_i32, %arg0 : i32, i32
  }
}

</mosaic_0001>

<llo_original>
// kernel: tpu_custom_call.1
$region0: #{tpu_custom_call.1}
  #allocation0 [shape = 'u32[]', space=smem, size = 0x4, offset = 0x4, fixed_abs, tag = 'smem constant byte address 0x4 - core index']
  #allocation1 [shape = 'u32[144,128]{1,0:T(1,128)}', space=vmem, size = 0x12000, scoped, tag = 'internal scratch']
  %s0 = inlined_call_operand.vmem [shape: bf16[8,16], index: 0, kind: input, shape index: {}]
  %s1 = inlined_call_operand.vmem [shape: bf16[16,64], index: 1, kind: input, shape index: {}]
  %s2 = inlined_call_operand.vmem [shape: f32[1,64], index: 2, kind: input, shape index: {}]
  %s3 = inlined_call_operand.vmem [shape: f32[64,32], index: 3, kind: input, shape index: {}]
  %s4 = inlined_call_operand.vmem [shape: f32[1,32], index: 4, kind: input, shape index: {}]
  %s5 = inlined_call_operand.vmem [shape: f32[1,32], index: 5, kind: input, shape index: {}]
  %s6 = inlined_call_operand.hbm [shape: f32[1,256], index: 6, kind: output, shape index: {}]
  %s7 = sld [smem:[#allocation0]]
  $region34: #{tpu_custom_call.1} parent=0
    _
  %s9 = ssub.s32 1, %s7
  %s10 = scalar_select 0, %s9, %s7
  $region1: #{tpu_custom_call.1} parent=0
    #allocation2 [shape = 'u8[1024]{0}', space=vmem, size = 0x400, scoped, tag = 'output window, operand 0, single buffered']
    #allocation3 [shape = 's32[1]{0}', space=sflag, size = 0x4, scoped, tag = 'scoped memory for tpu_custom_call.1']
    %11 = vsyncpa [#allocation3], 0
    // Predicated region
    $region2: #{tpu_custom_call.1} parent=1 // pred_check
      _
    $region3: #{tpu_custom_call.1} parent=1 // pred_check_branch
      %13 = sbr.rel (0) target = $region5
    $region4: #{tpu_custom_call.1} parent=1 // pred_region
      _
    $region5: #{tpu_custom_call.1} parent=1 // pred_fallthru
      _
    // Predicated region
    $region6: #{tpu_custom_call.1} parent=1 // pred_check
      _
    $region7: #{tpu_custom_call.1} parent=1 // pred_check_branch
      %15 = sbr.rel (0) target = $region9
    $region8: #{tpu_custom_call.1} parent=1 // pred_region
      _
    $region9: #{tpu_custom_call.1} parent=1 // pred_fallthru
      _
    // Predicated region
    $region10: #{tpu_custom_call.1} parent=1 // pred_check
      _
    $region11: #{tpu_custom_call.1} parent=1 // pred_check_branch
      %17 = sbr.rel (0) target = $region13
    $region12: #{tpu_custom_call.1} parent=1 // pred_region
      _
    $region13: #{tpu_custom_call.1} parent=1 // pred_fallthru
      _
    // Predicated region
    $region14: #{tpu_custom_call.1} parent=1 // pred_check
      _
    $region15: #{tpu_custom_call.1} parent=1 // pred_check_branch
      %19 = sbr.rel (0) target = $region17
    $region16: #{tpu_custom_call.1} parent=1 // pred_region
      _
    $region17: #{tpu_custom_call.1} parent=1 // pred_fallthru
      _
    // Predicated region
    $region18: #{tpu_custom_call.1} parent=1 // pred_check
      _
    $region19: #{tpu_custom_call.1} parent=1 // pred_check_branch
      %21 = sbr.rel (0) target = $region21
    $region20: #{tpu_custom_call.1} parent=1 // pred_region
      _
    $region21: #{tpu_custom_call.1} parent=1 // pred_fallthru
      _
    // Predicated region
    $region22: #{tpu_custom_call.1} parent=1 // pred_check
      _
    $region23: #{tpu_custom_call.1} parent=1 // pred_check_branch
      %23 = sbr.rel (0) target = $region25
    $region24: #{tpu_custom_call.1} parent=1 // pred_region
      _
    $region25: #{tpu_custom_call.1} parent=1 // pred_fallthru
      _
    %v25 = vld [vmem:[%s0] sm:$0xf]
    %v26 = vld [vmem:[%s0 + $0x4] sm:$0xf]
    %v27 = vld [vmem:[%s0 + $0x8] sm:$0xf]
    %v28 = vld [vmem:[%s0 + $0xc] sm:$0xf]
    %v29 = vld [vmem:[%s0 + $0x10] sm:$0xf]
    %v30 = vld [vmem:[%s0 + $0x14] sm:$0xf]
    %v31 = vld [vmem:[%s0 + $0x18] sm:$0xf]
    %v32 = vld [vmem:[%s0 + $0x1c] sm:$0xf]
    %v33 = vld [vmem:[%s0 + $0x20] sm:$0xf]
    %v34 = vld [vmem:[%s0 + $0x24] sm:$0xf]
    %v35 = vld [vmem:[%s0 + $0x28] sm:$0xf]
    %v36 = vld [vmem:[%s0 + $0x2c] sm:$0xf]
    %v37 = vld [vmem:[%s0 + $0x30] sm:$0xf]
    %v38 = vld [vmem:[%s0 + $0x34] sm:$0xf]
    %v39 = vld [vmem:[%s0 + $0x38] sm:$0xf]
    %v40 = vld [vmem:[%s0 + $0x3c] sm:$0xf]
    %v41 = vld [vmem:[%s0 + $0x40] sm:$0xf]
    %v42 = vld [vmem:[%s0 + $0x44] sm:$0xf]
    %v43 = vld [vmem:[%s0 + $0x48] sm:$0xf]
    %v44 = vld [vmem:[%s0 + $0x4c] sm:$0xf]
    %v45 = vld [vmem:[%s0 + $0x50] sm:$0xf]
    %v46 = vld [vmem:[%s0 + $0x54] sm:$0xf]
    %v47 = vld [vmem:[%s0 + $0x58] sm:$0xf]
    %v48 = vld [vmem:[%s0 + $0x5c] sm:$0xf]
    %v49 = vld [vmem:[%s0 + $0x60] sm:$0xf]
    %v50 = vld [vmem:[%s0 + $0x64] sm:$0xf]
    %v51 = vld [vmem:[%s0 + $0x68] sm:$0xf]
    %v52 = vld [vmem:[%s0 + $0x6c] sm:$0xf]
    %v53 = vld [vmem:[%s0 + $0x70] sm:$0xf]
    %v54 = vld [vmem:[%s0 + $0x74] sm:$0xf]
    %v55 = vld [vmem:[%s0 + $0x78] sm:$0xf]
    %v56 = vld [vmem:[%s0 + $0x7c] sm:$0xf]
    %v57 = vld [vmem:[%s1] sm:$0xf]
    %v58 = vld [vmem:[%s1 + $0x4] sm:$0xf]
    %v59 = vld [vmem:[%s2] sm:$0x1]
    %v61 = vlaneseq
    %v62 = vshrl.u32 %v61, 7
    %v63 = vsub.s32 0, %v62
    %v64 = vrot.slane %v59, %v63
    %v98 = vunpack.c.l.b16 %v25
    %v99 = vunpack.c.l.b16 %v26
    %v100 = vunpack.c.l.b16 %v27
    %v101 = vunpack.c.l.b16 %v28
    %v102 = vunpack.c.l.b16 %v29
    %v103 = vunpack.c.l.b16 %v30
    %v104 = vunpack.c.l.b16 %v31
    %v105 = vunpack.c.l.b16 %v32
    %v106 = vunpack.c.l.b16 %v33
    %v107 = vunpack.c.l.b16 %v34
    %v108 = vunpack.c.l.b16 %v35
    %v109 = vunpack.c.l.b16 %v36
    %v110 = vunpack.c.l.b16 %v37
    %v111 = vunpack.c.l.b16 %v38
    %v112 = vunpack.c.l.b16 %v39
    %v113 = vunpack.c.l.b16 %v40
    %v114 = vunpack.c.l.b16 %v41
    %v115 = vunpack.c.l.b16 %v42
    %v116 = vunpack.c.l.b16 %v43
    %v117 = vunpack.c.l.b16 %v44
    %v118 = vunpack.c.l.b16 %v45
    %v119 = vunpack.c.l.b16 %v46
    %v120 = vunpack.c.l.b16 %v47
    %v121 = vunpack.c.l.b16 %v48
    %v122 = vunpack.c.l.b16 %v49
    %v123 = vunpack.c.l.b16 %v50
    %v124 = vunpack.c.l.b16 %v51
    %v125 = vunpack.c.l.b16 %v52
    %v126 = vunpack.c.l.b16 %v53
    %v127 = vunpack.c.l.b16 %v54
    %v128 = vunpack.c.l.b16 %v55
    %v129 = vunpack.c.l.b16 %v56
    %v130 = vpack.c.b16 %v99, %v98
    %v131 = vpack.c.b16 %v101, %v100
    %v132 = vpack.c.b16 %v103, %v102
    %v133 = vpack.c.b16 %v105, %v104
    %v134 = vpack.c.b16 %v107, %v106
    %v135 = vpack.c.b16 %v109, %v108
    %v136 = vpack.c.b16 %v111, %v110
    %v137 = vpack.c.b16 %v113, %v112
    %v138 = vpack.c.b16 %v115, %v114
    %v139 = vpack.c.b16 %v117, %v116
    %v140 = vpack.c.b16 %v119, %v118
    %v141 = vpack.c.b16 %v121, %v120
    %v142 = vpack.c.b16 %v123, %v122
    %v143 = vpack.c.b16 %v125, %v124
    %v144 = vpack.c.b16 %v127, %v126
    %v145 = vpack.c.b16 %v129, %v128
    %v148 = vunpack.c.l.b16 %v57
    %v149 = vunpack.c.l.b16 %v58
    %v150 = vpack.c.b16 %v149, %v148
    %vm152 = vcmask 130048
    %v154 = vsel %vm152, %v130, 0
    %v157 = vsel %vm152, %v131, 0
    %v160 = vsel %vm152, %v132, 0
    %v163 = vsel %vm152, %v133, 0
    %v166 = vsel %vm152, %v134, 0
    %v169 = vsel %vm152, %v135, 0
    %v172 = vsel %vm152, %v136, 0
    %v175 = vsel %vm152, %v137, 0
    %v178 = vsel %vm152, %v138, 0
    %v181 = vsel %vm152, %v139, 0
    %v184 = vsel %vm152, %v140, 0
    %v187 = vsel %vm152, %v141, 0
    %v190 = vsel %vm152, %v142, 0
    %v193 = vsel %vm152, %v143, 0
    %v196 = vsel %vm152, %v144, 0
    %v199 = vsel %vm152, %v145, 0
    %201 = vmatprep.subr.bf16.mxu0 0
    %202 = vmatpush1.bf16.msra.mxu0 %v150
    %203 = vmatprep.subr.bf16.mxu0 0
    %204 = vmatpush1.bf16.msra.mxu0 0
    %205 = vmatprep.subr.bf16.mxu0 0
    %206 = vmatpush1.bf16.msra.mxu0 0
    %207 = vmatprep.subr.bf16.mxu0 0
    %208 = vmatpush1.bf16.msra.mxu0 0
    %209 = vmatprep.subr.bf16.mxu0 0
    %210 = vmatpush1.bf16.msra.mxu0 0
    %211 = vmatprep.subr.bf16.mxu0 0
    %212 = vmatpush1.bf16.msra.mxu0 0
    %213 = vmatprep.subr.bf16.mxu0 0
    %214 = vmatpush1.bf16.msra.mxu0 0
    %215 = vmatprep.subr.bf16.mxu0 0
    %216 = vmatpush1.bf16.msra.mxu0 0
    %217 = vmatprep.subr.bf16.mxu0 0
    %218 = vmatpush1.bf16.msra.mxu0 0
    %219 = vmatprep.subr.bf16.mxu0 0
    %220 = vmatpush1.bf16.msra.mxu0 0
    %221 = vmatprep.subr.bf16.mxu0 0
    %222 = vmatpush1.bf16.msra.mxu0 0
    %223 = vmatprep.subr.bf16.mxu0 0
    %224 = vmatpush1.bf16.msra.mxu0 0
    %225 = vmatprep.subr.bf16.mxu0 0
    %226 = vmatpush1.bf16.msra.mxu0 0
    %227 = vmatprep.subr.bf16.mxu0 0
    %228 = vmatpush1.bf16.msra.mxu0 0
    %229 = vmatprep.subr.bf16.mxu0 0
    %230 = vmatpush1.bf16.msra.mxu0 0
    %231 = vmatprep.subr.bf16.mxu0 0
    %232 = vmatpush1.bf16.msra.mxu0 0
    %233 = vmatprep.mubr.bf16.mxu0 0
    %234 = vmatmul.mubr.bf16.gmra.mrb[0].mxu0 %v154
    %v235 = vpop.f32.mrb[0].mxu0
    %v236 = vadd.f32 %v64, %v235
    %v237 = vpop.f32.mrb[0].mxu0
    %v238 = vpop.f32.mrb[0].mxu0
    %v239 = vadd.f32 %v64, %v238
    %v240 = vpop.f32.mrb[0].mxu0
    %241 = vmatprep.mubr.bf16.mxu0 0
    %242 = vmatmul.mubr.bf16.gmra.mrb[0].mxu0 %v157
    %v243 = vpop.f32.mrb[0].mxu0
    %v244 = vadd.f32 %v64, %v243
    %v245 = vpop.f32.mrb[0].mxu0
    %v246 = vpop.f32.mrb[0].mxu0
    %v247 = vadd.f32 %v64, %v246
    %v248 = vpop.f32.mrb[0].mxu0
    %249 = vmatprep.mubr.bf16.mxu0 0
    %250 = vmatmul.mubr.bf16.gmra.mrb[0].mxu0 %v160
    %v251 = vpop.f32.mrb[0].mxu0
    %v252 = vadd.f32 %v64, %v251
    %v253 = vpop.f32.mrb[0].mxu0
    %v254 = vpop.f32.mrb[0].mxu0
    %v255 = vadd.f32 %v64, %v254
    %v256 = vpop.f32.mrb[0].mxu0
    %257 = vmatprep.mubr.bf16.mxu0 0
    %258 = vmatmul.mubr.bf16.gmra.mrb[0].mxu0 %v163
    %v259 = vpop.f32.mrb[0].mxu0
    %v260 = vadd.f32 %v64, %v259
    %v261 = vpop.f32.mrb[0].mxu0
    %v262 = vpop.f32.mrb[0].mxu0
    %v263 = vadd.f32 %v64, %v262
    %v264 = vpop.f32.mrb[0].mxu0
    %265 = vmatprep.mubr.bf16.mxu0 0
    %266 = vmatmul.mubr.bf16.gmra.mrb[0].mxu0 %v166
    %v267 = vpop.f32.mrb[0].mxu0
    %v268 = vadd.f32 %v64, %v267
    %v269 = vpop.f32.mrb[0].mxu0
    %v270 = vpop.f32.mrb[0].mxu0
    %v271 = vadd.f32 %v64, %v270
    %v272 = vpop.f32.mrb[0].mxu0
    %273 = vmatprep.mubr.bf16.mxu0 0
    %274 = vmatmul.mubr.bf16.gmra.mrb[0].mxu0 %v169
    %v275 = vpop.f32.mrb[0].mxu0
    %v276 = vadd.f32 %v64, %v275
    %v277 = vpop.f32.mrb[0].mxu0
    %v278 = vpop.f32.mrb[0].mxu0
    %v279 = vadd.f32 %v64, %v278
    %v280 = vpop.f32.mrb[0].mxu0
    %281 = vmatprep.mubr.bf16.mxu0 0
    %282 = vmatmul.mubr.bf16.gmra.mrb[0].mxu0 %v172
    %v283 = vpop.f32.mrb[0].mxu0
    %v284 = vadd.f32 %v64, %v283
    %v285 = vpop.f32.mrb[0].mxu0
    %v286 = vpop.f32.mrb[0].mxu0
    %v287 = vadd.f32 %v64, %v286
    %v288 = vpop.f32.mrb[0].mxu0
    %289 = vmatprep.mubr.bf16.mxu0 0
    %290 = vmatmul.mubr.bf16.gmra.mrb[0].mxu0 %v175
    %v291 = vpop.f32.mrb[0].mxu0
    %v292 = vadd.f32 %v64, %v291
    %v293 = vpop.f32.mrb[0].mxu0
    %v294 = vpop.f32.mrb[0].mxu0
    %v295 = vadd.f32 %v64, %v294
    %v296 = vpop.f32.mrb[0].mxu0
    %297 = vmatprep.mubr.bf16.mxu0 0
    %298 = vmatmul.mubr.bf16.gmra.mrb[0].mxu0 %v178
    %v299 = vpop.f32.mrb[0].mxu0
    %v300 = vadd.f32 %v64, %v299
    %v301 = vpop.f32.mrb[0].mxu0
    %v302 = vpop.f32.mrb[0].mxu0
    %v303 = vadd.f32 %v64, %v302
    %v304 = vpop.f32.mrb[0].mxu0
    %305 = vmatprep.mubr.bf16.mxu0 0
    %306 = vmatmul.mubr.bf16.gmra.mrb[0].mxu0 %v181
    %v307 = vpop.f32.mrb[0].mxu0
    %v308 = vadd.f32 %v64, %v307
    %v309 = vpop.f32.mrb[0].mxu0
    %v310 = vpop.f32.mrb[0].mxu0
    %v311 = vadd.f32 %v64, %v310
    %v312 = vpop.f32.mrb[0].mxu0
    %313 = vmatprep.mubr.bf16.mxu0 0
    %314 = vmatmul.mubr.bf16.gmra.mrb[0].mxu0 %v184
    %v315 = vpop.f32.mrb[0].mxu0
    %v316 = vadd.f32 %v64, %v315
    %v317 = vpop.f32.mrb[0].mxu0
    %v318 = vpop.f32.mrb[0].mxu0
    %v319 = vadd.f32 %v64, %v318
    %v320 = vpop.f32.mrb[0].mxu0
    %321 = vmatprep.mubr.bf16.mxu0 0
    %322 = vmatmul.mubr.bf16.gmra.mrb[0].mxu0 %v187
    %v323 = vpop.f32.mrb[0].mxu0
    %v324 = vadd.f32 %v64, %v323
    %v325 = vpop.f32.mrb[0].mxu0
    %v326 = vpop.f32.mrb[0].mxu0
    %v327 = vadd.f32 %v64, %v326
    %v328 = vpop.f32.mrb[0].mxu0
    %329 = vmatprep.mubr.bf16.mxu0 0
    %330 = vmatmul.mubr.bf16.gmra.mrb[0].mxu0 %v190
    %v331 = vpop.f32.mrb[0].mxu0
    %v332 = vadd.f32 %v64, %v331
    %v333 = vpop.f32.mrb[0].mxu0
    %v334 = vpop.f32.mrb[0].mxu0
    %v335 = vadd.f32 %v64, %v334
    %v336 = vpop.f32.mrb[0].mxu0
    %337 = vmatprep.mubr.bf16.mxu0 0
    %338 = vmatmul.mubr.bf16.gmra.mrb[0].mxu0 %v193
    %v339 = vpop.f32.mrb[0].mxu0
    %v340 = vadd.f32 %v64, %v339
    %v341 = vpop.f32.mrb[0].mxu0
    %v342 = vpop.f32.mrb[0].mxu0
    %v343 = vadd.f32 %v64, %v342
    %v344 = vpop.f32.mrb[0].mxu0
    %345 = vmatprep.mubr.bf16.mxu0 0
    %346 = vmatmul.mubr.bf16.gmra.mrb[0].mxu0 %v196
    %v347 = vpop.f32.mrb[0].mxu0
    %v348 = vadd.f32 %v64, %v347
    %v349 = vpop.f32.mrb[0].mxu0
    %v350 = vpop.f32.mrb[0].mxu0
    %v351 = vadd.f32 %v64, %v350
    %v352 = vpop.f32.mrb[0].mxu0
    %353 = vmatprep.mubr.bf16.mxu0 0
    %354 = vmatmul.mubr.bf16.gmra.mrb[0].mxu0 %v199
    %v355 = vpop.f32.mrb[0].mxu0
    %v356 = vadd.f32 %v64, %v355
    %v357 = vpop.f32.mrb[0].mxu0
    %v358 = vpop.f32.mrb[0].mxu0
    %v359 = vadd.f32 %v64, %v358
    %v360 = vpop.f32.mrb[0].mxu0
    %361 = vdwg.mxu0
    %v362 = vmax.f32 %v236, 0.0
    %v363 = vmax.f32 %v239, 0.0
    %v364 = vmax.f32 %v244, 0.0
    %v365 = vmax.f32 %v247, 0.0
    %v366 = vmax.f32 %v252, 0.0
    %v367 = vmax.f32 %v255, 0.0
    %v368 = vmax.f32 %v260, 0.0
    %v369 = vmax.f32 %v263, 0.0
    %v370 = vmax.f32 %v268, 0.0
    %v371 = vmax.f32 %v271, 0.0
    %v372 = vmax.f32 %v276, 0.0
    %v373 = vmax.f32 %v279, 0.0
    %v374 = vmax.f32 %v284, 0.0
    %v375 = vmax.f32 %v287, 0.0
    %v376 = vmax.f32 %v292, 0.0
    %v377 = vmax.f32 %v295, 0.0
    %v378 = vmax.f32 %v300, 0.0
    %v379 = vmax.f32 %v303, 0.0
    %v380 = vmax.f32 %v308, 0.0
    %v381 = vmax.f32 %v311, 0.0
    %v382 = vmax.f32 %v316, 0.0
    %v383 = vmax.f32 %v319, 0.0
    %v384 = vmax.f32 %v324, 0.0
    %v385 = vmax.f32 %v327, 0.0
    %v386 = vmax.f32 %v332, 0.0
    %v387 = vmax.f32 %v335, 0.0
    %v388 = vmax.f32 %v340, 0.0
    %v389 = vmax.f32 %v343, 0.0
    %v390 = vmax.f32 %v348, 0.0
    %v391 = vmax.f32 %v351, 0.0
    %v392 = vmax.f32 %v356, 0.0
    %v393 = vmax.f32 %v359, 0.0
    %v394 = vld [vmem:[%s3] sm:$0xff]
    %v395 = vld [vmem:[%s3 + $0x8] sm:$0xff]
    %v396 = vld [vmem:[%s3 + $0x10] sm:$0xff]
    %v397 = vld [vmem:[%s3 + $0x18] sm:$0xff]
    %v398 = vld [vmem:[%s3 + $0x20] sm:$0xff]
    %v399 = vld [vmem:[%s3 + $0x28] sm:$0xff]
    %v400 = vld [vmem:[%s3 + $0x30] sm:$0xff]
    %v401 = vld [vmem:[%s3 + $0x38] sm:$0xff]
    %v402 = vld [vmem:[%s4] sm:$0x1]
    %v404 = vlaneseq
    %v405 = vshrl.u32 %v404, 7
    %v406 = vsub.s32 0, %v405
    %v407 = vrot.slane %v402, %v406
    %vm409 = vcmask 523264
    %v411 = vsel %vm409, %v362, 0
    %v414 = vsel %vm409, %v363, 0
    %v417 = vsel %vm409, %v364, 0
    %v420 = vsel %vm409, %v365, 0
    %v423 = vsel %vm409, %v366, 0
    %v426 = vsel %vm409, %v367, 0
    %v429 = vsel %vm409, %v368, 0
    %v432 = vsel %vm409, %v369, 0
    %v435 = vsel %vm409, %v370, 0
    %v438 = vsel %vm409, %v371, 0
    %v441 = vsel %vm409, %v372, 0
    %v444 = vsel %vm409, %v373, 0
    %v447 = vsel %vm409, %v374, 0
    %v450 = vsel %vm409, %v375, 0
    %v453 = vsel %vm409, %v376, 0
    %v456 = vsel %vm409, %v377, 0
    %v459 = vsel %vm409, %v378, 0
    %v462 = vsel %vm409, %v379, 0
    %v465 = vsel %vm409, %v380, 0
    %v468 = vsel %vm409, %v381, 0
    %v471 = vsel %vm409, %v382, 0
    %v474 = vsel %vm409, %v383, 0
    %v477 = vsel %vm409, %v384, 0
    %v480 = vsel %vm409, %v385, 0
    %v483 = vsel %vm409, %v386, 0
    %v486 = vsel %vm409, %v387, 0
    %v489 = vsel %vm409, %v388, 0
    %v492 = vsel %vm409, %v389, 0
    %v495 = vsel %vm409, %v390, 0
    %v498 = vsel %vm409, %v391, 0
    %v501 = vsel %vm409, %v392, 0
    %v504 = vsel %vm409, %v393, 0
    %506 = vmatprep.subr.mxu0 0.0
    %507 = vmatpush1.msra.mxu0 %v394
    %508 = vmatprep.subr.mxu0 0.0
    %509 = vmatpush1.msra.mxu0 %v395
    %510 = vmatprep.subr.mxu0 0.0
    %511 = vmatpush1.msra.mxu0 %v396
    %512 = vmatprep.subr.mxu0 0.0
    %513 = vmatpush1.msra.mxu0 %v397
    %514 = vmatprep.subr.mxu0 0.0
    %515 = vmatpush1.msra.mxu0 %v398
    %516 = vmatprep.subr.mxu0 0.0
    %517 = vmatpush1.msra.mxu0 %v399
    %518 = vmatprep.subr.mxu0 0.0
    %519 = vmatpush1.msra.mxu0 %v400
    %520 = vmatprep.subr.mxu0 0.0
    %521 = vmatpush1.msra.mxu0 %v401
    %522 = vmatprep.subr.mxu0 0.0
    %523 = vmatpush1.msra.mxu0 0.0
    %524 = vmatprep.subr.mxu0 0.0
    %525 = vmatpush1.msra.mxu0 0.0
    %526 = vmatprep.subr.mxu0 0.0
    %527 = vmatpush1.msra.mxu0 0.0
    %528 = vmatprep.subr.mxu0 0.0
    %529 = vmatpush1.msra.mxu0 0.0
    %530 = vmatprep.subr.mxu0 0.0
    %531 = vmatpush1.msra.mxu0 0.0
    %532 = vmatprep.subr.mxu0 0.0
    %533 = vmatpush1.msra.mxu0 0.0
    %534 = vmatprep.subr.mxu0 0.0
    %535 = vmatpush1.msra.mxu0 0.0
    %536 = vmatprep.subr.mxu0 0.0
    %537 = vmatpush1.msra.mxu0 0.0
    %538 = vmatprep.subr.mxu0 0.0
    %539 = vmatpush1.msra.mxu0 0.0
    %540 = vmatprep.subr.mxu0 0.0
    %541 = vmatpush1.msra.mxu0 0.0
    %542 = vmatprep.subr.mxu0 0.0
    %543 = vmatpush1.msra.mxu0 0.0
    %544 = vmatprep.subr.mxu0 0.0
    %545 = vmatpush1.msra.mxu0 0.0
    %546 = vmatprep.subr.mxu0 0.0
    %547 = vmatpush1.msra.mxu0 0.0
    %548 = vmatprep.subr.mxu0 0.0
    %549 = vmatpush1.msra.mxu0 0.0
    %550 = vmatprep.subr.mxu0 0.0
    %551 = vmatpush1.msra.mxu0 0.0
    %552 = vmatprep.subr.mxu0 0.0
    %553 = vmatpush1.msra.mxu0 0.0
    %554 = vmatprep.subr.mxu0 0.0
    %555 = vmatpush1.msra.mxu0 0.0
    %556 = vmatprep.subr.mxu0 0.0
    %557 = vmatpush1.msra.mxu0 0.0
    %558 = vmatprep.subr.mxu0 0.0
    %559 = vmatpush1.msra.mxu0 0.0
    %560 = vmatprep.subr.mxu0 0.0
    %561 = vmatpush1.msra.mxu0 0.0
    %562 = vmatprep.subr.mxu0 0.0
    %563 = vmatpush1.msra.mxu0 0.0
    %564 = vmatprep.subr.mxu0 0.0
    %565 = vmatpush1.msra.mxu0 0.0
    %566 = vmatprep.subr.mxu0 0.0
    %567 = vmatpush1.msra.mxu0 0.0
    %568 = vmatprep.subr.mxu0 0.0
    %569 = vmatpush1.msra.mxu0 0.0
    %570 = vmatprep.mubr.f32.mxu0 0.0
    %571 = vmatmul.mubr.f32.gmra.mrb[0].mxu0 %v411
    %v572 = vpop.f32.mrb[0].mxu0
    %v573 = vadd.f32 %v407, %v572
    %v574 = vpop.f32.mrb[0].mxu0
    %575 = vmatprep.mubr.f32.mxu0 0.0
    %576 = vmatmul.mubr.f32.gmra.mrb[0].mxu0 %v414
    %v577 = vpop.f32.mrb[0].mxu0
    %v578 = vadd.f32 %v407, %v577
    %v579 = vpop.f32.mrb[0].mxu0
    %580 = vmatprep.mubr.f32.mxu0 0.0
    %581 = vmatmul.mubr.f32.gmra.mrb[0].mxu0 %v417
    %v582 = vpop.f32.mrb[0].mxu0
    %v583 = vadd.f32 %v407, %v582
    %v584 = vpop.f32.mrb[0].mxu0
    %585 = vmatprep.mubr.f32.mxu0 0.0
    %586 = vmatmul.mubr.f32.gmra.mrb[0].mxu0 %v420
    %v587 = vpop.f32.mrb[0].mxu0
    %v588 = vadd.f32 %v407, %v587
    %v589 = vpop.f32.mrb[0].mxu0
    %590 = vmatprep.mubr.f32.mxu0 0.0
    %591 = vmatmul.mubr.f32.gmra.mrb[0].mxu0 %v423
    %v592 = vpop.f32.mrb[0].mxu0
    %v593 = vadd.f32 %v407, %v592
    %v594 = vpop.f32.mrb[0].mxu0
    %595 = vmatprep.mubr.f32.mxu0 0.0
    %596 = vmatmul.mubr.f32.gmra.mrb[0].mxu0 %v426
    %v597 = vpop.f32.mrb[0].mxu0
    %v598 = vadd.f32 %v407, %v597
    %v599 = vpop.f32.mrb[0].mxu0
    %600 = vmatprep.mubr.f32.mxu0 0.0
    %601 = vmatmul.mubr.f32.gmra.mrb[0].mxu0 %v429
    %v602 = vpop.f32.mrb[0].mxu0
    %v603 = vadd.f32 %v407, %v602
    %v604 = vpop.f32.mrb[0].mxu0
    %605 = vmatprep.mubr.f32.mxu0 0.0
    %606 = vmatmul.mubr.f32.gmra.mrb[0].mxu0 %v432
    %v607 = vpop.f32.mrb[0].mxu0
    %v608 = vadd.f32 %v407, %v607
    %v609 = vpop.f32.mrb[0].mxu0
    %610 = vmatprep.mubr.f32.mxu0 0.0
    %611 = vmatmul.mubr.f32.gmra.mrb[0].mxu0 %v435
    %v612 = vpop.f32.mrb[0].mxu0
    %v613 = vadd.f32 %v407, %v612
    %v614 = vpop.f32.mrb[0].mxu0
    %615 = vmatprep.mubr.f32.mxu0 0.0
    %616 = vmatmul.mubr.f32.gmra.mrb[0].mxu0 %v438
    %v617 = vpop.f32.mrb[0].mxu0
    %v618 = vadd.f32 %v407, %v617
    %v619 = vpop.f32.mrb[0].mxu0
    %620 = vmatprep.mubr.f32.mxu0 0.0
    %621 = vmatmul.mubr.f32.gmra.mrb[0].mxu0 %v441
    %v622 = vpop.f32.mrb[0].mxu0
    %v623 = vadd.f32 %v407, %v622
    %v624 = vpop.f32.mrb[0].mxu0
    %625 = vmatprep.mubr.f32.mxu0 0.0
    %626 = vmatmul.mubr.f32.gmra.mrb[0].mxu0 %v444
    %v627 = vpop.f32.mrb[0].mxu0
    %v628 = vadd.f32 %v407, %v627
    %v629 = vpop.f32.mrb[0].mxu0
    %630 = vmatprep.mubr.f32.mxu0 0.0
    %631 = vmatmul.mubr.f32.gmra.mrb[0].mxu0 %v447
    %v632 = vpop.f32.mrb[0].mxu0
    %v633 = vadd.f32 %v407, %v632
    %v634 = vpop.f32.mrb[0].mxu0
    %635 = vmatprep.mubr.f32.mxu0 0.0
    %636 = vmatmul.mubr.f32.gmra.mrb[0].mxu0 %v450
    %v637 = vpop.f32.mrb[0].mxu0
    %v638 = vadd.f32 %v407, %v637
    %v639 = vpop.f32.mrb[0].mxu0
    %640 = vmatprep.mubr.f32.mxu0 0.0
    %641 = vmatmul.mubr.f32.gmra.mrb[0].mxu0 %v453
    %v642 = vpop.f32.mrb[0].mxu0
    %v643 = vadd.f32 %v407, %v642
    %v644 = vpop.f32.mrb[0].mxu0
    %645 = vmatprep.mubr.f32.mxu0 0.0
    %646 = vmatmul.mubr.f32.gmra.mrb[0].mxu0 %v456
    %v647 = vpop.f32.mrb[0].mxu0
    %v648 = vadd.f32 %v407, %v647
    %v649 = vpop.f32.mrb[0].mxu0
    %650 = vmatprep.mubr.f32.mxu0 0.0
    %651 = vmatmul.mubr.f32.gmra.mrb[0].mxu0 %v459
    %v652 = vpop.f32.mrb[0].mxu0
    %v653 = vadd.f32 %v407, %v652
    %v654 = vpop.f32.mrb[0].mxu0
    %655 = vmatprep.mubr.f32.mxu0 0.0
    %656 = vmatmul.mubr.f32.gmra.mrb[0].mxu0 %v462
    %v657 = vpop.f32.mrb[0].mxu0
    %v658 = vadd.f32 %v407, %v657
    %v659 = vpop.f32.mrb[0].mxu0
    %660 = vmatprep.mubr.f32.mxu0 0.0
    %661 = vmatmul.mubr.f32.gmra.mrb[0].mxu0 %v465
    %v662 = vpop.f32.mrb[0].mxu0
    %v663 = vadd.f32 %v407, %v662
    %v664 = vpop.f32.mrb[0].mxu0
    %665 = vmatprep.mubr.f32.mxu0 0.0
    %666 = vmatmul.mubr.f32.gmra.mrb[0].mxu0 %v468
    %v667 = vpop.f32.mrb[0].mxu0
    %v668 = vadd.f32 %v407, %v667
    %v669 = vpop.f32.mrb[0].mxu0
    %670 = vmatprep.mubr.f32.mxu0 0.0
    %671 = vmatmul.mubr.f32.gmra.mrb[0].mxu0 %v471
    %v672 = vpop.f32.mrb[0].mxu0
    %v673 = vadd.f32 %v407, %v672
    %v674 = vpop.f32.mrb[0].mxu0
    %675 = vmatprep.mubr.f32.mxu0 0.0
    %676 = vmatmul.mubr.f32.gmra.mrb[0].mxu0 %v474
    %v677 = vpop.f32.mrb[0].mxu0
    %v678 = vadd.f32 %v407, %v677
    %v679 = vpop.f32.mrb[0].mxu0
    %680 = vmatprep.mubr.f32.mxu0 0.0
    %681 = vmatmul.mubr.f32.gmra.mrb[0].mxu0 %v477
    %v682 = vpop.f32.mrb[0].mxu0
    %v683 = vadd.f32 %v407, %v682
    %v684 = vpop.f32.mrb[0].mxu0
    %685 = vmatprep.mubr.f32.mxu0 0.0
    %686 = vmatmul.mubr.f32.gmra.mrb[0].mxu0 %v480
    %v687 = vpop.f32.mrb[0].mxu0
    %v688 = vadd.f32 %v407, %v687
    %v689 = vpop.f32.mrb[0].mxu0
    %690 = vmatprep.mubr.f32.mxu0 0.0
    %691 = vmatmul.mubr.f32.gmra.mrb[0].mxu0 %v483
    %v692 = vpop.f32.mrb[0].mxu0
    %v693 = vadd.f32 %v407, %v692
    %v694 = vpop.f32.mrb[0].mxu0
    %695 = vmatprep.mubr.f32.mxu0 0.0
    %696 = vmatmul.mubr.f32.gmra.mrb[0].mxu0 %v486
    %v697 = vpop.f32.mrb[0].mxu0
    %v698 = vadd.f32 %v407, %v697
    %v699 = vpop.f32.mrb[0].mxu0
    %700 = vmatprep.mubr.f32.mxu0 0.0
    %701 = vmatmul.mubr.f32.gmra.mrb[0].mxu0 %v489
    %v702 = vpop.f32.mrb[0].mxu0
    %v703 = vadd.f32 %v407, %v702
    %v704 = vpop.f32.mrb[0].mxu0
    %705 = vmatprep.mubr.f32.mxu0 0.0
    %706 = vmatmul.mubr.f32.gmra.mrb[0].mxu0 %v492
    %v707 = vpop.f32.mrb[0].mxu0
    %v708 = vadd.f32 %v407, %v707
    %v709 = vpop.f32.mrb[0].mxu0
    %710 = vmatprep.mubr.f32.mxu0 0.0
    %711 = vmatmul.mubr.f32.gmra.mrb[0].mxu0 %v495
    %v712 = vpop.f32.mrb[0].mxu0
    %v713 = vadd.f32 %v407, %v712
    %v714 = vpop.f32.mrb[0].mxu0
    %715 = vmatprep.mubr.f32.mxu0 0.0
    %716 = vmatmul.mubr.f32.gmra.mrb[0].mxu0 %v498
    %v717 = vpop.f32.mrb[0].mxu0
    %v718 = vadd.f32 %v407, %v717
    %v719 = vpop.f32.mrb[0].mxu0
    %720 = vmatprep.mubr.f32.mxu0 0.0
    %721 = vmatmul.mubr.f32.gmra.mrb[0].mxu0 %v501
    %v722 = vpop.f32.mrb[0].mxu0
    %v723 = vadd.f32 %v407, %v722
    %v724 = vpop.f32.mrb[0].mxu0
    %725 = vmatprep.mubr.f32.mxu0 0.0
    %726 = vmatmul.mubr.f32.gmra.mrb[0].mxu0 %v504
    %v727 = vpop.f32.mrb[0].mxu0
    %v728 = vadd.f32 %v407, %v727
    %v729 = vpop.f32.mrb[0].mxu0
    %730 = vdwg.mxu0
    %v731 = vmax.f32 %v573, 0.0
    %v732 = vmax.f32 %v578, 0.0
    %v733 = vmax.f32 %v583, 0.0
    %v734 = vmax.f32 %v588, 0.0
    %v735 = vmax.f32 %v593, 0.0
    %v736 = vmax.f32 %v598, 0.0
    %v737 = vmax.f32 %v603, 0.0
    %v738 = vmax.f32 %v608, 0.0
    %v739 = vmax.f32 %v613, 0.0
    %v740 = vmax.f32 %v618, 0.0
    %v741 = vmax.f32 %v623, 0.0
    %v742 = vmax.f32 %v628, 0.0
    %v743 = vmax.f32 %v633, 0.0
    %v744 = vmax.f32 %v638, 0.0
    %v745 = vmax.f32 %v643, 0.0
    %v746 = vmax.f32 %v648, 0.0
    %v747 = vmax.f32 %v653, 0.0
    %v748 = vmax.f32 %v658, 0.0
    %v749 = vmax.f32 %v663, 0.0
    %v750 = vmax.f32 %v668, 0.0
    %v751 = vmax.f32 %v673, 0.0
    %v752 = vmax.f32 %v678, 0.0
    %v753 = vmax.f32 %v683, 0.0
    %v754 = vmax.f32 %v688, 0.0
    %v755 = vmax.f32 %v693, 0.0
    %v756 = vmax.f32 %v698, 0.0
    %v757 = vmax.f32 %v703, 0.0
    %v758 = vmax.f32 %v708, 0.0
    %v759 = vmax.f32 %v713, 0.0
    %v760 = vmax.f32 %v718, 0.0
    %v761 = vmax.f32 %v723, 0.0
    %v762 = vmax.f32 %v728, 0.0
    %v763 = vld [vmem:[%s5] sm:$0x1]
    %v765 = vlaneseq
    %v766 = vshrl.u32 %v765, 7
    %v767 = vsub.s32 0, %v766
    %v768 = vrot.slane %v763, %v767
    %v770 = vmul.f32 %v731, %v768
    %v771 = vmul.f32 %v732, %v768
    %v772 = vmul.f32 %v733, %v768
    %v773 = vmul.f32 %v734, %v768
    %v774 = vmul.f32 %v735, %v768
    %v775 = vmul.f32 %v736, %v768
    %v776 = vmul.f32 %v737, %v768
    %v777 = vmul.f32 %v738, %v768
    %v778 = vmul.f32 %v739, %v768
    %v779 = vmul.f32 %v740, %v768
    %v780 = vmul.f32 %v741, %v768
    %v781 = vmul.f32 %v742, %v768
    %v782 = vmul.f32 %v743, %v768
    %v783 = vmul.f32 %v744, %v768
    %v784 = vmul.f32 %v745, %v768
    %v785 = vmul.f32 %v746, %v768
    %v786 = vmul.f32 %v747, %v768
    %v787 = vmul.f32 %v748, %v768
    %v788 = vmul.f32 %v749, %v768
    %v789 = vmul.f32 %v750, %v768
    %v790 = vmul.f32 %v751, %v768
    %v791 = vmul.f32 %v752, %v768
    %v792 = vmul.f32 %v753, %v768
    %v793 = vmul.f32 %v754, %v768
    %v794 = vmul.f32 %v755, %v768
    %v795 = vmul.f32 %v756, %v768
    %v796 = vmul.f32 %v757, %v768
    %v797 = vmul.f32 %v758, %v768
    %v798 = vmul.f32 %v759, %v768
    %v799 = vmul.f32 %v760, %v768
    %v800 = vmul.f32 %v761, %v768
    %v801 = vmul.f32 %v762, %v768
    %vm802 = vcmask 261120
    %v803 = vsel %vm802, %v770, 0.0
    %804 = vadd.xlane.f32.xlu0 %v803
    %v805 = vpop.xlane.xlu0 %804
    %v806 = vsel %vm802, %v771, 0.0
    %807 = vadd.xlane.f32.xlu0 %v806
    %v808 = vpop.xlane.xlu0 %807
    %v809 = vsel %vm802, %v772, 0.0
    %810 = vadd.xlane.f32.xlu0 %v809
    %v811 = vpop.xlane.xlu0 %810
    %v812 = vsel %vm802, %v773, 0.0
    %813 = vadd.xlane.f32.xlu0 %v812
    %v814 = vpop.xlane.xlu0 %813
    %v815 = vsel %vm802, %v774, 0.0
    %816 = vadd.xlane.f32.xlu0 %v815
    %v817 = vpop.xlane.xlu0 %816
    %v818 = vsel %vm802, %v775, 0.0
    %819 = vadd.xlane.f32.xlu0 %v818
    %v820 = vpop.xlane.xlu0 %819
    %v821 = vsel %vm802, %v776, 0.0
    %822 = vadd.xlane.f32.xlu0 %v821
    %v823 = vpop.xlane.xlu0 %822
    %v824 = vsel %vm802, %v777, 0.0
    %825 = vadd.xlane.f32.xlu0 %v824
    %v826 = vpop.xlane.xlu0 %825
    %v827 = vsel %vm802, %v778, 0.0
    %828 = vadd.xlane.f32.xlu0 %v827
    %v829 = vpop.xlane.xlu0 %828
    %v830 = vsel %vm802, %v779, 0.0
    %831 = vadd.xlane.f32.xlu0 %v830
    %v832 = vpop.xlane.xlu0 %831
    %v833 = vsel %vm802, %v780, 0.0
    %834 = vadd.xlane.f32.xlu0 %v833
    %v835 = vpop.xlane.xlu0 %834
    %v836 = vsel %vm802, %v781, 0.0
    %837 = vadd.xlane.f32.xlu0 %v836
    %v838 = vpop.xlane.xlu0 %837
    %v839 = vsel %vm802, %v782, 0.0
    %840 = vadd.xlane.f32.xlu0 %v839
    %v841 = vpop.xlane.xlu0 %840
    %v842 = vsel %vm802, %v783, 0.0
    %843 = vadd.xlane.f32.xlu0 %v842
    %v844 = vpop.xlane.xlu0 %843
    %v845 = vsel %vm802, %v784, 0.0
    %846 = vadd.xlane.f32.xlu0 %v845
    %v847 = vpop.xlane.xlu0 %846
    %v848 = vsel %vm802, %v785, 0.0
    %849 = vadd.xlane.f32.xlu0 %v848
    %v850 = vpop.xlane.xlu0 %849
    %v851 = vsel %vm802, %v786, 0.0
    %852 = vadd.xlane.f32.xlu0 %v851
    %v853 = vpop.xlane.xlu0 %852
    %v854 = vsel %vm802, %v787, 0.0
    %855 = vadd.xlane.f32.xlu0 %v854
    %v856 = vpop.xlane.xlu0 %855
    %v857 = vsel %vm802, %v788, 0.0
    %858 = vadd.xlane.f32.xlu0 %v857
    %v859 = vpop.xlane.xlu0 %858
    %v860 = vsel %vm802, %v789, 0.0
    %861 = vadd.xlane.f32.xlu0 %v860
    %v862 = vpop.xlane.xlu0 %861
    %v863 = vsel %vm802, %v790, 0.0
    %864 = vadd.xlane.f32.xlu0 %v863
    %v865 = vpop.xlane.xlu0 %864
    %v866 = vsel %vm802, %v791, 0.0
    %867 = vadd.xlane.f32.xlu0 %v866
    %v868 = vpop.xlane.xlu0 %867
    %v869 = vsel %vm802, %v792, 0.0
    %870 = vadd.xlane.f32.xlu0 %v869
    %v871 = vpop.xlane.xlu0 %870
    %v872 = vsel %vm802, %v793, 0.0
    %873 = vadd.xlane.f32.xlu0 %v872
    %v874 = vpop.xlane.xlu0 %873
    %v875 = vsel %vm802, %v794, 0.0
    %876 = vadd.xlane.f32.xlu0 %v875
    %v877 = vpop.xlane.xlu0 %876
    %v878 = vsel %vm802, %v795, 0.0
    %879 = vadd.xlane.f32.xlu0 %v878
    %v880 = vpop.xlane.xlu0 %879
    %v881 = vsel %vm802, %v796, 0.0
    %882 = vadd.xlane.f32.xlu0 %v881
    %v883 = vpop.xlane.xlu0 %882
    %v884 = vsel %vm802, %v797, 0.0
    %885 = vadd.xlane.f32.xlu0 %v884
    %v886 = vpop.xlane.xlu0 %885
    %v887 = vsel %vm802, %v798, 0.0
    %888 = vadd.xlane.f32.xlu0 %v887
    %v889 = vpop.xlane.xlu0 %888
    %v890 = vsel %vm802, %v799, 0.0
    %891 = vadd.xlane.f32.xlu0 %v890
    %v892 = vpop.xlane.xlu0 %891
    %v893 = vsel %vm802, %v800, 0.0
    %894 = vadd.xlane.f32.xlu0 %v893
    %v895 = vpop.xlane.xlu0 %894
    %v896 = vsel %vm802, %v801, 0.0
    %897 = vadd.xlane.f32.xlu0 %v896
    %v898 = vpop.xlane.xlu0 %897
    %v931 = vlaneseq
    %v932 = vshrl.u32 %v931, 7
    %v933 = vsub.s32 0, %v932
    %v934 = vrot.slane %v805, %v933
    %v935 = vlaneseq
    %v936 = vshrl.u32 %v935, 7
    %v937 = vsub.s32 1, %v936
    %v938 = vrot.slane %v805, %v937
    %v939 = vlaneseq
    %v940 = vshrl.u32 %v939, 7
    %v941 = vsub.s32 2, %v940
    %v942 = vrot.slane %v805, %v941
    %v943 = vlaneseq
    %v944 = vshrl.u32 %v943, 7
    %v945 = vsub.s32 3, %v944
    %v946 = vrot.slane %v805, %v945
    %v947 = vlaneseq
    %v948 = vshrl.u32 %v947, 7
    %v949 = vsub.s32 4, %v948
    %v950 = vrot.slane %v805, %v949
    %v951 = vlaneseq
    %v952 = vshrl.u32 %v951, 7
    %v953 = vsub.s32 5, %v952
    %v954 = vrot.slane %v805, %v953
    %v955 = vlaneseq
    %v956 = vshrl.u32 %v955, 7
    %v957 = vsub.s32 6, %v956
    %v958 = vrot.slane %v805, %v957
    %v959 = vlaneseq
    %v960 = vshrl.u32 %v959, 7
    %v961 = vsub.s32 7, %v960
    %v962 = vrot.slane %v805, %v961
    %v963 = vlaneseq
    %v964 = vshrl.u32 %v963, 7
    %v965 = vsub.s32 0, %v964
    %v966 = vrot.slane %v808, %v965
    %v967 = vlaneseq
    %v968 = vshrl.u32 %v967, 7
    %v969 = vsub.s32 1, %v968
    %v970 = vrot.slane %v808, %v969
    %v971 = vlaneseq
    %v972 = vshrl.u32 %v971, 7
    %v973 = vsub.s32 2, %v972
    %v974 = vrot.slane %v808, %v973
    %v975 = vlaneseq
    %v976 = vshrl.u32 %v975, 7
    %v977 = vsub.s32 3, %v976
    %v978 = vrot.slane %v808, %v977
    %v979 = vlaneseq
    %v980 = vshrl.u32 %v979, 7
    %v981 = vsub.s32 4, %v980
    %v982 = vrot.slane %v808, %v981
    %v983 = vlaneseq
    %v984 = vshrl.u32 %v983, 7
    %v985 = vsub.s32 5, %v984
    %v986 = vrot.slane %v808, %v985
    %v987 = vlaneseq
    %v988 = vshrl.u32 %v987, 7
    %v989 = vsub.s32 6, %v988
    %v990 = vrot.slane %v808, %v989
    %v991 = vlaneseq
    %v992 = vshrl.u32 %v991, 7
    %v993 = vsub.s32 7, %v992
    %v994 = vrot.slane %v808, %v993
    %v995 = vlaneseq
    %v996 = vshrl.u32 %v995, 7
    %v997 = vsub.s32 0, %v996
    %v998 = vrot.slane %v811, %v997
    %v999 = vlaneseq
    %v1000 = vshrl.u32 %v999, 7
    %v1001 = vsub.s32 1, %v1000
    %v1002 = vrot.slane %v811, %v1001
    %v1003 = vlaneseq
    %v1004 = vshrl.u32 %v1003, 7
    %v1005 = vsub.s32 2, %v1004
    %v1006 = vrot.slane %v811, %v1005
    %v1007 = vlaneseq
    %v1008 = vshrl.u32 %v1007, 7
    %v1009 = vsub.s32 3, %v1008
    %v1010 = vrot.slane %v811, %v1009
    %v1011 = vlaneseq
    %v1012 = vshrl.u32 %v1011, 7
    %v1013 = vsub.s32 4, %v1012
    %v1014 = vrot.slane %v811, %v1013
    %v1015 = vlaneseq
    %v1016 = vshrl.u32 %v1015, 7
    %v1017 = vsub.s32 5, %v1016
    %v1018 = vrot.slane %v811, %v1017
    %v1019 = vlaneseq
    %v1020 = vshrl.u32 %v1019, 7
    %v1021 = vsub.s32 6, %v1020
    %v1022 = vrot.slane %v811, %v1021
    %v1023 = vlaneseq
    %v1024 = vshrl.u32 %v1023, 7
    %v1025 = vsub.s32 7, %v1024
    %v1026 = vrot.slane %v811, %v1025
    %v1027 = vlaneseq
    %v1028 = vshrl.u32 %v1027, 7
    %v1029 = vsub.s32 0, %v1028
    %v1030 = vrot.slane %v814, %v1029
    %v1031 = vlaneseq
    %v1032 = vshrl.u32 %v1031, 7
    %v1033 = vsub.s32 1, %v1032
    %v1034 = vrot.slane %v814, %v1033
    %v1035 = vlaneseq
    %v1036 = vshrl.u32 %v1035, 7
    %v1037 = vsub.s32 2, %v1036
    %v1038 = vrot.slane %v814, %v1037
    %v1039 = vlaneseq
    %v1040 = vshrl.u32 %v1039, 7
    %v1041 = vsub.s32 3, %v1040
    %v1042 = vrot.slane %v814, %v1041
    %v1043 = vlaneseq
    %v1044 = vshrl.u32 %v1043, 7
    %v1045 = vsub.s32 4, %v1044
    %v1046 = vrot.slane %v814, %v1045
    %v1047 = vlaneseq
    %v1048 = vshrl.u32 %v1047, 7
    %v1049 = vsub.s32 5, %v1048
    %v1050 = vrot.slane %v814, %v1049
    %v1051 = vlaneseq
    %v1052 = vshrl.u32 %v1051, 7
    %v1053 = vsub.s32 6, %v1052
    %v1054 = vrot.slane %v814, %v1053
    %v1055 = vlaneseq
    %v1056 = vshrl.u32 %v1055, 7
    %v1057 = vsub.s32 7, %v1056
    %v1058 = vrot.slane %v814, %v1057
    %v1059 = vlaneseq
    %v1060 = vshrl.u32 %v1059, 7
    %v1061 = vsub.s32 0, %v1060
    %v1062 = vrot.slane %v817, %v1061
    %v1063 = vlaneseq
    %v1064 = vshrl.u32 %v1063, 7
    %v1065 = vsub.s32 1, %v1064
    %v1066 = vrot.slane %v817, %v1065
    %v1067 = vlaneseq
    %v1068 = vshrl.u32 %v1067, 7
    %v1069 = vsub.s32 2, %v1068
    %v1070 = vrot.slane %v817, %v1069
    %v1071 = vlaneseq
    %v1072 = vshrl.u32 %v1071, 7
    %v1073 = vsub.s32 3, %v1072
    %v1074 = vrot.slane %v817, %v1073
    %v1075 = vlaneseq
    %v1076 = vshrl.u32 %v1075, 7
    %v1077 = vsub.s32 4, %v1076
    %v1078 = vrot.slane %v817, %v1077
    %v1079 = vlaneseq
    %v1080 = vshrl.u32 %v1079, 7
    %v1081 = vsub.s32 5, %v1080
    %v1082 = vrot.slane %v817, %v1081
    %v1083 = vlaneseq
    %v1084 = vshrl.u32 %v1083, 7
    %v1085 = vsub.s32 6, %v1084
    %v1086 = vrot.slane %v817, %v1085
    %v1087 = vlaneseq
    %v1088 = vshrl.u32 %v1087, 7
    %v1089 = vsub.s32 7, %v1088
    %v1090 = vrot.slane %v817, %v1089
    %v1091 = vlaneseq
    %v1092 = vshrl.u32 %v1091, 7
    %v1093 = vsub.s32 0, %v1092
    %v1094 = vrot.slane %v820, %v1093
    %v1095 = vlaneseq
    %v1096 = vshrl.u32 %v1095, 7
    %v1097 = vsub.s32 1, %v1096
    %v1098 = vrot.slane %v820, %v1097
    %v1099 = vlaneseq
    %v1100 = vshrl.u32 %v1099, 7
    %v1101 = vsub.s32 2, %v1100
    %v1102 = vrot.slane %v820, %v1101
    %v1103 = vlaneseq
    %v1104 = vshrl.u32 %v1103, 7
    %v1105 = vsub.s32 3, %v1104
    %v1106 = vrot.slane %v820, %v1105
    %v1107 = vlaneseq
    %v1108 = vshrl.u32 %v1107, 7
    %v1109 = vsub.s32 4, %v1108
    %v1110 = vrot.slane %v820, %v1109
    %v1111 = vlaneseq
    %v1112 = vshrl.u32 %v1111, 7
    %v1113 = vsub.s32 5, %v1112
    %v1114 = vrot.slane %v820, %v1113
    %v1115 = vlaneseq
    %v1116 = vshrl.u32 %v1115, 7
    %v1117 = vsub.s32 6, %v1116
    %v1118 = vrot.slane %v820, %v1117
    %v1119 = vlaneseq
    %v1120 = vshrl.u32 %v1119, 7
    %v1121 = vsub.s32 7, %v1120
    %v1122 = vrot.slane %v820, %v1121
    %v1123 = vlaneseq
    %v1124 = vshrl.u32 %v1123, 7
    %v1125 = vsub.s32 0, %v1124
    %v1126 = vrot.slane %v823, %v1125
    %v1127 = vlaneseq
    %v1128 = vshrl.u32 %v1127, 7
    %v1129 = vsub.s32 1, %v1128
    %v1130 = vrot.slane %v823, %v1129
    %v1131 = vlaneseq
    %v1132 = vshrl.u32 %v1131, 7
    %v1133 = vsub.s32 2, %v1132
    %v1134 = vrot.slane %v823, %v1133
    %v1135 = vlaneseq
    %v1136 = vshrl.u32 %v1135, 7
    %v1137 = vsub.s32 3, %v1136
    %v1138 = vrot.slane %v823, %v1137
    %v1139 = vlaneseq
    %v1140 = vshrl.u32 %v1139, 7
    %v1141 = vsub.s32 4, %v1140
    %v1142 = vrot.slane %v823, %v1141
    %v1143 = vlaneseq
    %v1144 = vshrl.u32 %v1143, 7
    %v1145 = vsub.s32 5, %v1144
    %v1146 = vrot.slane %v823, %v1145
    %v1147 = vlaneseq
    %v1148 = vshrl.u32 %v1147, 7
    %v1149 = vsub.s32 6, %v1148
    %v1150 = vrot.slane %v823, %v1149
    %v1151 = vlaneseq
    %v1152 = vshrl.u32 %v1151, 7
    %v1153 = vsub.s32 7, %v1152
    %v1154 = vrot.slane %v823, %v1153
    %v1155 = vlaneseq
    %v1156 = vshrl.u32 %v1155, 7
    %v1157 = vsub.s32 0, %v1156
    %v1158 = vrot.slane %v826, %v1157
    %v1159 = vlaneseq
    %v1160 = vshrl.u32 %v1159, 7
    %v1161 = vsub.s32 1, %v1160
    %v1162 = vrot.slane %v826, %v1161
    %v1163 = vlaneseq
    %v1164 = vshrl.u32 %v1163, 7
    %v1165 = vsub.s32 2, %v1164
    %v1166 = vrot.slane %v826, %v1165
    %v1167 = vlaneseq
    %v1168 = vshrl.u32 %v1167, 7
    %v1169 = vsub.s32 3, %v1168
    %v1170 = vrot.slane %v826, %v1169
    %v1171 = vlaneseq
    %v1172 = vshrl.u32 %v1171, 7
    %v1173 = vsub.s32 4, %v1172
    %v1174 = vrot.slane %v826, %v1173
    %v1175 = vlaneseq
    %v1176 = vshrl.u32 %v1175, 7
    %v1177 = vsub.s32 5, %v1176
    %v1178 = vrot.slane %v826, %v1177
    %v1179 = vlaneseq
    %v1180 = vshrl.u32 %v1179, 7
    %v1181 = vsub.s32 6, %v1180
    %v1182 = vrot.slane %v826, %v1181
    %v1183 = vlaneseq
    %v1184 = vshrl.u32 %v1183, 7
    %v1185 = vsub.s32 7, %v1184
    %v1186 = vrot.slane %v826, %v1185
    %v1187 = vlaneseq
    %v1188 = vshrl.u32 %v1187, 7
    %v1189 = vsub.s32 0, %v1188
    %v1190 = vrot.slane %v829, %v1189
    %v1191 = vlaneseq
    %v1192 = vshrl.u32 %v1191, 7
    %v1193 = vsub.s32 1, %v1192
    %v1194 = vrot.slane %v829, %v1193
    %v1195 = vlaneseq
    %v1196 = vshrl.u32 %v1195, 7
    %v1197 = vsub.s32 2, %v1196
    %v1198 = vrot.slane %v829, %v1197
    %v1199 = vlaneseq
    %v1200 = vshrl.u32 %v1199, 7
    %v1201 = vsub.s32 3, %v1200
    %v1202 = vrot.slane %v829, %v1201
    %v1203 = vlaneseq
    %v1204 = vshrl.u32 %v1203, 7
    %v1205 = vsub.s32 4, %v1204
    %v1206 = vrot.slane %v829, %v1205
    %v1207 = vlaneseq
    %v1208 = vshrl.u32 %v1207, 7
    %v1209 = vsub.s32 5, %v1208
    %v1210 = vrot.slane %v829, %v1209
    %v1211 = vlaneseq
    %v1212 = vshrl.u32 %v1211, 7
    %v1213 = vsub.s32 6, %v1212
    %v1214 = vrot.slane %v829, %v1213
    %v1215 = vlaneseq
    %v1216 = vshrl.u32 %v1215, 7
    %v1217 = vsub.s32 7, %v1216
    %v1218 = vrot.slane %v829, %v1217
    %v1219 = vlaneseq
    %v1220 = vshrl.u32 %v1219, 7
    %v1221 = vsub.s32 0, %v1220
    %v1222 = vrot.slane %v832, %v1221
    %v1223 = vlaneseq
    %v1224 = vshrl.u32 %v1223, 7
    %v1225 = vsub.s32 1, %v1224
    %v1226 = vrot.slane %v832, %v1225
    %v1227 = vlaneseq
    %v1228 = vshrl.u32 %v1227, 7
    %v1229 = vsub.s32 2, %v1228
    %v1230 = vrot.slane %v832, %v1229
    %v1231 = vlaneseq
    %v1232 = vshrl.u32 %v1231, 7
    %v1233 = vsub.s32 3, %v1232
    %v1234 = vrot.slane %v832, %v1233
    %v1235 = vlaneseq
    %v1236 = vshrl.u32 %v1235, 7
    %v1237 = vsub.s32 4, %v1236
    %v1238 = vrot.slane %v832, %v1237
    %v1239 = vlaneseq
    %v1240 = vshrl.u32 %v1239, 7
    %v1241 = vsub.s32 5, %v1240
    %v1242 = vrot.slane %v832, %v1241
    %v1243 = vlaneseq
    %v1244 = vshrl.u32 %v1243, 7
    %v1245 = vsub.s32 6, %v1244
    %v1246 = vrot.slane %v832, %v1245
    %v1247 = vlaneseq
    %v1248 = vshrl.u32 %v1247, 7
    %v1249 = vsub.s32 7, %v1248
    %v1250 = vrot.slane %v832, %v1249
    %v1251 = vlaneseq
    %v1252 = vshrl.u32 %v1251, 7
    %v1253 = vsub.s32 0, %v1252
    %v1254 = vrot.slane %v835, %v1253
    %v1255 = vlaneseq
    %v1256 = vshrl.u32 %v1255, 7
    %v1257 = vsub.s32 1, %v1256
    %v1258 = vrot.slane %v835, %v1257
    %v1259 = vlaneseq
    %v1260 = vshrl.u32 %v1259, 7
    %v1261 = vsub.s32 2, %v1260
    %v1262 = vrot.slane %v835, %v1261
    %v1263 = vlaneseq
    %v1264 = vshrl.u32 %v1263, 7
    %v1265 = vsub.s32 3, %v1264
    %v1266 = vrot.slane %v835, %v1265
    %v1267 = vlaneseq
    %v1268 = vshrl.u32 %v1267, 7
    %v1269 = vsub.s32 4, %v1268
    %v1270 = vrot.slane %v835, %v1269
    %v1271 = vlaneseq
    %v1272 = vshrl.u32 %v1271, 7
    %v1273 = vsub.s32 5, %v1272
    %v1274 = vrot.slane %v835, %v1273
    %v1275 = vlaneseq
    %v1276 = vshrl.u32 %v1275, 7
    %v1277 = vsub.s32 6, %v1276
    %v1278 = vrot.slane %v835, %v1277
    %v1279 = vlaneseq
    %v1280 = vshrl.u32 %v1279, 7
    %v1281 = vsub.s32 7, %v1280
    %v1282 = vrot.slane %v835, %v1281
    %v1283 = vlaneseq
    %v1284 = vshrl.u32 %v1283, 7
    %v1285 = vsub.s32 0, %v1284
    %v1286 = vrot.slane %v838, %v1285
    %v1287 = vlaneseq
    %v1288 = vshrl.u32 %v1287, 7
    %v1289 = vsub.s32 1, %v1288
    %v1290 = vrot.slane %v838, %v1289
    %v1291 = vlaneseq
    %v1292 = vshrl.u32 %v1291, 7
    %v1293 = vsub.s32 2, %v1292
    %v1294 = vrot.slane %v838, %v1293
    %v1295 = vlaneseq
    %v1296 = vshrl.u32 %v1295, 7
    %v1297 = vsub.s32 3, %v1296
    %v1298 = vrot.slane %v838, %v1297
    %v1299 = vlaneseq
    %v1300 = vshrl.u32 %v1299, 7
    %v1301 = vsub.s32 4, %v1300
    %v1302 = vrot.slane %v838, %v1301
    %v1303 = vlaneseq
    %v1304 = vshrl.u32 %v1303, 7
    %v1305 = vsub.s32 5, %v1304
    %v1306 = vrot.slane %v838, %v1305
    %v1307 = vlaneseq
    %v1308 = vshrl.u32 %v1307, 7
    %v1309 = vsub.s32 6, %v1308
    %v1310 = vrot.slane %v838, %v1309
    %v1311 = vlaneseq
    %v1312 = vshrl.u32 %v1311, 7
    %v1313 = vsub.s32 7, %v1312
    %v1314 = vrot.slane %v838, %v1313
    %v1315 = vlaneseq
    %v1316 = vshrl.u32 %v1315, 7
    %v1317 = vsub.s32 0, %v1316
    %v1318 = vrot.slane %v841, %v1317
    %v1319 = vlaneseq
    %v1320 = vshrl.u32 %v1319, 7
    %v1321 = vsub.s32 1, %v1320
    %v1322 = vrot.slane %v841, %v1321
    %v1323 = vlaneseq
    %v1324 = vshrl.u32 %v1323, 7
    %v1325 = vsub.s32 2, %v1324
    %v1326 = vrot.slane %v841, %v1325
    %v1327 = vlaneseq
    %v1328 = vshrl.u32 %v1327, 7
    %v1329 = vsub.s32 3, %v1328
    %v1330 = vrot.slane %v841, %v1329
    %v1331 = vlaneseq
    %v1332 = vshrl.u32 %v1331, 7
    %v1333 = vsub.s32 4, %v1332
    %v1334 = vrot.slane %v841, %v1333
    %v1335 = vlaneseq
    %v1336 = vshrl.u32 %v1335, 7
    %v1337 = vsub.s32 5, %v1336
    %v1338 = vrot.slane %v841, %v1337
    %v1339 = vlaneseq
    %v1340 = vshrl.u32 %v1339, 7
    %v1341 = vsub.s32 6, %v1340
    %v1342 = vrot.slane %v841, %v1341
    %v1343 = vlaneseq
    %v1344 = vshrl.u32 %v1343, 7
    %v1345 = vsub.s32 7, %v1344
    %v1346 = vrot.slane %v841, %v1345
    %v1347 = vlaneseq
    %v1348 = vshrl.u32 %v1347, 7
    %v1349 = vsub.s32 0, %v1348
    %v1350 = vrot.slane %v844, %v1349
    %v1351 = vlaneseq
    %v1352 = vshrl.u32 %v1351, 7
    %v1353 = vsub.s32 1, %v1352
    %v1354 = vrot.slane %v844, %v1353
    %v1355 = vlaneseq
    %v1356 = vshrl.u32 %v1355, 7
    %v1357 = vsub.s32 2, %v1356
    %v1358 = vrot.slane %v844, %v1357
    %v1359 = vlaneseq
    %v1360 = vshrl.u32 %v1359, 7
    %v1361 = vsub.s32 3, %v1360
    %v1362 = vrot.slane %v844, %v1361
    %v1363 = vlaneseq
    %v1364 = vshrl.u32 %v1363, 7
    %v1365 = vsub.s32 4, %v1364
    %v1366 = vrot.slane %v844, %v1365
    %v1367 = vlaneseq
    %v1368 = vshrl.u32 %v1367, 7
    %v1369 = vsub.s32 5, %v1368
    %v1370 = vrot.slane %v844, %v1369
    %v1371 = vlaneseq
    %v1372 = vshrl.u32 %v1371, 7
    %v1373 = vsub.s32 6, %v1372
    %v1374 = vrot.slane %v844, %v1373
    %v1375 = vlaneseq
    %v1376 = vshrl.u32 %v1375, 7
    %v1377 = vsub.s32 7, %v1376
    %v1378 = vrot.slane %v844, %v1377
    %v1379 = vlaneseq
    %v1380 = vshrl.u32 %v1379, 7
    %v1381 = vsub.s32 0, %v1380
    %v1382 = vrot.slane %v847, %v1381
    %v1383 = vlaneseq
    %v1384 = vshrl.u32 %v1383, 7
    %v1385 = vsub.s32 1, %v1384
    %v1386 = vrot.slane %v847, %v1385
    %v1387 = vlaneseq
    %v1388 = vshrl.u32 %v1387, 7
    %v1389 = vsub.s32 2, %v1388
    %v1390 = vrot.slane %v847, %v1389
    %v1391 = vlaneseq
    %v1392 = vshrl.u32 %v1391, 7
    %v1393 = vsub.s32 3, %v1392
    %v1394 = vrot.slane %v847, %v1393
    %v1395 = vlaneseq
    %v1396 = vshrl.u32 %v1395, 7
    %v1397 = vsub.s32 4, %v1396
    %v1398 = vrot.slane %v847, %v1397
    %v1399 = vlaneseq
    %v1400 = vshrl.u32 %v1399, 7
    %v1401 = vsub.s32 5, %v1400
    %v1402 = vrot.slane %v847, %v1401
    %v1403 = vlaneseq
    %v1404 = vshrl.u32 %v1403, 7
    %v1405 = vsub.s32 6, %v1404
    %v1406 = vrot.slane %v847, %v1405
    %v1407 = vlaneseq
    %v1408 = vshrl.u32 %v1407, 7
    %v1409 = vsub.s32 7, %v1408
    %v1410 = vrot.slane %v847, %v1409
    %v1411 = vlaneseq
    %v1412 = vshrl.u32 %v1411, 7
    %v1413 = vsub.s32 0, %v1412
    %v1414 = vrot.slane %v850, %v1413
    %v1415 = vlaneseq
    %v1416 = vshrl.u32 %v1415, 7
    %v1417 = vsub.s32 1, %v1416
    %v1418 = vrot.slane %v850, %v1417
    %v1419 = vlaneseq
    %v1420 = vshrl.u32 %v1419, 7
    %v1421 = vsub.s32 2, %v1420
    %v1422 = vrot.slane %v850, %v1421
    %v1423 = vlaneseq
    %v1424 = vshrl.u32 %v1423, 7
    %v1425 = vsub.s32 3, %v1424
    %v1426 = vrot.slane %v850, %v1425
    %v1427 = vlaneseq
    %v1428 = vshrl.u32 %v1427, 7
    %v1429 = vsub.s32 4, %v1428
    %v1430 = vrot.slane %v850, %v1429
    %v1431 = vlaneseq
    %v1432 = vshrl.u32 %v1431, 7
    %v1433 = vsub.s32 5, %v1432
    %v1434 = vrot.slane %v850, %v1433
    %v1435 = vlaneseq
    %v1436 = vshrl.u32 %v1435, 7
    %v1437 = vsub.s32 6, %v1436
    %v1438 = vrot.slane %v850, %v1437
    %v1439 = vlaneseq
    %v1440 = vshrl.u32 %v1439, 7
    %v1441 = vsub.s32 7, %v1440
    %v1442 = vrot.slane %v850, %v1441
    %v1443 = vlaneseq
    %v1444 = vshrl.u32 %v1443, 7
    %v1445 = vsub.s32 0, %v1444
    %v1446 = vrot.slane %v853, %v1445
    %v1447 = vlaneseq
    %v1448 = vshrl.u32 %v1447, 7
    %v1449 = vsub.s32 1, %v1448
    %v1450 = vrot.slane %v853, %v1449
    %v1451 = vlaneseq
    %v1452 = vshrl.u32 %v1451, 7
    %v1453 = vsub.s32 2, %v1452
    %v1454 = vrot.slane %v853, %v1453
    %v1455 = vlaneseq
    %v1456 = vshrl.u32 %v1455, 7
    %v1457 = vsub.s32 3, %v1456
    %v1458 = vrot.slane %v853, %v1457
    %v1459 = vlaneseq
    %v1460 = vshrl.u32 %v1459, 7
    %v1461 = vsub.s32 4, %v1460
    %v1462 = vrot.slane %v853, %v1461
    %v1463 = vlaneseq
    %v1464 = vshrl.u32 %v1463, 7
    %v1465 = vsub.s32 5, %v1464
    %v1466 = vrot.slane %v853, %v1465
    %v1467 = vlaneseq
    %v1468 = vshrl.u32 %v1467, 7
    %v1469 = vsub.s32 6, %v1468
    %v1470 = vrot.slane %v853, %v1469
    %v1471 = vlaneseq
    %v1472 = vshrl.u32 %v1471, 7
    %v1473 = vsub.s32 7, %v1472
    %v1474 = vrot.slane %v853, %v1473
    %v1475 = vlaneseq
    %v1476 = vshrl.u32 %v1475, 7
    %v1477 = vsub.s32 0, %v1476
    %v1478 = vrot.slane %v856, %v1477
    %v1479 = vlaneseq
    %v1480 = vshrl.u32 %v1479, 7
    %v1481 = vsub.s32 1, %v1480
    %v1482 = vrot.slane %v856, %v1481
    %v1483 = vlaneseq
    %v1484 = vshrl.u32 %v1483, 7
    %v1485 = vsub.s32 2, %v1484
    %v1486 = vrot.slane %v856, %v1485
    %v1487 = vlaneseq
    %v1488 = vshrl.u32 %v1487, 7
    %v1489 = vsub.s32 3, %v1488
    %v1490 = vrot.slane %v856, %v1489
    %v1491 = vlaneseq
    %v1492 = vshrl.u32 %v1491, 7
    %v1493 = vsub.s32 4, %v1492
    %v1494 = vrot.slane %v856, %v1493
    %v1495 = vlaneseq
    %v1496 = vshrl.u32 %v1495, 7
    %v1497 = vsub.s32 5, %v1496
    %v1498 = vrot.slane %v856, %v1497
    %v1499 = vlaneseq
    %v1500 = vshrl.u32 %v1499, 7
    %v1501 = vsub.s32 6, %v1500
    %v1502 = vrot.slane %v856, %v1501
    %v1503 = vlaneseq
    %v1504 = vshrl.u32 %v1503, 7
    %v1505 = vsub.s32 7, %v1504
    %v1506 = vrot.slane %v856, %v1505
    %v1507 = vlaneseq
    %v1508 = vshrl.u32 %v1507, 7
    %v1509 = vsub.s32 0, %v1508
    %v1510 = vrot.slane %v859, %v1509
    %v1511 = vlaneseq
    %v1512 = vshrl.u32 %v1511, 7
    %v1513 = vsub.s32 1, %v1512
    %v1514 = vrot.slane %v859, %v1513
    %v1515 = vlaneseq
    %v1516 = vshrl.u32 %v1515, 7
    %v1517 = vsub.s32 2, %v1516
    %v1518 = vrot.slane %v859, %v1517
    %v1519 = vlaneseq
    %v1520 = vshrl.u32 %v1519, 7
    %v1521 = vsub.s32 3, %v1520
    %v1522 = vrot.slane %v859, %v1521
    %v1523 = vlaneseq
    %v1524 = vshrl.u32 %v1523, 7
    %v1525 = vsub.s32 4, %v1524
    %v1526 = vrot.slane %v859, %v1525
    %v1527 = vlaneseq
    %v1528 = vshrl.u32 %v1527, 7
    %v1529 = vsub.s32 5, %v1528
    %v1530 = vrot.slane %v859, %v1529
    %v1531 = vlaneseq
    %v1532 = vshrl.u32 %v1531, 7
    %v1533 = vsub.s32 6, %v1532
    %v1534 = vrot.slane %v859, %v1533
    %v1535 = vlaneseq
    %v1536 = vshrl.u32 %v1535, 7
    %v1537 = vsub.s32 7, %v1536
    %v1538 = vrot.slane %v859, %v1537
    %v1539 = vlaneseq
    %v1540 = vshrl.u32 %v1539, 7
    %v1541 = vsub.s32 0, %v1540
    %v1542 = vrot.slane %v862, %v1541
    %v1543 = vlaneseq
    %v1544 = vshrl.u32 %v1543, 7
    %v1545 = vsub.s32 1, %v1544
    %v1546 = vrot.slane %v862, %v1545
    %v1547 = vlaneseq
    %v1548 = vshrl.u32 %v1547, 7
    %v1549 = vsub.s32 2, %v1548
    %v1550 = vrot.slane %v862, %v1549
    %v1551 = vlaneseq
    %v1552 = vshrl.u32 %v1551, 7
    %v1553 = vsub.s32 3, %v1552
    %v1554 = vrot.slane %v862, %v1553
    %v1555 = vlaneseq
    %v1556 = vshrl.u32 %v1555, 7
    %v1557 = vsub.s32 4, %v1556
    %v1558 = vrot.slane %v862, %v1557
    %v1559 = vlaneseq
    %v1560 = vshrl.u32 %v1559, 7
    %v1561 = vsub.s32 5, %v1560
    %v1562 = vrot.slane %v862, %v1561
    %v1563 = vlaneseq
    %v1564 = vshrl.u32 %v1563, 7
    %v1565 = vsub.s32 6, %v1564
    %v1566 = vrot.slane %v862, %v1565
    %v1567 = vlaneseq
    %v1568 = vshrl.u32 %v1567, 7
    %v1569 = vsub.s32 7, %v1568
    %v1570 = vrot.slane %v862, %v1569
    %v1571 = vlaneseq
    %v1572 = vshrl.u32 %v1571, 7
    %v1573 = vsub.s32 0, %v1572
    %v1574 = vrot.slane %v865, %v1573
    %v1575 = vlaneseq
    %v1576 = vshrl.u32 %v1575, 7
    %v1577 = vsub.s32 1, %v1576
    %v1578 = vrot.slane %v865, %v1577
    %v1579 = vlaneseq
    %v1580 = vshrl.u32 %v1579, 7
    %v1581 = vsub.s32 2, %v1580
    %v1582 = vrot.slane %v865, %v1581
    %v1583 = vlaneseq
    %v1584 = vshrl.u32 %v1583, 7
    %v1585 = vsub.s32 3, %v1584
    %v1586 = vrot.slane %v865, %v1585
    %v1587 = vlaneseq
    %v1588 = vshrl.u32 %v1587, 7
    %v1589 = vsub.s32 4, %v1588
    %v1590 = vrot.slane %v865, %v1589
    %v1591 = vlaneseq
    %v1592 = vshrl.u32 %v1591, 7
    %v1593 = vsub.s32 5, %v1592
    %v1594 = vrot.slane %v865, %v1593
    %v1595 = vlaneseq
    %v1596 = vshrl.u32 %v1595, 7
    %v1597 = vsub.s32 6, %v1596
    %v1598 = vrot.slane %v865, %v1597
    %v1599 = vlaneseq
    %v1600 = vshrl.u32 %v1599, 7
    %v1601 = vsub.s32 7, %v1600
    %v1602 = vrot.slane %v865, %v1601
    %v1603 = vlaneseq
    %v1604 = vshrl.u32 %v1603, 7
    %v1605 = vsub.s32 0, %v1604
    %v1606 = vrot.slane %v868, %v1605
    %v1607 = vlaneseq
    %v1608 = vshrl.u32 %v1607, 7
    %v1609 = vsub.s32 1, %v1608
    %v1610 = vrot.slane %v868, %v1609
    %v1611 = vlaneseq
    %v1612 = vshrl.u32 %v1611, 7
    %v1613 = vsub.s32 2, %v1612
    %v1614 = vrot.slane %v868, %v1613
    %v1615 = vlaneseq
    %v1616 = vshrl.u32 %v1615, 7
    %v1617 = vsub.s32 3, %v1616
    %v1618 = vrot.slane %v868, %v1617
    %v1619 = vlaneseq
    %v1620 = vshrl.u32 %v1619, 7
    %v1621 = vsub.s32 4, %v1620
    %v1622 = vrot.slane %v868, %v1621
    %v1623 = vlaneseq
    %v1624 = vshrl.u32 %v1623, 7
    %v1625 = vsub.s32 5, %v1624
    %v1626 = vrot.slane %v868, %v1625
    %v1627 = vlaneseq
    %v1628 = vshrl.u32 %v1627, 7
    %v1629 = vsub.s32 6, %v1628
    %v1630 = vrot.slane %v868, %v1629
    %v1631 = vlaneseq
    %v1632 = vshrl.u32 %v1631, 7
    %v1633 = vsub.s32 7, %v1632
    %v1634 = vrot.slane %v868, %v1633
    %v1635 = vlaneseq
    %v1636 = vshrl.u32 %v1635, 7
    %v1637 = vsub.s32 0, %v1636
    %v1638 = vrot.slane %v871, %v1637
    %v1639 = vlaneseq
    %v1640 = vshrl.u32 %v1639, 7
    %v1641 = vsub.s32 1, %v1640
    %v1642 = vrot.slane %v871, %v1641
    %v1643 = vlaneseq
    %v1644 = vshrl.u32 %v1643, 7
    %v1645 = vsub.s32 2, %v1644
    %v1646 = vrot.slane %v871, %v1645
    %v1647 = vlaneseq
    %v1648 = vshrl.u32 %v1647, 7
    %v1649 = vsub.s32 3, %v1648
    %v1650 = vrot.slane %v871, %v1649
    %v1651 = vlaneseq
    %v1652 = vshrl.u32 %v1651, 7
    %v1653 = vsub.s32 4, %v1652
    %v1654 = vrot.slane %v871, %v1653
    %v1655 = vlaneseq
    %v1656 = vshrl.u32 %v1655, 7
    %v1657 = vsub.s32 5, %v1656
    %v1658 = vrot.slane %v871, %v1657
    %v1659 = vlaneseq
    %v1660 = vshrl.u32 %v1659, 7
    %v1661 = vsub.s32 6, %v1660
    %v1662 = vrot.slane %v871, %v1661
    %v1663 = vlaneseq
    %v1664 = vshrl.u32 %v1663, 7
    %v1665 = vsub.s32 7, %v1664
    %v1666 = vrot.slane %v871, %v1665
    %v1667 = vlaneseq
    %v1668 = vshrl.u32 %v1667, 7
    %v1669 = vsub.s32 0, %v1668
    %v1670 = vrot.slane %v874, %v1669
    %v1671 = vlaneseq
    %v1672 = vshrl.u32 %v1671, 7
    %v1673 = vsub.s32 1, %v1672
    %v1674 = vrot.slane %v874, %v1673
    %v1675 = vlaneseq
    %v1676 = vshrl.u32 %v1675, 7
    %v1677 = vsub.s32 2, %v1676
    %v1678 = vrot.slane %v874, %v1677
    %v1679 = vlaneseq
    %v1680 = vshrl.u32 %v1679, 7
    %v1681 = vsub.s32 3, %v1680
    %v1682 = vrot.slane %v874, %v1681
    %v1683 = vlaneseq
    %v1684 = vshrl.u32 %v1683, 7
    %v1685 = vsub.s32 4, %v1684
    %v1686 = vrot.slane %v874, %v1685
    %v1687 = vlaneseq
    %v1688 = vshrl.u32 %v1687, 7
    %v1689 = vsub.s32 5, %v1688
    %v1690 = vrot.slane %v874, %v1689
    %v1691 = vlaneseq
    %v1692 = vshrl.u32 %v1691, 7
    %v1693 = vsub.s32 6, %v1692
    %v1694 = vrot.slane %v874, %v1693
    %v1695 = vlaneseq
    %v1696 = vshrl.u32 %v1695, 7
    %v1697 = vsub.s32 7, %v1696
    %v1698 = vrot.slane %v874, %v1697
    %v1699 = vlaneseq
    %v1700 = vshrl.u32 %v1699, 7
    %v1701 = vsub.s32 0, %v1700
    %v1702 = vrot.slane %v877, %v1701
    %v1703 = vlaneseq
    %v1704 = vshrl.u32 %v1703, 7
    %v1705 = vsub.s32 1, %v1704
    %v1706 = vrot.slane %v877, %v1705
    %v1707 = vlaneseq
    %v1708 = vshrl.u32 %v1707, 7
    %v1709 = vsub.s32 2, %v1708
    %v1710 = vrot.slane %v877, %v1709
    %v1711 = vlaneseq
    %v1712 = vshrl.u32 %v1711, 7
    %v1713 = vsub.s32 3, %v1712
    %v1714 = vrot.slane %v877, %v1713
    %v1715 = vlaneseq
    %v1716 = vshrl.u32 %v1715, 7
    %v1717 = vsub.s32 4, %v1716
    %v1718 = vrot.slane %v877, %v1717
    %v1719 = vlaneseq
    %v1720 = vshrl.u32 %v1719, 7
    %v1721 = vsub.s32 5, %v1720
    %v1722 = vrot.slane %v877, %v1721
    %v1723 = vlaneseq
    %v1724 = vshrl.u32 %v1723, 7
    %v1725 = vsub.s32 6, %v1724
    %v1726 = vrot.slane %v877, %v1725
    %v1727 = vlaneseq
    %v1728 = vshrl.u32 %v1727, 7
    %v1729 = vsub.s32 7, %v1728
    %v1730 = vrot.slane %v877, %v1729
    %v1731 = vlaneseq
    %v1732 = vshrl.u32 %v1731, 7
    %v1733 = vsub.s32 0, %v1732
    %v1734 = vrot.slane %v880, %v1733
    %v1735 = vlaneseq
    %v1736 = vshrl.u32 %v1735, 7
    %v1737 = vsub.s32 1, %v1736
    %v1738 = vrot.slane %v880, %v1737
    %v1739 = vlaneseq
    %v1740 = vshrl.u32 %v1739, 7
    %v1741 = vsub.s32 2, %v1740
    %v1742 = vrot.slane %v880, %v1741
    %v1743 = vlaneseq
    %v1744 = vshrl.u32 %v1743, 7
    %v1745 = vsub.s32 3, %v1744
    %v1746 = vrot.slane %v880, %v1745
    %v1747 = vlaneseq
    %v1748 = vshrl.u32 %v1747, 7
    %v1749 = vsub.s32 4, %v1748
    %v1750 = vrot.slane %v880, %v1749
    %v1751 = vlaneseq
    %v1752 = vshrl.u32 %v1751, 7
    %v1753 = vsub.s32 5, %v1752
    %v1754 = vrot.slane %v880, %v1753
    %v1755 = vlaneseq
    %v1756 = vshrl.u32 %v1755, 7
    %v1757 = vsub.s32 6, %v1756
    %v1758 = vrot.slane %v880, %v1757
    %v1759 = vlaneseq
    %v1760 = vshrl.u32 %v1759, 7
    %v1761 = vsub.s32 7, %v1760
    %v1762 = vrot.slane %v880, %v1761
    %v1763 = vlaneseq
    %v1764 = vshrl.u32 %v1763, 7
    %v1765 = vsub.s32 0, %v1764
    %v1766 = vrot.slane %v883, %v1765
    %v1767 = vlaneseq
    %v1768 = vshrl.u32 %v1767, 7
    %v1769 = vsub.s32 1, %v1768
    %v1770 = vrot.slane %v883, %v1769
    %v1771 = vlaneseq
    %v1772 = vshrl.u32 %v1771, 7
    %v1773 = vsub.s32 2, %v1772
    %v1774 = vrot.slane %v883, %v1773
    %v1775 = vlaneseq
    %v1776 = vshrl.u32 %v1775, 7
    %v1777 = vsub.s32 3, %v1776
    %v1778 = vrot.slane %v883, %v1777
    %v1779 = vlaneseq
    %v1780 = vshrl.u32 %v1779, 7
    %v1781 = vsub.s32 4, %v1780
    %v1782 = vrot.slane %v883, %v1781
    %v1783 = vlaneseq
    %v1784 = vshrl.u32 %v1783, 7
    %v1785 = vsub.s32 5, %v1784
    %v1786 = vrot.slane %v883, %v1785
    %v1787 = vlaneseq
    %v1788 = vshrl.u32 %v1787, 7
    %v1789 = vsub.s32 6, %v1788
    %v1790 = vrot.slane %v883, %v1789
    %v1791 = vlaneseq
    %v1792 = vshrl.u32 %v1791, 7
    %v1793 = vsub.s32 7, %v1792
    %v1794 = vrot.slane %v883, %v1793
    %v1795 = vlaneseq
    %v1796 = vshrl.u32 %v1795, 7
    %v1797 = vsub.s32 0, %v1796
    %v1798 = vrot.slane %v886, %v1797
    %v1799 = vlaneseq
    %v1800 = vshrl.u32 %v1799, 7
    %v1801 = vsub.s32 1, %v1800
    %v1802 = vrot.slane %v886, %v1801
    %v1803 = vlaneseq
    %v1804 = vshrl.u32 %v1803, 7
    %v1805 = vsub.s32 2, %v1804
    %v1806 = vrot.slane %v886, %v1805
    %v1807 = vlaneseq
    %v1808 = vshrl.u32 %v1807, 7
    %v1809 = vsub.s32 3, %v1808
    %v1810 = vrot.slane %v886, %v1809
    %v1811 = vlaneseq
    %v1812 = vshrl.u32 %v1811, 7
    %v1813 = vsub.s32 4, %v1812
    %v1814 = vrot.slane %v886, %v1813
    %v1815 = vlaneseq
    %v1816 = vshrl.u32 %v1815, 7
    %v1817 = vsub.s32 5, %v1816
    %v1818 = vrot.slane %v886, %v1817
    %v1819 = vlaneseq
    %v1820 = vshrl.u32 %v1819, 7
    %v1821 = vsub.s32 6, %v1820
    %v1822 = vrot.slane %v886, %v1821
    %v1823 = vlaneseq
    %v1824 = vshrl.u32 %v1823, 7
    %v1825 = vsub.s32 7, %v1824
    %v1826 = vrot.slane %v886, %v1825
    %v1827 = vlaneseq
    %v1828 = vshrl.u32 %v1827, 7
    %v1829 = vsub.s32 0, %v1828
    %v1830 = vrot.slane %v889, %v1829
    %v1831 = vlaneseq
    %v1832 = vshrl.u32 %v1831, 7
    %v1833 = vsub.s32 1, %v1832
    %v1834 = vrot.slane %v889, %v1833
    %v1835 = vlaneseq
    %v1836 = vshrl.u32 %v1835, 7
    %v1837 = vsub.s32 2, %v1836
    %v1838 = vrot.slane %v889, %v1837
    %v1839 = vlaneseq
    %v1840 = vshrl.u32 %v1839, 7
    %v1841 = vsub.s32 3, %v1840
    %v1842 = vrot.slane %v889, %v1841
    %v1843 = vlaneseq
    %v1844 = vshrl.u32 %v1843, 7
    %v1845 = vsub.s32 4, %v1844
    %v1846 = vrot.slane %v889, %v1845
    %v1847 = vlaneseq
    %v1848 = vshrl.u32 %v1847, 7
    %v1849 = vsub.s32 5, %v1848
    %v1850 = vrot.slane %v889, %v1849
    %v1851 = vlaneseq
    %v1852 = vshrl.u32 %v1851, 7
    %v1853 = vsub.s32 6, %v1852
    %v1854 = vrot.slane %v889, %v1853
    %v1855 = vlaneseq
    %v1856 = vshrl.u32 %v1855, 7
    %v1857 = vsub.s32 7, %v1856
    %v1858 = vrot.slane %v889, %v1857
    %v1859 = vlaneseq
    %v1860 = vshrl.u32 %v1859, 7
    %v1861 = vsub.s32 0, %v1860
    %v1862 = vrot.slane %v892, %v1861
    %v1863 = vlaneseq
    %v1864 = vshrl.u32 %v1863, 7
    %v1865 = vsub.s32 1, %v1864
    %v1866 = vrot.slane %v892, %v1865
    %v1867 = vlaneseq
    %v1868 = vshrl.u32 %v1867, 7
    %v1869 = vsub.s32 2, %v1868
    %v1870 = vrot.slane %v892, %v1869
    %v1871 = vlaneseq
    %v1872 = vshrl.u32 %v1871, 7
    %v1873 = vsub.s32 3, %v1872
    %v1874 = vrot.slane %v892, %v1873
    %v1875 = vlaneseq
    %v1876 = vshrl.u32 %v1875, 7
    %v1877 = vsub.s32 4, %v1876
    %v1878 = vrot.slane %v892, %v1877
    %v1879 = vlaneseq
    %v1880 = vshrl.u32 %v1879, 7
    %v1881 = vsub.s32 5, %v1880
    %v1882 = vrot.slane %v892, %v1881
    %v1883 = vlaneseq
    %v1884 = vshrl.u32 %v1883, 7
    %v1885 = vsub.s32 6, %v1884
    %v1886 = vrot.slane %v892, %v1885
    %v1887 = vlaneseq
    %v1888 = vshrl.u32 %v1887, 7
    %v1889 = vsub.s32 7, %v1888
    %v1890 = vrot.slane %v892, %v1889
    %v1891 = vlaneseq
    %v1892 = vshrl.u32 %v1891, 7
    %v1893 = vsub.s32 0, %v1892
    %v1894 = vrot.slane %v895, %v1893
    %v1895 = vlaneseq
    %v1896 = vshrl.u32 %v1895, 7
    %v1897 = vsub.s32 1, %v1896
    %v1898 = vrot.slane %v895, %v1897
    %v1899 = vlaneseq
    %v1900 = vshrl.u32 %v1899, 7
    %v1901 = vsub.s32 2, %v1900
    %v1902 = vrot.slane %v895, %v1901
    %v1903 = vlaneseq
    %v1904 = vshrl.u32 %v1903, 7
    %v1905 = vsub.s32 3, %v1904
    %v1906 = vrot.slane %v895, %v1905
    %v1907 = vlaneseq
    %v1908 = vshrl.u32 %v1907, 7
    %v1909 = vsub.s32 4, %v1908
    %v1910 = vrot.slane %v895, %v1909
    %v1911 = vlaneseq
    %v1912 = vshrl.u32 %v1911, 7
    %v1913 = vsub.s32 5, %v1912
    %v1914 = vrot.slane %v895, %v1913
    %v1915 = vlaneseq
    %v1916 = vshrl.u32 %v1915, 7
    %v1917 = vsub.s32 6, %v1916
    %v1918 = vrot.slane %v895, %v1917
    %v1919 = vlaneseq
    %v1920 = vshrl.u32 %v1919, 7
    %v1921 = vsub.s32 7, %v1920
    %v1922 = vrot.slane %v895, %v1921
    %v1923 = vlaneseq
    %v1924 = vshrl.u32 %v1923, 7
    %v1925 = vsub.s32 0, %v1924
    %v1926 = vrot.slane %v898, %v1925
    %v1927 = vlaneseq
    %v1928 = vshrl.u32 %v1927, 7
    %v1929 = vsub.s32 1, %v1928
    %v1930 = vrot.slane %v898, %v1929
    %v1931 = vlaneseq
    %v1932 = vshrl.u32 %v1931, 7
    %v1933 = vsub.s32 2, %v1932
    %v1934 = vrot.slane %v898, %v1933
    %v1935 = vlaneseq
    %v1936 = vshrl.u32 %v1935, 7
    %v1937 = vsub.s32 3, %v1936
    %v1938 = vrot.slane %v898, %v1937
    %v1939 = vlaneseq
    %v1940 = vshrl.u32 %v1939, 7
    %v1941 = vsub.s32 4, %v1940
    %v1942 = vrot.slane %v898, %v1941
    %v1943 = vlaneseq
    %v1944 = vshrl.u32 %v1943, 7
    %v1945 = vsub.s32 5, %v1944
    %v1946 = vrot.slane %v898, %v1945
    %v1947 = vlaneseq
    %v1948 = vshrl.u32 %v1947, 7
    %v1949 = vsub.s32 6, %v1948
    %v1950 = vrot.slane %v898, %v1949
    %v1951 = vlaneseq
    %v1952 = vshrl.u32 %v1951, 7
    %v1953 = vsub.s32 7, %v1952
    %v1954 = vrot.slane %v898, %v1953
    %v1955 = vcombine.low %v934, %v938
    %v1956 = vcombine.low %v942, %v946
    %v1957 = vcombine.low %v950, %v954
    %v1958 = vcombine.low %v958, %v962
    %v1960 = vunpack.c.l.s4 1966171168
    %v1961 = vunpack.c.0.s8 %v1960
    %v1962 = vlaneseq
    %v1963 = vshrl.u32 %v1962, 7
    %v1964 = vsub.s32 %v1961, %v1963
    %v1965 = vrot.slane %v1955, %v1964
    %v1967 = vunpack.c.l.s4 1966171168
    %v1968 = vunpack.c.0.s8 %v1967
    %v1969 = vlaneseq
    %v1970 = vshrl.u32 %v1969, 7
    %v1971 = vsub.s32 %v1968, %v1970
    %v1972 = vrot.slane %v1956, %v1971
    %v1974 = vunpack.c.l.s4 1966171168
    %v1975 = vunpack.c.0.s8 %v1974
    %v1976 = vlaneseq
    %v1977 = vshrl.u32 %v1976, 7
    %v1978 = vsub.s32 %v1975, %v1977
    %v1979 = vrot.slane %v1957, %v1978
    %v1981 = vunpack.c.l.s4 1966171168
    %v1982 = vunpack.c.0.s8 %v1981
    %v1983 = vlaneseq
    %v1984 = vshrl.u32 %v1983, 7
    %v1985 = vsub.s32 %v1982, %v1984
    %v1986 = vrot.slane %v1958, %v1985
    %v1987 = vcombine.low %v1965, %v1972
    %v1988 = vcombine.low %v1979, %v1986
    %v1990 = vunpack.c.l.s4 1966171168
    %v1991 = vunpack.c.0.s8 %v1990
    %v1992 = vlaneseq
    %v1993 = vshrl.u32 %v1992, 7
    %v1994 = vsub.s32 %v1991, %v1993
    %v1995 = vrot.slane %v1987, %v1994
    %v1997 = vunpack.c.l.s4 1966171168
    %v1998 = vunpack.c.0.s8 %v1997
    %v1999 = vlaneseq
    %v2000 = vshrl.u32 %v1999, 7
    %v2001 = vsub.s32 %v1998, %v2000
    %v2002 = vrot.slane %v1988, %v2001
    %v2003 = vcombine.low %v1995, %v2002
    %v2004 = vcombine.low %v966, %v970
    %v2005 = vcombine.low %v974, %v978
    %v2006 = vcombine.low %v982, %v986
    %v2007 = vcombine.low %v990, %v994
    %v2009 = vunpack.c.l.s4 1966171168
    %v2010 = vunpack.c.0.s8 %v2009
    %v2011 = vlaneseq
    %v2012 = vshrl.u32 %v2011, 7
    %v2013 = vsub.s32 %v2010, %v2012
    %v2014 = vrot.slane %v2004, %v2013
    %v2016 = vunpack.c.l.s4 1966171168
    %v2017 = vunpack.c.0.s8 %v2016
    %v2018 = vlaneseq
    %v2019 = vshrl.u32 %v2018, 7
    %v2020 = vsub.s32 %v2017, %v2019
    %v2021 = vrot.slane %v2005, %v2020
    %v2023 = vunpack.c.l.s4 1966171168
    %v2024 = vunpack.c.0.s8 %v2023
    %v2025 = vlaneseq
    %v2026 = vshrl.u32 %v2025, 7
    %v2027 = vsub.s32 %v2024, %v2026
    %v2028 = vrot.slane %v2006, %v2027
    %v2030 = vunpack.c.l.s4 1966171168
    %v2031 = vunpack.c.0.s8 %v2030
    %v2032 = vlaneseq
    %v2033 = vshrl.u32 %v2032, 7
    %v2034 = vsub.s32 %v2031, %v2033
    %v2035 = vrot.slane %v2007, %v2034
    %v2036 = vcombine.low %v2014, %v2021
    %v2037 = vcombine.low %v2028, %v2035
    %v2039 = vunpack.c.l.s4 1966171168
    %v2040 = vunpack.c.0.s8 %v2039
    %v2041 = vlaneseq
    %v2042 = vshrl.u32 %v2041, 7
    %v2043 = vsub.s32 %v2040, %v2042
    %v2044 = vrot.slane %v2036, %v2043
    %v2046 = vunpack.c.l.s4 1966171168
    %v2047 = vunpack.c.0.s8 %v2046
    %v2048 = vlaneseq
    %v2049 = vshrl.u32 %v2048, 7
    %v2050 = vsub.s32 %v2047, %v2049
    %v2051 = vrot.slane %v2037, %v2050
    %v2052 = vcombine.low %v2044, %v2051
    %v2053 = vcombine.low %v998, %v1002
    %v2054 = vcombine.low %v1006, %v1010
    %v2055 = vcombine.low %v1014, %v1018
    %v2056 = vcombine.low %v1022, %v1026
    %v2058 = vunpack.c.l.s4 1966171168
    %v2059 = vunpack.c.0.s8 %v2058
    %v2060 = vlaneseq
    %v2061 = vshrl.u32 %v2060, 7
    %v2062 = vsub.s32 %v2059, %v2061
    %v2063 = vrot.slane %v2053, %v2062
    %v2065 = vunpack.c.l.s4 1966171168
    %v2066 = vunpack.c.0.s8 %v2065
    %v2067 = vlaneseq
    %v2068 = vshrl.u32 %v2067, 7
    %v2069 = vsub.s32 %v2066, %v2068
    %v2070 = vrot.slane %v2054, %v2069
    %v2072 = vunpack.c.l.s4 1966171168
    %v2073 = vunpack.c.0.s8 %v2072
    %v2074 = vlaneseq
    %v2075 = vshrl.u32 %v2074, 7
    %v2076 = vsub.s32 %v2073, %v2075
    %v2077 = vrot.slane %v2055, %v2076
    %v2079 = vunpack.c.l.s4 1966171168
    %v2080 = vunpack.c.0.s8 %v2079
    %v2081 = vlaneseq
    %v2082 = vshrl.u32 %v2081, 7
    %v2083 = vsub.s32 %v2080, %v2082
    %v2084 = vrot.slane %v2056, %v2083
    %v2085 = vcombine.low %v2063, %v2070
    %v2086 = vcombine.low %v2077, %v2084
    %v2088 = vunpack.c.l.s4 1966171168
    %v2089 = vunpack.c.0.s8 %v2088
    %v2090 = vlaneseq
    %v2091 = vshrl.u32 %v2090, 7
    %v2092 = vsub.s32 %v2089, %v2091
    %v2093 = vrot.slane %v2085, %v2092
    %v2095 = vunpack.c.l.s4 1966171168
    %v2096 = vunpack.c.0.s8 %v2095
    %v2097 = vlaneseq
    %v2098 = vshrl.u32 %v2097, 7
    %v2099 = vsub.s32 %v2096, %v2098
    %v2100 = vrot.slane %v2086, %v2099
    %v2101 = vcombine.low %v2093, %v2100
    %v2102 = vcombine.low %v1030, %v1034
    %v2103 = vcombine.low %v1038, %v1042
    %v2104 = vcombine.low %v1046, %v1050
    %v2105 = vcombine.low %v1054, %v1058
    %v2107 = vunpack.c.l.s4 1966171168
    %v2108 = vunpack.c.0.s8 %v2107
    %v2109 = vlaneseq
    %v2110 = vshrl.u32 %v2109, 7
    %v2111 = vsub.s32 %v2108, %v2110
    %v2112 = vrot.slane %v2102, %v2111
    %v2114 = vunpack.c.l.s4 1966171168
    %v2115 = vunpack.c.0.s8 %v2114
    %v2116 = vlaneseq
    %v2117 = vshrl.u32 %v2116, 7
    %v2118 = vsub.s32 %v2115, %v2117
    %v2119 = vrot.slane %v2103, %v2118
    %v2121 = vunpack.c.l.s4 1966171168
    %v2122 = vunpack.c.0.s8 %v2121
    %v2123 = vlaneseq
    %v2124 = vshrl.u32 %v2123, 7
    %v2125 = vsub.s32 %v2122, %v2124
    %v2126 = vrot.slane %v2104, %v2125
    %v2128 = vunpack.c.l.s4 1966171168
    %v2129 = vunpack.c.0.s8 %v2128
    %v2130 = vlaneseq
    %v2131 = vshrl.u32 %v2130, 7
    %v2132 = vsub.s32 %v2129, %v2131
    %v2133 = vrot.slane %v2105, %v2132
    %v2134 = vcombine.low %v2112, %v2119
    %v2135 = vcombine.low %v2126, %v2133
    %v2137 = vunpack.c.l.s4 1966171168
    %v2138 = vunpack.c.0.s8 %v2137
    %v2139 = vlaneseq
    %v2140 = vshrl.u32 %v2139, 7
    %v2141 = vsub.s32 %v2138, %v2140
    %v2142 = vrot.slane %v2134, %v2141
    %v2144 = vunpack.c.l.s4 1966171168
    %v2145 = vunpack.c.0.s8 %v2144
    %v2146 = vlaneseq
    %v2147 = vshrl.u32 %v2146, 7
    %v2148 = vsub.s32 %v2145, %v2147
    %v2149 = vrot.slane %v2135, %v2148
    %v2150 = vcombine.low %v2142, %v2149
    %v2151 = vcombine.low %v1062, %v1066
    %v2152 = vcombine.low %v1070, %v1074
    %v2153 = vcombine.low %v1078, %v1082
    %v2154 = vcombine.low %v1086, %v1090
    %v2156 = vunpack.c.l.s4 1966171168
    %v2157 = vunpack.c.0.s8 %v2156
    %v2158 = vlaneseq
    %v2159 = vshrl.u32 %v2158, 7
    %v2160 = vsub.s32 %v2157, %v2159
    %v2161 = vrot.slane %v2151, %v2160
    %v2163 = vunpack.c.l.s4 1966171168
    %v2164 = vunpack.c.0.s8 %v2163
    %v2165 = vlaneseq
    %v2166 = vshrl.u32 %v2165, 7
    %v2167 = vsub.s32 %v2164, %v2166
    %v2168 = vrot.slane %v2152, %v2167
    %v2170 = vunpack.c.l.s4 1966171168
    %v2171 = vunpack.c.0.s8 %v2170
    %v2172 = vlaneseq
    %v2173 = vshrl.u32 %v2172, 7
    %v2174 = vsub.s32 %v2171, %v2173
    %v2175 = vrot.slane %v2153, %v2174
    %v2177 = vunpack.c.l.s4 1966171168
    %v2178 = vunpack.c.0.s8 %v2177
    %v2179 = vlaneseq
    %v2180 = vshrl.u32 %v2179, 7
    %v2181 = vsub.s32 %v2178, %v2180
    %v2182 = vrot.slane %v2154, %v2181
    %v2183 = vcombine.low %v2161, %v2168
    %v2184 = vcombine.low %v2175, %v2182
    %v2186 = vunpack.c.l.s4 1966171168
    %v2187 = vunpack.c.0.s8 %v2186
    %v2188 = vlaneseq
    %v2189 = vshrl.u32 %v2188, 7
    %v2190 = vsub.s32 %v2187, %v2189
    %v2191 = vrot.slane %v2183, %v2190
    %v2193 = vunpack.c.l.s4 1966171168
    %v2194 = vunpack.c.0.s8 %v2193
    %v2195 = vlaneseq
    %v2196 = vshrl.u32 %v2195, 7
    %v2197 = vsub.s32 %v2194, %v2196
    %v2198 = vrot.slane %v2184, %v2197
    %v2199 = vcombine.low %v2191, %v2198
    %v2200 = vcombine.low %v1094, %v1098
    %v2201 = vcombine.low %v1102, %v1106
    %v2202 = vcombine.low %v1110, %v1114
    %v2203 = vcombine.low %v1118, %v1122
    %v2205 = vunpack.c.l.s4 1966171168
    %v2206 = vunpack.c.0.s8 %v2205
    %v2207 = vlaneseq
    %v2208 = vshrl.u32 %v2207, 7
    %v2209 = vsub.s32 %v2206, %v2208
    %v2210 = vrot.slane %v2200, %v2209
    %v2212 = vunpack.c.l.s4 1966171168
    %v2213 = vunpack.c.0.s8 %v2212
    %v2214 = vlaneseq
    %v2215 = vshrl.u32 %v2214, 7
    %v2216 = vsub.s32 %v2213, %v2215
    %v2217 = vrot.slane %v2201, %v2216
    %v2219 = vunpack.c.l.s4 1966171168
    %v2220 = vunpack.c.0.s8 %v2219
    %v2221 = vlaneseq
    %v2222 = vshrl.u32 %v2221, 7
    %v2223 = vsub.s32 %v2220, %v2222
    %v2224 = vrot.slane %v2202, %v2223
    %v2226 = vunpack.c.l.s4 1966171168
    %v2227 = vunpack.c.0.s8 %v2226
    %v2228 = vlaneseq
    %v2229 = vshrl.u32 %v2228, 7
    %v2230 = vsub.s32 %v2227, %v2229
    %v2231 = vrot.slane %v2203, %v2230
    %v2232 = vcombine.low %v2210, %v2217
    %v2233 = vcombine.low %v2224, %v2231
    %v2235 = vunpack.c.l.s4 1966171168
    %v2236 = vunpack.c.0.s8 %v2235
    %v2237 = vlaneseq
    %v2238 = vshrl.u32 %v2237, 7
    %v2239 = vsub.s32 %v2236, %v2238
    %v2240 = vrot.slane %v2232, %v2239
    %v2242 = vunpack.c.l.s4 1966171168
    %v2243 = vunpack.c.0.s8 %v2242
    %v2244 = vlaneseq
    %v2245 = vshrl.u32 %v2244, 7
    %v2246 = vsub.s32 %v2243, %v2245
    %v2247 = vrot.slane %v2233, %v2246
    %v2248 = vcombine.low %v2240, %v2247
    %v2249 = vcombine.low %v1126, %v1130
    %v2250 = vcombine.low %v1134, %v1138
    %v2251 = vcombine.low %v1142, %v1146
    %v2252 = vcombine.low %v1150, %v1154
    %v2254 = vunpack.c.l.s4 1966171168
    %v2255 = vunpack.c.0.s8 %v2254
    %v2256 = vlaneseq
    %v2257 = vshrl.u32 %v2256, 7
    %v2258 = vsub.s32 %v2255, %v2257
    %v2259 = vrot.slane %v2249, %v2258
    %v2261 = vunpack.c.l.s4 1966171168
    %v2262 = vunpack.c.0.s8 %v2261
    %v2263 = vlaneseq
    %v2264 = vshrl.u32 %v2263, 7
    %v2265 = vsub.s32 %v2262, %v2264
    %v2266 = vrot.slane %v2250, %v2265
    %v2268 = vunpack.c.l.s4 1966171168
    %v2269 = vunpack.c.0.s8 %v2268
    %v2270 = vlaneseq
    %v2271 = vshrl.u32 %v2270, 7
    %v2272 = vsub.s32 %v2269, %v2271
    %v2273 = vrot.slane %v2251, %v2272
    %v2275 = vunpack.c.l.s4 1966171168
    %v2276 = vunpack.c.0.s8 %v2275
    %v2277 = vlaneseq
    %v2278 = vshrl.u32 %v2277, 7
    %v2279 = vsub.s32 %v2276, %v2278
    %v2280 = vrot.slane %v2252, %v2279
    %v2281 = vcombine.low %v2259, %v2266
    %v2282 = vcombine.low %v2273, %v2280
    %v2284 = vunpack.c.l.s4 1966171168
    %v2285 = vunpack.c.0.s8 %v2284
    %v2286 = vlaneseq
    %v2287 = vshrl.u32 %v2286, 7
    %v2288 = vsub.s32 %v2285, %v2287
    %v2289 = vrot.slane %v2281, %v2288
    %v2291 = vunpack.c.l.s4 1966171168
    %v2292 = vunpack.c.0.s8 %v2291
    %v2293 = vlaneseq
    %v2294 = vshrl.u32 %v2293, 7
    %v2295 = vsub.s32 %v2292, %v2294
    %v2296 = vrot.slane %v2282, %v2295
    %v2297 = vcombine.low %v2289, %v2296
    %v2298 = vcombine.low %v1158, %v1162
    %v2299 = vcombine.low %v1166, %v1170
    %v2300 = vcombine.low %v1174, %v1178
    %v2301 = vcombine.low %v1182, %v1186
    %v2303 = vunpack.c.l.s4 1966171168
    %v2304 = vunpack.c.0.s8 %v2303
    %v2305 = vlaneseq
    %v2306 = vshrl.u32 %v2305, 7
    %v2307 = vsub.s32 %v2304, %v2306
    %v2308 = vrot.slane %v2298, %v2307
    %v2310 = vunpack.c.l.s4 1966171168
    %v2311 = vunpack.c.0.s8 %v2310
    %v2312 = vlaneseq
    %v2313 = vshrl.u32 %v2312, 7
    %v2314 = vsub.s32 %v2311, %v2313
    %v2315 = vrot.slane %v2299, %v2314
    %v2317 = vunpack.c.l.s4 1966171168
    %v2318 = vunpack.c.0.s8 %v2317
    %v2319 = vlaneseq
    %v2320 = vshrl.u32 %v2319, 7
    %v2321 = vsub.s32 %v2318, %v2320
    %v2322 = vrot.slane %v2300, %v2321
    %v2324 = vunpack.c.l.s4 1966171168
    %v2325 = vunpack.c.0.s8 %v2324
    %v2326 = vlaneseq
    %v2327 = vshrl.u32 %v2326, 7
    %v2328 = vsub.s32 %v2325, %v2327
    %v2329 = vrot.slane %v2301, %v2328
    %v2330 = vcombine.low %v2308, %v2315
    %v2331 = vcombine.low %v2322, %v2329
    %v2333 = vunpack.c.l.s4 1966171168
    %v2334 = vunpack.c.0.s8 %v2333
    %v2335 = vlaneseq
    %v2336 = vshrl.u32 %v2335, 7
    %v2337 = vsub.s32 %v2334, %v2336
    %v2338 = vrot.slane %v2330, %v2337
    %v2340 = vunpack.c.l.s4 1966171168
    %v2341 = vunpack.c.0.s8 %v2340
    %v2342 = vlaneseq
    %v2343 = vshrl.u32 %v2342, 7
    %v2344 = vsub.s32 %v2341, %v2343
    %v2345 = vrot.slane %v2331, %v2344
    %v2346 = vcombine.low %v2338, %v2345
    %v2347 = vcombine.low %v1190, %v1194
    %v2348 = vcombine.low %v1198, %v1202
    %v2349 = vcombine.low %v1206, %v1210
    %v2350 = vcombine.low %v1214, %v1218
    %v2352 = vunpack.c.l.s4 1966171168
    %v2353 = vunpack.c.0.s8 %v2352
    %v2354 = vlaneseq
    %v2355 = vshrl.u32 %v2354, 7
    %v2356 = vsub.s32 %v2353, %v2355
    %v2357 = vrot.slane %v2347, %v2356
    %v2359 = vunpack.c.l.s4 1966171168
    %v2360 = vunpack.c.0.s8 %v2359
    %v2361 = vlaneseq
    %v2362 = vshrl.u32 %v2361, 7
    %v2363 = vsub.s32 %v2360, %v2362
    %v2364 = vrot.slane %v2348, %v2363
    %v2366 = vunpack.c.l.s4 1966171168
    %v2367 = vunpack.c.0.s8 %v2366
    %v2368 = vlaneseq
    %v2369 = vshrl.u32 %v2368, 7
    %v2370 = vsub.s32 %v2367, %v2369
    %v2371 = vrot.slane %v2349, %v2370
    %v2373 = vunpack.c.l.s4 1966171168
    %v2374 = vunpack.c.0.s8 %v2373
    %v2375 = vlaneseq
    %v2376 = vshrl.u32 %v2375, 7
    %v2377 = vsub.s32 %v2374, %v2376
    %v2378 = vrot.slane %v2350, %v2377
    %v2379 = vcombine.low %v2357, %v2364
    %v2380 = vcombine.low %v2371, %v2378
    %v2382 = vunpack.c.l.s4 1966171168
    %v2383 = vunpack.c.0.s8 %v2382
    %v2384 = vlaneseq
    %v2385 = vshrl.u32 %v2384, 7
    %v2386 = vsub.s32 %v2383, %v2385
    %v2387 = vrot.slane %v2379, %v2386
    %v2389 = vunpack.c.l.s4 1966171168
    %v2390 = vunpack.c.0.s8 %v2389
    %v2391 = vlaneseq
    %v2392 = vshrl.u32 %v2391, 7
    %v2393 = vsub.s32 %v2390, %v2392
    %v2394 = vrot.slane %v2380, %v2393
    %v2395 = vcombine.low %v2387, %v2394
    %v2396 = vcombine.low %v1222, %v1226
    %v2397 = vcombine.low %v1230, %v1234
    %v2398 = vcombine.low %v1238, %v1242
    %v2399 = vcombine.low %v1246, %v1250
    %v2401 = vunpack.c.l.s4 1966171168
    %v2402 = vunpack.c.0.s8 %v2401
    %v2403 = vlaneseq
    %v2404 = vshrl.u32 %v2403, 7
    %v2405 = vsub.s32 %v2402, %v2404
    %v2406 = vrot.slane %v2396, %v2405
    %v2408 = vunpack.c.l.s4 1966171168
    %v2409 = vunpack.c.0.s8 %v2408
    %v2410 = vlaneseq
    %v2411 = vshrl.u32 %v2410, 7
    %v2412 = vsub.s32 %v2409, %v2411
    %v2413 = vrot.slane %v2397, %v2412
    %v2415 = vunpack.c.l.s4 1966171168
    %v2416 = vunpack.c.0.s8 %v2415
    %v2417 = vlaneseq
    %v2418 = vshrl.u32 %v2417, 7
    %v2419 = vsub.s32 %v2416, %v2418
    %v2420 = vrot.slane %v2398, %v2419
    %v2422 = vunpack.c.l.s4 1966171168
    %v2423 = vunpack.c.0.s8 %v2422
    %v2424 = vlaneseq
    %v2425 = vshrl.u32 %v2424, 7
    %v2426 = vsub.s32 %v2423, %v2425
    %v2427 = vrot.slane %v2399, %v2426
    %v2428 = vcombine.low %v2406, %v2413
    %v2429 = vcombine.low %v2420, %v2427
    %v2431 = vunpack.c.l.s4 1966171168
    %v2432 = vunpack.c.0.s8 %v2431
    %v2433 = vlaneseq
    %v2434 = vshrl.u32 %v2433, 7
    %v2435 = vsub.s32 %v2432, %v2434
    %v2436 = vrot.slane %v2428, %v2435
    %v2438 = vunpack.c.l.s4 1966171168
    %v2439 = vunpack.c.0.s8 %v2438
    %v2440 = vlaneseq
    %v2441 = vshrl.u32 %v2440, 7
    %v2442 = vsub.s32 %v2439, %v2441
    %v2443 = vrot.slane %v2429, %v2442
    %v2444 = vcombine.low %v2436, %v2443
    %v2445 = vcombine.low %v1254, %v1258
    %v2446 = vcombine.low %v1262, %v1266
    %v2447 = vcombine.low %v1270, %v1274
    %v2448 = vcombine.low %v1278, %v1282
    %v2450 = vunpack.c.l.s4 1966171168
    %v2451 = vunpack.c.0.s8 %v2450
    %v2452 = vlaneseq
    %v2453 = vshrl.u32 %v2452, 7
    %v2454 = vsub.s32 %v2451, %v2453
    %v2455 = vrot.slane %v2445, %v2454
    %v2457 = vunpack.c.l.s4 1966171168
    %v2458 = vunpack.c.0.s8 %v2457
    %v2459 = vlaneseq
    %v2460 = vshrl.u32 %v2459, 7
    %v2461 = vsub.s32 %v2458, %v2460
    %v2462 = vrot.slane %v2446, %v2461
    %v2464 = vunpack.c.l.s4 1966171168
    %v2465 = vunpack.c.0.s8 %v2464
    %v2466 = vlaneseq
    %v2467 = vshrl.u32 %v2466, 7
    %v2468 = vsub.s32 %v2465, %v2467
    %v2469 = vrot.slane %v2447, %v2468
    %v2471 = vunpack.c.l.s4 1966171168
    %v2472 = vunpack.c.0.s8 %v2471
    %v2473 = vlaneseq
    %v2474 = vshrl.u32 %v2473, 7
    %v2475 = vsub.s32 %v2472, %v2474
    %v2476 = vrot.slane %v2448, %v2475
    %v2477 = vcombine.low %v2455, %v2462
    %v2478 = vcombine.low %v2469, %v2476
    %v2480 = vunpack.c.l.s4 1966171168
    %v2481 = vunpack.c.0.s8 %v2480
    %v2482 = vlaneseq
    %v2483 = vshrl.u32 %v2482, 7
    %v2484 = vsub.s32 %v2481, %v2483
    %v2485 = vrot.slane %v2477, %v2484
    %v2487 = vunpack.c.l.s4 1966171168
    %v2488 = vunpack.c.0.s8 %v2487
    %v2489 = vlaneseq
    %v2490 = vshrl.u32 %v2489, 7
    %v2491 = vsub.s32 %v2488, %v2490
    %v2492 = vrot.slane %v2478, %v2491
    %v2493 = vcombine.low %v2485, %v2492
    %v2494 = vcombine.low %v1286, %v1290
    %v2495 = vcombine.low %v1294, %v1298
    %v2496 = vcombine.low %v1302, %v1306
    %v2497 = vcombine.low %v1310, %v1314
    %v2499 = vunpack.c.l.s4 1966171168
    %v2500 = vunpack.c.0.s8 %v2499
    %v2501 = vlaneseq
    %v2502 = vshrl.u32 %v2501, 7
    %v2503 = vsub.s32 %v2500, %v2502
    %v2504 = vrot.slane %v2494, %v2503
    %v2506 = vunpack.c.l.s4 1966171168
    %v2507 = vunpack.c.0.s8 %v2506
    %v2508 = vlaneseq
    %v2509 = vshrl.u32 %v2508, 7
    %v2510 = vsub.s32 %v2507, %v2509
    %v2511 = vrot.slane %v2495, %v2510
    %v2513 = vunpack.c.l.s4 1966171168
    %v2514 = vunpack.c.0.s8 %v2513
    %v2515 = vlaneseq
    %v2516 = vshrl.u32 %v2515, 7
    %v2517 = vsub.s32 %v2514, %v2516
    %v2518 = vrot.slane %v2496, %v2517
    %v2520 = vunpack.c.l.s4 1966171168
    %v2521 = vunpack.c.0.s8 %v2520
    %v2522 = vlaneseq
    %v2523 = vshrl.u32 %v2522, 7
    %v2524 = vsub.s32 %v2521, %v2523
    %v2525 = vrot.slane %v2497, %v2524
    %v2526 = vcombine.low %v2504, %v2511
    %v2527 = vcombine.low %v2518, %v2525
    %v2529 = vunpack.c.l.s4 1966171168
    %v2530 = vunpack.c.0.s8 %v2529
    %v2531 = vlaneseq
    %v2532 = vshrl.u32 %v2531, 7
    %v2533 = vsub.s32 %v2530, %v2532
    %v2534 = vrot.slane %v2526, %v2533
    %v2536 = vunpack.c.l.s4 1966171168
    %v2537 = vunpack.c.0.s8 %v2536
    %v2538 = vlaneseq
    %v2539 = vshrl.u32 %v2538, 7
    %v2540 = vsub.s32 %v2537, %v2539
    %v2541 = vrot.slane %v2527, %v2540
    %v2542 = vcombine.low %v2534, %v2541
    %v2543 = vcombine.low %v1318, %v1322
    %v2544 = vcombine.low %v1326, %v1330
    %v2545 = vcombine.low %v1334, %v1338
    %v2546 = vcombine.low %v1342, %v1346
    %v2548 = vunpack.c.l.s4 1966171168
    %v2549 = vunpack.c.0.s8 %v2548
    %v2550 = vlaneseq
    %v2551 = vshrl.u32 %v2550, 7
    %v2552 = vsub.s32 %v2549, %v2551
    %v2553 = vrot.slane %v2543, %v2552
    %v2555 = vunpack.c.l.s4 1966171168
    %v2556 = vunpack.c.0.s8 %v2555
    %v2557 = vlaneseq
    %v2558 = vshrl.u32 %v2557, 7
    %v2559 = vsub.s32 %v2556, %v2558
    %v2560 = vrot.slane %v2544, %v2559
    %v2562 = vunpack.c.l.s4 1966171168
    %v2563 = vunpack.c.0.s8 %v2562
    %v2564 = vlaneseq
    %v2565 = vshrl.u32 %v2564, 7
    %v2566 = vsub.s32 %v2563, %v2565
    %v2567 = vrot.slane %v2545, %v2566
    %v2569 = vunpack.c.l.s4 1966171168
    %v2570 = vunpack.c.0.s8 %v2569
    %v2571 = vlaneseq
    %v2572 = vshrl.u32 %v2571, 7
    %v2573 = vsub.s32 %v2570, %v2572
    %v2574 = vrot.slane %v2546, %v2573
    %v2575 = vcombine.low %v2553, %v2560
    %v2576 = vcombine.low %v2567, %v2574
    %v2578 = vunpack.c.l.s4 1966171168
    %v2579 = vunpack.c.0.s8 %v2578
    %v2580 = vlaneseq
    %v2581 = vshrl.u32 %v2580, 7
    %v2582 = vsub.s32 %v2579, %v2581
    %v2583 = vrot.slane %v2575, %v2582
    %v2585 = vunpack.c.l.s4 1966171168
    %v2586 = vunpack.c.0.s8 %v2585
    %v2587 = vlaneseq
    %v2588 = vshrl.u32 %v2587, 7
    %v2589 = vsub.s32 %v2586, %v2588
    %v2590 = vrot.slane %v2576, %v2589
    %v2591 = vcombine.low %v2583, %v2590
    %v2592 = vcombine.low %v1350, %v1354
    %v2593 = vcombine.low %v1358, %v1362
    %v2594 = vcombine.low %v1366, %v1370
    %v2595 = vcombine.low %v1374, %v1378
    %v2597 = vunpack.c.l.s4 1966171168
    %v2598 = vunpack.c.0.s8 %v2597
    %v2599 = vlaneseq
    %v2600 = vshrl.u32 %v2599, 7
    %v2601 = vsub.s32 %v2598, %v2600
    %v2602 = vrot.slane %v2592, %v2601
    %v2604 = vunpack.c.l.s4 1966171168
    %v2605 = vunpack.c.0.s8 %v2604
    %v2606 = vlaneseq
    %v2607 = vshrl.u32 %v2606, 7
    %v2608 = vsub.s32 %v2605, %v2607
    %v2609 = vrot.slane %v2593, %v2608
    %v2611 = vunpack.c.l.s4 1966171168
    %v2612 = vunpack.c.0.s8 %v2611
    %v2613 = vlaneseq
    %v2614 = vshrl.u32 %v2613, 7
    %v2615 = vsub.s32 %v2612, %v2614
    %v2616 = vrot.slane %v2594, %v2615
    %v2618 = vunpack.c.l.s4 1966171168
    %v2619 = vunpack.c.0.s8 %v2618
    %v2620 = vlaneseq
    %v2621 = vshrl.u32 %v2620, 7
    %v2622 = vsub.s32 %v2619, %v2621
    %v2623 = vrot.slane %v2595, %v2622
    %v2624 = vcombine.low %v2602, %v2609
    %v2625 = vcombine.low %v2616, %v2623
    %v2627 = vunpack.c.l.s4 1966171168
    %v2628 = vunpack.c.0.s8 %v2627
    %v2629 = vlaneseq
    %v2630 = vshrl.u32 %v2629, 7
    %v2631 = vsub.s32 %v2628, %v2630
    %v2632 = vrot.slane %v2624, %v2631
    %v2634 = vunpack.c.l.s4 1966171168
    %v2635 = vunpack.c.0.s8 %v2634
    %v2636 = vlaneseq
    %v2637 = vshrl.u32 %v2636, 7
    %v2638 = vsub.s32 %v2635, %v2637
    %v2639 = vrot.slane %v2625, %v2638
    %v2640 = vcombine.low %v2632, %v2639
    %v2641 = vcombine.low %v1382, %v1386
    %v2642 = vcombine.low %v1390, %v1394
    %v2643 = vcombine.low %v1398, %v1402
    %v2644 = vcombine.low %v1406, %v1410
    %v2646 = vunpack.c.l.s4 1966171168
    %v2647 = vunpack.c.0.s8 %v2646
    %v2648 = vlaneseq
    %v2649 = vshrl.u32 %v2648, 7
    %v2650 = vsub.s32 %v2647, %v2649
    %v2651 = vrot.slane %v2641, %v2650
    %v2653 = vunpack.c.l.s4 1966171168
    %v2654 = vunpack.c.0.s8 %v2653
    %v2655 = vlaneseq
    %v2656 = vshrl.u32 %v2655, 7
    %v2657 = vsub.s32 %v2654, %v2656
    %v2658 = vrot.slane %v2642, %v2657
    %v2660 = vunpack.c.l.s4 1966171168
    %v2661 = vunpack.c.0.s8 %v2660
    %v2662 = vlaneseq
    %v2663 = vshrl.u32 %v2662, 7
    %v2664 = vsub.s32 %v2661, %v2663
    %v2665 = vrot.slane %v2643, %v2664
    %v2667 = vunpack.c.l.s4 1966171168
    %v2668 = vunpack.c.0.s8 %v2667
    %v2669 = vlaneseq
    %v2670 = vshrl.u32 %v2669, 7
    %v2671 = vsub.s32 %v2668, %v2670
    %v2672 = vrot.slane %v2644, %v2671
    %v2673 = vcombine.low %v2651, %v2658
    %v2674 = vcombine.low %v2665, %v2672
    %v2676 = vunpack.c.l.s4 1966171168
    %v2677 = vunpack.c.0.s8 %v2676
    %v2678 = vlaneseq
    %v2679 = vshrl.u32 %v2678, 7
    %v2680 = vsub.s32 %v2677, %v2679
    %v2681 = vrot.slane %v2673, %v2680
    %v2683 = vunpack.c.l.s4 1966171168
    %v2684 = vunpack.c.0.s8 %v2683
    %v2685 = vlaneseq
    %v2686 = vshrl.u32 %v2685, 7
    %v2687 = vsub.s32 %v2684, %v2686
    %v2688 = vrot.slane %v2674, %v2687
    %v2689 = vcombine.low %v2681, %v2688
    %v2690 = vcombine.low %v1414, %v1418
    %v2691 = vcombine.low %v1422, %v1426
    %v2692 = vcombine.low %v1430, %v1434
    %v2693 = vcombine.low %v1438, %v1442
    %v2695 = vunpack.c.l.s4 1966171168
    %v2696 = vunpack.c.0.s8 %v2695
    %v2697 = vlaneseq
    %v2698 = vshrl.u32 %v2697, 7
    %v2699 = vsub.s32 %v2696, %v2698
    %v2700 = vrot.slane %v2690, %v2699
    %v2702 = vunpack.c.l.s4 1966171168
    %v2703 = vunpack.c.0.s8 %v2702
    %v2704 = vlaneseq
    %v2705 = vshrl.u32 %v2704, 7
    %v2706 = vsub.s32 %v2703, %v2705
    %v2707 = vrot.slane %v2691, %v2706
    %v2709 = vunpack.c.l.s4 1966171168
    %v2710 = vunpack.c.0.s8 %v2709
    %v2711 = vlaneseq
    %v2712 = vshrl.u32 %v2711, 7
    %v2713 = vsub.s32 %v2710, %v2712
    %v2714 = vrot.slane %v2692, %v2713
    %v2716 = vunpack.c.l.s4 1966171168
    %v2717 = vunpack.c.0.s8 %v2716
    %v2718 = vlaneseq
    %v2719 = vshrl.u32 %v2718, 7
    %v2720 = vsub.s32 %v2717, %v2719
    %v2721 = vrot.slane %v2693, %v2720
    %v2722 = vcombine.low %v2700, %v2707
    %v2723 = vcombine.low %v2714, %v2721
    %v2725 = vunpack.c.l.s4 1966171168
    %v2726 = vunpack.c.0.s8 %v2725
    %v2727 = vlaneseq
    %v2728 = vshrl.u32 %v2727, 7
    %v2729 = vsub.s32 %v2726, %v2728
    %v2730 = vrot.slane %v2722, %v2729
    %v2732 = vunpack.c.l.s4 1966171168
    %v2733 = vunpack.c.0.s8 %v2732
    %v2734 = vlaneseq
    %v2735 = vshrl.u32 %v2734, 7
    %v2736 = vsub.s32 %v2733, %v2735
    %v2737 = vrot.slane %v2723, %v2736
    %v2738 = vcombine.low %v2730, %v2737
    %v2739 = vcombine.low %v1446, %v1450
    %v2740 = vcombine.low %v1454, %v1458
    %v2741 = vcombine.low %v1462, %v1466
    %v2742 = vcombine.low %v1470, %v1474
    %v2744 = vunpack.c.l.s4 1966171168
    %v2745 = vunpack.c.0.s8 %v2744
    %v2746 = vlaneseq
    %v2747 = vshrl.u32 %v2746, 7
    %v2748 = vsub.s32 %v2745, %v2747
    %v2749 = vrot.slane %v2739, %v2748
    %v2751 = vunpack.c.l.s4 1966171168
    %v2752 = vunpack.c.0.s8 %v2751
    %v2753 = vlaneseq
    %v2754 = vshrl.u32 %v2753, 7
    %v2755 = vsub.s32 %v2752, %v2754
    %v2756 = vrot.slane %v2740, %v2755
    %v2758 = vunpack.c.l.s4 1966171168
    %v2759 = vunpack.c.0.s8 %v2758
    %v2760 = vlaneseq
    %v2761 = vshrl.u32 %v2760, 7
    %v2762 = vsub.s32 %v2759, %v2761
    %v2763 = vrot.slane %v2741, %v2762
    %v2765 = vunpack.c.l.s4 1966171168
    %v2766 = vunpack.c.0.s8 %v2765
    %v2767 = vlaneseq
    %v2768 = vshrl.u32 %v2767, 7
    %v2769 = vsub.s32 %v2766, %v2768
    %v2770 = vrot.slane %v2742, %v2769
    %v2771 = vcombine.low %v2749, %v2756
    %v2772 = vcombine.low %v2763, %v2770
    %v2774 = vunpack.c.l.s4 1966171168
    %v2775 = vunpack.c.0.s8 %v2774
    %v2776 = vlaneseq
    %v2777 = vshrl.u32 %v2776, 7
    %v2778 = vsub.s32 %v2775, %v2777
    %v2779 = vrot.slane %v2771, %v2778
    %v2781 = vunpack.c.l.s4 1966171168
    %v2782 = vunpack.c.0.s8 %v2781
    %v2783 = vlaneseq
    %v2784 = vshrl.u32 %v2783, 7
    %v2785 = vsub.s32 %v2782, %v2784
    %v2786 = vrot.slane %v2772, %v2785
    %v2787 = vcombine.low %v2779, %v2786
    %v2788 = vcombine.low %v1478, %v1482
    %v2789 = vcombine.low %v1486, %v1490
    %v2790 = vcombine.low %v1494, %v1498
    %v2791 = vcombine.low %v1502, %v1506
    %v2793 = vunpack.c.l.s4 1966171168
    %v2794 = vunpack.c.0.s8 %v2793
    %v2795 = vlaneseq
    %v2796 = vshrl.u32 %v2795, 7
    %v2797 = vsub.s32 %v2794, %v2796
    %v2798 = vrot.slane %v2788, %v2797
    %v2800 = vunpack.c.l.s4 1966171168
    %v2801 = vunpack.c.0.s8 %v2800
    %v2802 = vlaneseq
    %v2803 = vshrl.u32 %v2802, 7
    %v2804 = vsub.s32 %v2801, %v2803
    %v2805 = vrot.slane %v2789, %v2804
    %v2807 = vunpack.c.l.s4 1966171168
    %v2808 = vunpack.c.0.s8 %v2807
    %v2809 = vlaneseq
    %v2810 = vshrl.u32 %v2809, 7
    %v2811 = vsub.s32 %v2808, %v2810
    %v2812 = vrot.slane %v2790, %v2811
    %v2814 = vunpack.c.l.s4 1966171168
    %v2815 = vunpack.c.0.s8 %v2814
    %v2816 = vlaneseq
    %v2817 = vshrl.u32 %v2816, 7
    %v2818 = vsub.s32 %v2815, %v2817
    %v2819 = vrot.slane %v2791, %v2818
    %v2820 = vcombine.low %v2798, %v2805
    %v2821 = vcombine.low %v2812, %v2819
    %v2823 = vunpack.c.l.s4 1966171168
    %v2824 = vunpack.c.0.s8 %v2823
    %v2825 = vlaneseq
    %v2826 = vshrl.u32 %v2825, 7
    %v2827 = vsub.s32 %v2824, %v2826
    %v2828 = vrot.slane %v2820, %v2827
    %v2830 = vunpack.c.l.s4 1966171168
    %v2831 = vunpack.c.0.s8 %v2830
    %v2832 = vlaneseq
    %v2833 = vshrl.u32 %v2832, 7
    %v2834 = vsub.s32 %v2831, %v2833
    %v2835 = vrot.slane %v2821, %v2834
    %v2836 = vcombine.low %v2828, %v2835
    %v2837 = vcombine.low %v1510, %v1514
    %v2838 = vcombine.low %v1518, %v1522
    %v2839 = vcombine.low %v1526, %v1530
    %v2840 = vcombine.low %v1534, %v1538
    %v2842 = vunpack.c.l.s4 1966171168
    %v2843 = vunpack.c.0.s8 %v2842
    %v2844 = vlaneseq
    %v2845 = vshrl.u32 %v2844, 7
    %v2846 = vsub.s32 %v2843, %v2845
    %v2847 = vrot.slane %v2837, %v2846
    %v2849 = vunpack.c.l.s4 1966171168
    %v2850 = vunpack.c.0.s8 %v2849
    %v2851 = vlaneseq
    %v2852 = vshrl.u32 %v2851, 7
    %v2853 = vsub.s32 %v2850, %v2852
    %v2854 = vrot.slane %v2838, %v2853
    %v2856 = vunpack.c.l.s4 1966171168
    %v2857 = vunpack.c.0.s8 %v2856
    %v2858 = vlaneseq
    %v2859 = vshrl.u32 %v2858, 7
    %v2860 = vsub.s32 %v2857, %v2859
    %v2861 = vrot.slane %v2839, %v2860
    %v2863 = vunpack.c.l.s4 1966171168
    %v2864 = vunpack.c.0.s8 %v2863
    %v2865 = vlaneseq
    %v2866 = vshrl.u32 %v2865, 7
    %v2867 = vsub.s32 %v2864, %v2866
    %v2868 = vrot.slane %v2840, %v2867
    %v2869 = vcombine.low %v2847, %v2854
    %v2870 = vcombine.low %v2861, %v2868
    %v2872 = vunpack.c.l.s4 1966171168
    %v2873 = vunpack.c.0.s8 %v2872
    %v2874 = vlaneseq
    %v2875 = vshrl.u32 %v2874, 7
    %v2876 = vsub.s32 %v2873, %v2875
    %v2877 = vrot.slane %v2869, %v2876
    %v2879 = vunpack.c.l.s4 1966171168
    %v2880 = vunpack.c.0.s8 %v2879
    %v2881 = vlaneseq
    %v2882 = vshrl.u32 %v2881, 7
    %v2883 = vsub.s32 %v2880, %v2882
    %v2884 = vrot.slane %v2870, %v2883
    %v2885 = vcombine.low %v2877, %v2884
    %v2886 = vcombine.low %v1542, %v1546
    %v2887 = vcombine.low %v1550, %v1554
    %v2888 = vcombine.low %v1558, %v1562
    %v2889 = vcombine.low %v1566, %v1570
    %v2891 = vunpack.c.l.s4 1966171168
    %v2892 = vunpack.c.0.s8 %v2891
    %v2893 = vlaneseq
    %v2894 = vshrl.u32 %v2893, 7
    %v2895 = vsub.s32 %v2892, %v2894
    %v2896 = vrot.slane %v2886, %v2895
    %v2898 = vunpack.c.l.s4 1966171168
    %v2899 = vunpack.c.0.s8 %v2898
    %v2900 = vlaneseq
    %v2901 = vshrl.u32 %v2900, 7
    %v2902 = vsub.s32 %v2899, %v2901
    %v2903 = vrot.slane %v2887, %v2902
    %v2905 = vunpack.c.l.s4 1966171168
    %v2906 = vunpack.c.0.s8 %v2905
    %v2907 = vlaneseq
    %v2908 = vshrl.u32 %v2907, 7
    %v2909 = vsub.s32 %v2906, %v2908
    %v2910 = vrot.slane %v2888, %v2909
    %v2912 = vunpack.c.l.s4 1966171168
    %v2913 = vunpack.c.0.s8 %v2912
    %v2914 = vlaneseq
    %v2915 = vshrl.u32 %v2914, 7
    %v2916 = vsub.s32 %v2913, %v2915
    %v2917 = vrot.slane %v2889, %v2916
    %v2918 = vcombine.low %v2896, %v2903
    %v2919 = vcombine.low %v2910, %v2917
    %v2921 = vunpack.c.l.s4 1966171168
    %v2922 = vunpack.c.0.s8 %v2921
    %v2923 = vlaneseq
    %v2924 = vshrl.u32 %v2923, 7
    %v2925 = vsub.s32 %v2922, %v2924
    %v2926 = vrot.slane %v2918, %v2925
    %v2928 = vunpack.c.l.s4 1966171168
    %v2929 = vunpack.c.0.s8 %v2928
    %v2930 = vlaneseq
    %v2931 = vshrl.u32 %v2930, 7
    %v2932 = vsub.s32 %v2929, %v2931
    %v2933 = vrot.slane %v2919, %v2932
    %v2934 = vcombine.low %v2926, %v2933
    %v2935 = vcombine.low %v1574, %v1578
    %v2936 = vcombine.low %v1582, %v1586
    %v2937 = vcombine.low %v1590, %v1594
    %v2938 = vcombine.low %v1598, %v1602
    %v2940 = vunpack.c.l.s4 1966171168
    %v2941 = vunpack.c.0.s8 %v2940
    %v2942 = vlaneseq
    %v2943 = vshrl.u32 %v2942, 7
    %v2944 = vsub.s32 %v2941, %v2943
    %v2945 = vrot.slane %v2935, %v2944
    %v2947 = vunpack.c.l.s4 1966171168
    %v2948 = vunpack.c.0.s8 %v2947
    %v2949 = vlaneseq
    %v2950 = vshrl.u32 %v2949, 7
    %v2951 = vsub.s32 %v2948, %v2950
    %v2952 = vrot.slane %v2936, %v2951
    %v2954 = vunpack.c.l.s4 1966171168
    %v2955 = vunpack.c.0.s8 %v2954
    %v2956 = vlaneseq
    %v2957 = vshrl.u32 %v2956, 7
    %v2958 = vsub.s32 %v2955, %v2957
    %v2959 = vrot.slane %v2937, %v2958
    %v2961 = vunpack.c.l.s4 1966171168
    %v2962 = vunpack.c.0.s8 %v2961
    %v2963 = vlaneseq
    %v2964 = vshrl.u32 %v2963, 7
    %v2965 = vsub.s32 %v2962, %v2964
    %v2966 = vrot.slane %v2938, %v2965
    %v2967 = vcombine.low %v2945, %v2952
    %v2968 = vcombine.low %v2959, %v2966
    %v2970 = vunpack.c.l.s4 1966171168
    %v2971 = vunpack.c.0.s8 %v2970
    %v2972 = vlaneseq
    %v2973 = vshrl.u32 %v2972, 7
    %v2974 = vsub.s32 %v2971, %v2973
    %v2975 = vrot.slane %v2967, %v2974
    %v2977 = vunpack.c.l.s4 1966171168
    %v2978 = vunpack.c.0.s8 %v2977
    %v2979 = vlaneseq
    %v2980 = vshrl.u32 %v2979, 7
    %v2981 = vsub.s32 %v2978, %v2980
    %v2982 = vrot.slane %v2968, %v2981
    %v2983 = vcombine.low %v2975, %v2982
    %v2984 = vcombine.low %v1606, %v1610
    %v2985 = vcombine.low %v1614, %v1618
    %v2986 = vcombine.low %v1622, %v1626
    %v2987 = vcombine.low %v1630, %v1634
    %v2989 = vunpack.c.l.s4 1966171168
    %v2990 = vunpack.c.0.s8 %v2989
    %v2991 = vlaneseq
    %v2992 = vshrl.u32 %v2991, 7
    %v2993 = vsub.s32 %v2990, %v2992
    %v2994 = vrot.slane %v2984, %v2993
    %v2996 = vunpack.c.l.s4 1966171168
    %v2997 = vunpack.c.0.s8 %v2996
    %v2998 = vlaneseq
    %v2999 = vshrl.u32 %v2998, 7
    %v3000 = vsub.s32 %v2997, %v2999
    %v3001 = vrot.slane %v2985, %v3000
    %v3003 = vunpack.c.l.s4 1966171168
    %v3004 = vunpack.c.0.s8 %v3003
    %v3005 = vlaneseq
    %v3006 = vshrl.u32 %v3005, 7
    %v3007 = vsub.s32 %v3004, %v3006
    %v3008 = vrot.slane %v2986, %v3007
    %v3010 = vunpack.c.l.s4 1966171168
    %v3011 = vunpack.c.0.s8 %v3010
    %v3012 = vlaneseq
    %v3013 = vshrl.u32 %v3012, 7
    %v3014 = vsub.s32 %v3011, %v3013
    %v3015 = vrot.slane %v2987, %v3014
    %v3016 = vcombine.low %v2994, %v3001
    %v3017 = vcombine.low %v3008, %v3015
    %v3019 = vunpack.c.l.s4 1966171168
    %v3020 = vunpack.c.0.s8 %v3019
    %v3021 = vlaneseq
    %v3022 = vshrl.u32 %v3021, 7
    %v3023 = vsub.s32 %v3020, %v3022
    %v3024 = vrot.slane %v3016, %v3023
    %v3026 = vunpack.c.l.s4 1966171168
    %v3027 = vunpack.c.0.s8 %v3026
    %v3028 = vlaneseq
    %v3029 = vshrl.u32 %v3028, 7
    %v3030 = vsub.s32 %v3027, %v3029
    %v3031 = vrot.slane %v3017, %v3030
    %v3032 = vcombine.low %v3024, %v3031
    %v3033 = vcombine.low %v1638, %v1642
    %v3034 = vcombine.low %v1646, %v1650
    %v3035 = vcombine.low %v1654, %v1658
    %v3036 = vcombine.low %v1662, %v1666
    %v3038 = vunpack.c.l.s4 1966171168
    %v3039 = vunpack.c.0.s8 %v3038
    %v3040 = vlaneseq
    %v3041 = vshrl.u32 %v3040, 7
    %v3042 = vsub.s32 %v3039, %v3041
    %v3043 = vrot.slane %v3033, %v3042
    %v3045 = vunpack.c.l.s4 1966171168
    %v3046 = vunpack.c.0.s8 %v3045
    %v3047 = vlaneseq
    %v3048 = vshrl.u32 %v3047, 7
    %v3049 = vsub.s32 %v3046, %v3048
    %v3050 = vrot.slane %v3034, %v3049
    %v3052 = vunpack.c.l.s4 1966171168
    %v3053 = vunpack.c.0.s8 %v3052
    %v3054 = vlaneseq
    %v3055 = vshrl.u32 %v3054, 7
    %v3056 = vsub.s32 %v3053, %v3055
    %v3057 = vrot.slane %v3035, %v3056
    %v3059 = vunpack.c.l.s4 1966171168
    %v3060 = vunpack.c.0.s8 %v3059
    %v3061 = vlaneseq
    %v3062 = vshrl.u32 %v3061, 7
    %v3063 = vsub.s32 %v3060, %v3062
    %v3064 = vrot.slane %v3036, %v3063
    %v3065 = vcombine.low %v3043, %v3050
    %v3066 = vcombine.low %v3057, %v3064
    %v3068 = vunpack.c.l.s4 1966171168
    %v3069 = vunpack.c.0.s8 %v3068
    %v3070 = vlaneseq
    %v3071 = vshrl.u32 %v3070, 7
    %v3072 = vsub.s32 %v3069, %v3071
    %v3073 = vrot.slane %v3065, %v3072
    %v3075 = vunpack.c.l.s4 1966171168
    %v3076 = vunpack.c.0.s8 %v3075
    %v3077 = vlaneseq
    %v3078 = vshrl.u32 %v3077, 7
    %v3079 = vsub.s32 %v3076, %v3078
    %v3080 = vrot.slane %v3066, %v3079
    %v3081 = vcombine.low %v3073, %v3080
    %v3082 = vcombine.low %v1670, %v1674
    %v3083 = vcombine.low %v1678, %v1682
    %v3084 = vcombine.low %v1686, %v1690
    %v3085 = vcombine.low %v1694, %v1698
    %v3087 = vunpack.c.l.s4 1966171168
    %v3088 = vunpack.c.0.s8 %v3087
    %v3089 = vlaneseq
    %v3090 = vshrl.u32 %v3089, 7
    %v3091 = vsub.s32 %v3088, %v3090
    %v3092 = vrot.slane %v3082, %v3091
    %v3094 = vunpack.c.l.s4 1966171168
    %v3095 = vunpack.c.0.s8 %v3094
    %v3096 = vlaneseq
    %v3097 = vshrl.u32 %v3096, 7
    %v3098 = vsub.s32 %v3095, %v3097
    %v3099 = vrot.slane %v3083, %v3098
    %v3101 = vunpack.c.l.s4 1966171168
    %v3102 = vunpack.c.0.s8 %v3101
    %v3103 = vlaneseq
    %v3104 = vshrl.u32 %v3103, 7
    %v3105 = vsub.s32 %v3102, %v3104
    %v3106 = vrot.slane %v3084, %v3105
    %v3108 = vunpack.c.l.s4 1966171168
    %v3109 = vunpack.c.0.s8 %v3108
    %v3110 = vlaneseq
    %v3111 = vshrl.u32 %v3110, 7
    %v3112 = vsub.s32 %v3109, %v3111
    %v3113 = vrot.slane %v3085, %v3112
    %v3114 = vcombine.low %v3092, %v3099
    %v3115 = vcombine.low %v3106, %v3113
    %v3117 = vunpack.c.l.s4 1966171168
    %v3118 = vunpack.c.0.s8 %v3117
    %v3119 = vlaneseq
    %v3120 = vshrl.u32 %v3119, 7
    %v3121 = vsub.s32 %v3118, %v3120
    %v3122 = vrot.slane %v3114, %v3121
    %v3124 = vunpack.c.l.s4 1966171168
    %v3125 = vunpack.c.0.s8 %v3124
    %v3126 = vlaneseq
    %v3127 = vshrl.u32 %v3126, 7
    %v3128 = vsub.s32 %v3125, %v3127
    %v3129 = vrot.slane %v3115, %v3128
    %v3130 = vcombine.low %v3122, %v3129
    %v3131 = vcombine.low %v1702, %v1706
    %v3132 = vcombine.low %v1710, %v1714
    %v3133 = vcombine.low %v1718, %v1722
    %v3134 = vcombine.low %v1726, %v1730
    %v3136 = vunpack.c.l.s4 1966171168
    %v3137 = vunpack.c.0.s8 %v3136
    %v3138 = vlaneseq
    %v3139 = vshrl.u32 %v3138, 7
    %v3140 = vsub.s32 %v3137, %v3139
    %v3141 = vrot.slane %v3131, %v3140
    %v3143 = vunpack.c.l.s4 1966171168
    %v3144 = vunpack.c.0.s8 %v3143
    %v3145 = vlaneseq
    %v3146 = vshrl.u32 %v3145, 7
    %v3147 = vsub.s32 %v3144, %v3146
    %v3148 = vrot.slane %v3132, %v3147
    %v3150 = vunpack.c.l.s4 1966171168
    %v3151 = vunpack.c.0.s8 %v3150
    %v3152 = vlaneseq
    %v3153 = vshrl.u32 %v3152, 7
    %v3154 = vsub.s32 %v3151, %v3153
    %v3155 = vrot.slane %v3133, %v3154
    %v3157 = vunpack.c.l.s4 1966171168
    %v3158 = vunpack.c.0.s8 %v3157
    %v3159 = vlaneseq
    %v3160 = vshrl.u32 %v3159, 7
    %v3161 = vsub.s32 %v3158, %v3160
    %v3162 = vrot.slane %v3134, %v3161
    %v3163 = vcombine.low %v3141, %v3148
    %v3164 = vcombine.low %v3155, %v3162
    %v3166 = vunpack.c.l.s4 1966171168
    %v3167 = vunpack.c.0.s8 %v3166
    %v3168 = vlaneseq
    %v3169 = vshrl.u32 %v3168, 7
    %v3170 = vsub.s32 %v3167, %v3169
    %v3171 = vrot.slane %v3163, %v3170
    %v3173 = vunpack.c.l.s4 1966171168
    %v3174 = vunpack.c.0.s8 %v3173
    %v3175 = vlaneseq
    %v3176 = vshrl.u32 %v3175, 7
    %v3177 = vsub.s32 %v3174, %v3176
    %v3178 = vrot.slane %v3164, %v3177
    %v3179 = vcombine.low %v3171, %v3178
    %v3180 = vcombine.low %v1734, %v1738
    %v3181 = vcombine.low %v1742, %v1746
    %v3182 = vcombine.low %v1750, %v1754
    %v3183 = vcombine.low %v1758, %v1762
    %v3185 = vunpack.c.l.s4 1966171168
    %v3186 = vunpack.c.0.s8 %v3185
    %v3187 = vlaneseq
    %v3188 = vshrl.u32 %v3187, 7
    %v3189 = vsub.s32 %v3186, %v3188
    %v3190 = vrot.slane %v3180, %v3189
    %v3192 = vunpack.c.l.s4 1966171168
    %v3193 = vunpack.c.0.s8 %v3192
    %v3194 = vlaneseq
    %v3195 = vshrl.u32 %v3194, 7
    %v3196 = vsub.s32 %v3193, %v3195
    %v3197 = vrot.slane %v3181, %v3196
    %v3199 = vunpack.c.l.s4 1966171168
    %v3200 = vunpack.c.0.s8 %v3199
    %v3201 = vlaneseq
    %v3202 = vshrl.u32 %v3201, 7
    %v3203 = vsub.s32 %v3200, %v3202
    %v3204 = vrot.slane %v3182, %v3203
    %v3206 = vunpack.c.l.s4 1966171168
    %v3207 = vunpack.c.0.s8 %v3206
    %v3208 = vlaneseq
    %v3209 = vshrl.u32 %v3208, 7
    %v3210 = vsub.s32 %v3207, %v3209
    %v3211 = vrot.slane %v3183, %v3210
    %v3212 = vcombine.low %v3190, %v3197
    %v3213 = vcombine.low %v3204, %v3211
    %v3215 = vunpack.c.l.s4 1966171168
    %v3216 = vunpack.c.0.s8 %v3215
    %v3217 = vlaneseq
    %v3218 = vshrl.u32 %v3217, 7
    %v3219 = vsub.s32 %v3216, %v3218
    %v3220 = vrot.slane %v3212, %v3219
    %v3222 = vunpack.c.l.s4 1966171168
    %v3223 = vunpack.c.0.s8 %v3222
    %v3224 = vlaneseq
    %v3225 = vshrl.u32 %v3224, 7
    %v3226 = vsub.s32 %v3223, %v3225
    %v3227 = vrot.slane %v3213, %v3226
    %v3228 = vcombine.low %v3220, %v3227
    %v3229 = vcombine.low %v1766, %v1770
    %v3230 = vcombine.low %v1774, %v1778
    %v3231 = vcombine.low %v1782, %v1786
    %v3232 = vcombine.low %v1790, %v1794
    %v3234 = vunpack.c.l.s4 1966171168
    %v3235 = vunpack.c.0.s8 %v3234
    %v3236 = vlaneseq
    %v3237 = vshrl.u32 %v3236, 7
    %v3238 = vsub.s32 %v3235, %v3237
    %v3239 = vrot.slane %v3229, %v3238
    %v3241 = vunpack.c.l.s4 1966171168
    %v3242 = vunpack.c.0.s8 %v3241
    %v3243 = vlaneseq
    %v3244 = vshrl.u32 %v3243, 7
    %v3245 = vsub.s32 %v3242, %v3244
    %v3246 = vrot.slane %v3230, %v3245
    %v3248 = vunpack.c.l.s4 1966171168
    %v3249 = vunpack.c.0.s8 %v3248
    %v3250 = vlaneseq
    %v3251 = vshrl.u32 %v3250, 7
    %v3252 = vsub.s32 %v3249, %v3251
    %v3253 = vrot.slane %v3231, %v3252
    %v3255 = vunpack.c.l.s4 1966171168
    %v3256 = vunpack.c.0.s8 %v3255
    %v3257 = vlaneseq
    %v3258 = vshrl.u32 %v3257, 7
    %v3259 = vsub.s32 %v3256, %v3258
    %v3260 = vrot.slane %v3232, %v3259
    %v3261 = vcombine.low %v3239, %v3246
    %v3262 = vcombine.low %v3253, %v3260
    %v3264 = vunpack.c.l.s4 1966171168
    %v3265 = vunpack.c.0.s8 %v3264
    %v3266 = vlaneseq
    %v3267 = vshrl.u32 %v3266, 7
    %v3268 = vsub.s32 %v3265, %v3267
    %v3269 = vrot.slane %v3261, %v3268
    %v3271 = vunpack.c.l.s4 1966171168
    %v3272 = vunpack.c.0.s8 %v3271
    %v3273 = vlaneseq
    %v3274 = vshrl.u32 %v3273, 7
    %v3275 = vsub.s32 %v3272, %v3274
    %v3276 = vrot.slane %v3262, %v3275
    %v3277 = vcombine.low %v3269, %v3276
    %v3278 = vcombine.low %v1798, %v1802
    %v3279 = vcombine.low %v1806, %v1810
    %v3280 = vcombine.low %v1814, %v1818
    %v3281 = vcombine.low %v1822, %v1826
    %v3283 = vunpack.c.l.s4 1966171168
    %v3284 = vunpack.c.0.s8 %v3283
    %v3285 = vlaneseq
    %v3286 = vshrl.u32 %v3285, 7
    %v3287 = vsub.s32 %v3284, %v3286
    %v3288 = vrot.slane %v3278, %v3287
    %v3290 = vunpack.c.l.s4 1966171168
    %v3291 = vunpack.c.0.s8 %v3290
    %v3292 = vlaneseq
    %v3293 = vshrl.u32 %v3292, 7
    %v3294 = vsub.s32 %v3291, %v3293
    %v3295 = vrot.slane %v3279, %v3294
    %v3297 = vunpack.c.l.s4 1966171168
    %v3298 = vunpack.c.0.s8 %v3297
    %v3299 = vlaneseq
    %v3300 = vshrl.u32 %v3299, 7
    %v3301 = vsub.s32 %v3298, %v3300
    %v3302 = vrot.slane %v3280, %v3301
    %v3304 = vunpack.c.l.s4 1966171168
    %v3305 = vunpack.c.0.s8 %v3304
    %v3306 = vlaneseq
    %v3307 = vshrl.u32 %v3306, 7
    %v3308 = vsub.s32 %v3305, %v3307
    %v3309 = vrot.slane %v3281, %v3308
    %v3310 = vcombine.low %v3288, %v3295
    %v3311 = vcombine.low %v3302, %v3309
    %v3313 = vunpack.c.l.s4 1966171168
    %v3314 = vunpack.c.0.s8 %v3313
    %v3315 = vlaneseq
    %v3316 = vshrl.u32 %v3315, 7
    %v3317 = vsub.s32 %v3314, %v3316
    %v3318 = vrot.slane %v3310, %v3317
    %v3320 = vunpack.c.l.s4 1966171168
    %v3321 = vunpack.c.0.s8 %v3320
    %v3322 = vlaneseq
    %v3323 = vshrl.u32 %v3322, 7
    %v3324 = vsub.s32 %v3321, %v3323
    %v3325 = vrot.slane %v3311, %v3324
    %v3326 = vcombine.low %v3318, %v3325
    %v3327 = vcombine.low %v1830, %v1834
    %v3328 = vcombine.low %v1838, %v1842
    %v3329 = vcombine.low %v1846, %v1850
    %v3330 = vcombine.low %v1854, %v1858
    %v3332 = vunpack.c.l.s4 1966171168
    %v3333 = vunpack.c.0.s8 %v3332
    %v3334 = vlaneseq
    %v3335 = vshrl.u32 %v3334, 7
    %v3336 = vsub.s32 %v3333, %v3335
    %v3337 = vrot.slane %v3327, %v3336
    %v3339 = vunpack.c.l.s4 1966171168
    %v3340 = vunpack.c.0.s8 %v3339
    %v3341 = vlaneseq
    %v3342 = vshrl.u32 %v3341, 7
    %v3343 = vsub.s32 %v3340, %v3342
    %v3344 = vrot.slane %v3328, %v3343
    %v3346 = vunpack.c.l.s4 1966171168
    %v3347 = vunpack.c.0.s8 %v3346
    %v3348 = vlaneseq
    %v3349 = vshrl.u32 %v3348, 7
    %v3350 = vsub.s32 %v3347, %v3349
    %v3351 = vrot.slane %v3329, %v3350
    %v3353 = vunpack.c.l.s4 1966171168
    %v3354 = vunpack.c.0.s8 %v3353
    %v3355 = vlaneseq
    %v3356 = vshrl.u32 %v3355, 7
    %v3357 = vsub.s32 %v3354, %v3356
    %v3358 = vrot.slane %v3330, %v3357
    %v3359 = vcombine.low %v3337, %v3344
    %v3360 = vcombine.low %v3351, %v3358
    %v3362 = vunpack.c.l.s4 1966171168
    %v3363 = vunpack.c.0.s8 %v3362
    %v3364 = vlaneseq
    %v3365 = vshrl.u32 %v3364, 7
    %v3366 = vsub.s32 %v3363, %v3365
    %v3367 = vrot.slane %v3359, %v3366
    %v3369 = vunpack.c.l.s4 1966171168
    %v3370 = vunpack.c.0.s8 %v3369
    %v3371 = vlaneseq
    %v3372 = vshrl.u32 %v3371, 7
    %v3373 = vsub.s32 %v3370, %v3372
    %v3374 = vrot.slane %v3360, %v3373
    %v3375 = vcombine.low %v3367, %v3374
    %v3376 = vcombine.low %v1862, %v1866
    %v3377 = vcombine.low %v1870, %v1874
    %v3378 = vcombine.low %v1878, %v1882
    %v3379 = vcombine.low %v1886, %v1890
    %v3381 = vunpack.c.l.s4 1966171168
    %v3382 = vunpack.c.0.s8 %v3381
    %v3383 = vlaneseq
    %v3384 = vshrl.u32 %v3383, 7
    %v3385 = vsub.s32 %v3382, %v3384
    %v3386 = vrot.slane %v3376, %v3385
    %v3388 = vunpack.c.l.s4 1966171168
    %v3389 = vunpack.c.0.s8 %v3388
    %v3390 = vlaneseq
    %v3391 = vshrl.u32 %v3390, 7
    %v3392 = vsub.s32 %v3389, %v3391
    %v3393 = vrot.slane %v3377, %v3392
    %v3395 = vunpack.c.l.s4 1966171168
    %v3396 = vunpack.c.0.s8 %v3395
    %v3397 = vlaneseq
    %v3398 = vshrl.u32 %v3397, 7
    %v3399 = vsub.s32 %v3396, %v3398
    %v3400 = vrot.slane %v3378, %v3399
    %v3402 = vunpack.c.l.s4 1966171168
    %v3403 = vunpack.c.0.s8 %v3402
    %v3404 = vlaneseq
    %v3405 = vshrl.u32 %v3404, 7
    %v3406 = vsub.s32 %v3403, %v3405
    %v3407 = vrot.slane %v3379, %v3406
    %v3408 = vcombine.low %v3386, %v3393
    %v3409 = vcombine.low %v3400, %v3407
    %v3411 = vunpack.c.l.s4 1966171168
    %v3412 = vunpack.c.0.s8 %v3411
    %v3413 = vlaneseq
    %v3414 = vshrl.u32 %v3413, 7
    %v3415 = vsub.s32 %v3412, %v3414
    %v3416 = vrot.slane %v3408, %v3415
    %v3418 = vunpack.c.l.s4 1966171168
    %v3419 = vunpack.c.0.s8 %v3418
    %v3420 = vlaneseq
    %v3421 = vshrl.u32 %v3420, 7
    %v3422 = vsub.s32 %v3419, %v3421
    %v3423 = vrot.slane %v3409, %v3422
    %v3424 = vcombine.low %v3416, %v3423
    %v3425 = vcombine.low %v1894, %v1898
    %v3426 = vcombine.low %v1902, %v1906
    %v3427 = vcombine.low %v1910, %v1914
    %v3428 = vcombine.low %v1918, %v1922
    %v3430 = vunpack.c.l.s4 1966171168
    %v3431 = vunpack.c.0.s8 %v3430
    %v3432 = vlaneseq
    %v3433 = vshrl.u32 %v3432, 7
    %v3434 = vsub.s32 %v3431, %v3433
    %v3435 = vrot.slane %v3425, %v3434
    %v3437 = vunpack.c.l.s4 1966171168
    %v3438 = vunpack.c.0.s8 %v3437
    %v3439 = vlaneseq
    %v3440 = vshrl.u32 %v3439, 7
    %v3441 = vsub.s32 %v3438, %v3440
    %v3442 = vrot.slane %v3426, %v3441
    %v3444 = vunpack.c.l.s4 1966171168
    %v3445 = vunpack.c.0.s8 %v3444
    %v3446 = vlaneseq
    %v3447 = vshrl.u32 %v3446, 7
    %v3448 = vsub.s32 %v3445, %v3447
    %v3449 = vrot.slane %v3427, %v3448
    %v3451 = vunpack.c.l.s4 1966171168
    %v3452 = vunpack.c.0.s8 %v3451
    %v3453 = vlaneseq
    %v3454 = vshrl.u32 %v3453, 7
    %v3455 = vsub.s32 %v3452, %v3454
    %v3456 = vrot.slane %v3428, %v3455
    %v3457 = vcombine.low %v3435, %v3442
    %v3458 = vcombine.low %v3449, %v3456
    %v3460 = vunpack.c.l.s4 1966171168
    %v3461 = vunpack.c.0.s8 %v3460
    %v3462 = vlaneseq
    %v3463 = vshrl.u32 %v3462, 7
    %v3464 = vsub.s32 %v3461, %v3463
    %v3465 = vrot.slane %v3457, %v3464
    %v3467 = vunpack.c.l.s4 1966171168
    %v3468 = vunpack.c.0.s8 %v3467
    %v3469 = vlaneseq
    %v3470 = vshrl.u32 %v3469, 7
    %v3471 = vsub.s32 %v3468, %v3470
    %v3472 = vrot.slane %v3458, %v3471
    %v3473 = vcombine.low %v3465, %v3472
    %v3474 = vcombine.low %v1926, %v1930
    %v3475 = vcombine.low %v1934, %v1938
    %v3476 = vcombine.low %v1942, %v1946
    %v3477 = vcombine.low %v1950, %v1954
    %v3479 = vunpack.c.l.s4 1966171168
    %v3480 = vunpack.c.0.s8 %v3479
    %v3481 = vlaneseq
    %v3482 = vshrl.u32 %v3481, 7
    %v3483 = vsub.s32 %v3480, %v3482
    %v3484 = vrot.slane %v3474, %v3483
    %v3486 = vunpack.c.l.s4 1966171168
    %v3487 = vunpack.c.0.s8 %v3486
    %v3488 = vlaneseq
    %v3489 = vshrl.u32 %v3488, 7
    %v3490 = vsub.s32 %v3487, %v3489
    %v3491 = vrot.slane %v3475, %v3490
    %v3493 = vunpack.c.l.s4 1966171168
    %v3494 = vunpack.c.0.s8 %v3493
    %v3495 = vlaneseq
    %v3496 = vshrl.u32 %v3495, 7
    %v3497 = vsub.s32 %v3494, %v3496
    %v3498 = vrot.slane %v3476, %v3497
    %v3500 = vunpack.c.l.s4 1966171168
    %v3501 = vunpack.c.0.s8 %v3500
    %v3502 = vlaneseq
    %v3503 = vshrl.u32 %v3502, 7
    %v3504 = vsub.s32 %v3501, %v3503
    %v3505 = vrot.slane %v3477, %v3504
    %v3506 = vcombine.low %v3484, %v3491
    %v3507 = vcombine.low %v3498, %v3505
    %v3509 = vunpack.c.l.s4 1966171168
    %v3510 = vunpack.c.0.s8 %v3509
    %v3511 = vlaneseq
    %v3512 = vshrl.u32 %v3511, 7
    %v3513 = vsub.s32 %v3510, %v3512
    %v3514 = vrot.slane %v3506, %v3513
    %v3516 = vunpack.c.l.s4 1966171168
    %v3517 = vunpack.c.0.s8 %v3516
    %v3518 = vlaneseq
    %v3519 = vshrl.u32 %v3518, 7
    %v3520 = vsub.s32 %v3517, %v3519
    %v3521 = vrot.slane %v3507, %v3520
    %v3522 = vcombine.low %v3514, %v3521
    %3523 = vset.pattern.permute.xlu0 0
    %3524 = vperm.xlu0 %3523, %v2003
    %v3525 = vpop.permute.xlu0 %3524
    %3526 = vset.pattern.permute.xlu0 0
    %3527 = vperm.xlu0 %3526, %v2052
    %v3528 = vpop.permute.xlu0 %3527
    %3529 = vset.pattern.permute.xlu0 0
    %3530 = vperm.xlu0 %3529, %v2101
    %v3531 = vpop.permute.xlu0 %3530
    %3532 = vset.pattern.permute.xlu0 0
    %3533 = vperm.xlu0 %3532, %v2150
    %v3534 = vpop.permute.xlu0 %3533
    %3535 = vset.pattern.permute.xlu0 0
    %3536 = vperm.xlu0 %3535, %v2199
    %v3537 = vpop.permute.xlu0 %3536
    %3538 = vset.pattern.permute.xlu0 0
    %3539 = vperm.xlu0 %3538, %v2248
    %v3540 = vpop.permute.xlu0 %3539
    %3541 = vset.pattern.permute.xlu0 0
    %3542 = vperm.xlu0 %3541, %v2297
    %v3543 = vpop.permute.xlu0 %3542
    %3544 = vset.pattern.permute.xlu0 0
    %3545 = vperm.xlu0 %3544, %v2346
    %v3546 = vpop.permute.xlu0 %3545
    %3547 = vset.pattern.permute.xlu0 0
    %3548 = vperm.xlu0 %3547, %v2395
    %v3549 = vpop.permute.xlu0 %3548
    %3550 = vset.pattern.permute.xlu0 0
    %3551 = vperm.xlu0 %3550, %v2444
    %v3552 = vpop.permute.xlu0 %3551
    %3553 = vset.pattern.permute.xlu0 0
    %3554 = vperm.xlu0 %3553, %v2493
    %v3555 = vpop.permute.xlu0 %3554
    %3556 = vset.pattern.permute.xlu0 0
    %3557 = vperm.xlu0 %3556, %v2542
    %v3558 = vpop.permute.xlu0 %3557
    %3559 = vset.pattern.permute.xlu0 0
    %3560 = vperm.xlu0 %3559, %v2591
    %v3561 = vpop.permute.xlu0 %3560
    %3562 = vset.pattern.permute.xlu0 0
    %3563 = vperm.xlu0 %3562, %v2640
    %v3564 = vpop.permute.xlu0 %3563
    %3565 = vset.pattern.permute.xlu0 0
    %3566 = vperm.xlu0 %3565, %v2689
    %v3567 = vpop.permute.xlu0 %3566
    %3568 = vset.pattern.permute.xlu0 0
    %3569 = vperm.xlu0 %3568, %v2738
    %v3570 = vpop.permute.xlu0 %3569
    %3571 = vset.pattern.permute.xlu0 0
    %3572 = vperm.xlu0 %3571, %v2787
    %v3573 = vpop.permute.xlu0 %3572
    %3574 = vset.pattern.permute.xlu0 0
    %3575 = vperm.xlu0 %3574, %v2836
    %v3576 = vpop.permute.xlu0 %3575
    %3577 = vset.pattern.permute.xlu0 0
    %3578 = vperm.xlu0 %3577, %v2885
    %v3579 = vpop.permute.xlu0 %3578
    %3580 = vset.pattern.permute.xlu0 0
    %3581 = vperm.xlu0 %3580, %v2934
    %v3582 = vpop.permute.xlu0 %3581
    %3583 = vset.pattern.permute.xlu0 0
    %3584 = vperm.xlu0 %3583, %v2983
    %v3585 = vpop.permute.xlu0 %3584
    %3586 = vset.pattern.permute.xlu0 0
    %3587 = vperm.xlu0 %3586, %v3032
    %v3588 = vpop.permute.xlu0 %3587
    %3589 = vset.pattern.permute.xlu0 0
    %3590 = vperm.xlu0 %3589, %v3081
    %v3591 = vpop.permute.xlu0 %3590
    %3592 = vset.pattern.permute.xlu0 0
    %3593 = vperm.xlu0 %3592, %v3130
    %v3594 = vpop.permute.xlu0 %3593
    %3595 = vset.pattern.permute.xlu0 0
    %3596 = vperm.xlu0 %3595, %v3179
    %v3597 = vpop.permute.xlu0 %3596
    %3598 = vset.pattern.permute.xlu0 0
    %3599 = vperm.xlu0 %3598, %v3228
    %v3600 = vpop.permute.xlu0 %3599
    %3601 = vset.pattern.permute.xlu0 0
    %3602 = vperm.xlu0 %3601, %v3277
    %v3603 = vpop.permute.xlu0 %3602
    %3604 = vset.pattern.permute.xlu0 0
    %3605 = vperm.xlu0 %3604, %v3326
    %v3606 = vpop.permute.xlu0 %3605
    %3607 = vset.pattern.permute.xlu0 0
    %3608 = vperm.xlu0 %3607, %v3375
    %v3609 = vpop.permute.xlu0 %3608
    %3610 = vset.pattern.permute.xlu0 0
    %3611 = vperm.xlu0 %3610, %v3424
    %v3612 = vpop.permute.xlu0 %3611
    %3613 = vset.pattern.permute.xlu0 0
    %3614 = vperm.xlu0 %3613, %v3473
    %v3615 = vpop.permute.xlu0 %3614
    %3616 = vset.pattern.permute.xlu0 0
    %3617 = vperm.xlu0 %3616, %v3522
    %v3618 = vpop.permute.xlu0 %3617
    %v3619 = vlaneseq
    %v3620 = vand.u32 %v3619, 127
    %v3621 = vlaneseq
    %v3622 = vshrl.u32 %v3621, 7
    %v3623 = vsub.s32 %v3620, %v3622
    %v3624 = vrot.slane %v3525, %v3623
    %v3625 = vadd.s32 %v3620, 4294967288
    %v3626 = vlaneseq
    %v3627 = vshrl.u32 %v3626, 7
    %v3628 = vsub.s32 %v3625, %v3627
    %v3629 = vrot.slane %v3528, %v3628
    %vm3630 = vcmask 130112
    %v3631 = vsel %vm3630, %v3629, %v3624
    %v3632 = vadd.s32 %v3620, 4294967280
    %v3633 = vlaneseq
    %v3634 = vshrl.u32 %v3633, 7
    %v3635 = vsub.s32 %v3632, %v3634
    %v3636 = vrot.slane %v3531, %v3635
    %vm3637 = vcmask 195712
    %v3638 = vsel %vm3637, %v3636, %v3631
    %v3639 = vadd.s32 %v3620, 4294967272
    %v3640 = vlaneseq
    %v3641 = vshrl.u32 %v3640, 7
    %v3642 = vsub.s32 %v3639, %v3641
    %v3643 = vrot.slane %v3534, %v3642
    %vm3644 = vcmask 261312
    %v3645 = vsel %vm3644, %v3643, %v3638
    %v3646 = vadd.s32 %v3620, 4294967264
    %v3647 = vlaneseq
    %v3648 = vshrl.u32 %v3647, 7
    %v3649 = vsub.s32 %v3646, %v3648
    %v3650 = vrot.slane %v3537, %v3649
    %vm3651 = vcmask 326912
    %v3652 = vsel %vm3651, %v3650, %v3645
    %v3653 = vadd.s32 %v3620, 4294967256
    %v3654 = vlaneseq
    %v3655 = vshrl.u32 %v3654, 7
    %v3656 = vsub.s32 %v3653, %v3655
    %v3657 = vrot.slane %v3540, %v3656
    %vm3658 = vcmask 392512
    %v3659 = vsel %vm3658, %v3657, %v3652
    %v3660 = vadd.s32 %v3620, 4294967248
    %v3661 = vlaneseq
    %v3662 = vshrl.u32 %v3661, 7
    %v3663 = vsub.s32 %v3660, %v3662
    %v3664 = vrot.slane %v3543, %v3663
    %vm3665 = vcmask 458112
    %v3666 = vsel %vm3665, %v3664, %v3659
    %v3667 = vadd.s32 %v3620, 4294967240
    %v3668 = vlaneseq
    %v3669 = vshrl.u32 %v3668, 7
    %v3670 = vsub.s32 %v3667, %v3669
    %v3671 = vrot.slane %v3546, %v3670
    %vm3672 = vcmask 523712
    %v3673 = vsel %vm3672, %v3671, %v3666
    %v3674 = vadd.s32 %v3620, 4294967232
    %v3675 = vlaneseq
    %v3676 = vshrl.u32 %v3675, 7
    %v3677 = vsub.s32 %v3674, %v3676
    %v3678 = vrot.slane %v3549, %v3677
    %vm3679 = vcmask 589312
    %v3680 = vsel %vm3679, %v3678, %v3673
    %v3681 = vadd.s32 %v3620, 4294967224
    %v3682 = vlaneseq
    %v3683 = vshrl.u32 %v3682, 7
    %v3684 = vsub.s32 %v3681, %v3683
    %v3685 = vrot.slane %v3552, %v3684
    %vm3686 = vcmask 654912
    %v3687 = vsel %vm3686, %v3685, %v3680
    %v3688 = vadd.s32 %v3620, 4294967216
    %v3689 = vlaneseq
    %v3690 = vshrl.u32 %v3689, 7
    %v3691 = vsub.s32 %v3688, %v3690
    %v3692 = vrot.slane %v3555, %v3691
    %vm3693 = vcmask 720512
    %v3694 = vsel %vm3693, %v3692, %v3687
    %v3695 = vadd.s32 %v3620, 4294967208
    %v3696 = vlaneseq
    %v3697 = vshrl.u32 %v3696, 7
    %v3698 = vsub.s32 %v3695, %v3697
    %v3699 = vrot.slane %v3558, %v3698
    %vm3700 = vcmask 786112
    %v3701 = vsel %vm3700, %v3699, %v3694
    %v3702 = vadd.s32 %v3620, 4294967200
    %v3703 = vlaneseq
    %v3704 = vshrl.u32 %v3703, 7
    %v3705 = vsub.s32 %v3702, %v3704
    %v3706 = vrot.slane %v3561, %v3705
    %vm3707 = vcmask 851712
    %v3708 = vsel %vm3707, %v3706, %v3701
    %v3709 = vadd.s32 %v3620, 4294967192
    %v3710 = vlaneseq
    %v3711 = vshrl.u32 %v3710, 7
    %v3712 = vsub.s32 %v3709, %v3711
    %v3713 = vrot.slane %v3564, %v3712
    %vm3714 = vcmask 917312
    %v3715 = vsel %vm3714, %v3713, %v3708
    %v3716 = vadd.s32 %v3620, 4294967184
    %v3717 = vlaneseq
    %v3718 = vshrl.u32 %v3717, 7
    %v3719 = vsub.s32 %v3716, %v3718
    %v3720 = vrot.slane %v3567, %v3719
    %vm3721 = vcmask 982912
    %v3722 = vsel %vm3721, %v3720, %v3715
    %v3723 = vadd.s32 %v3620, 4294967176
    %v3724 = vlaneseq
    %v3725 = vshrl.u32 %v3724, 7
    %v3726 = vsub.s32 %v3723, %v3725
    %v3727 = vrot.slane %v3570, %v3726
    %vm3728 = vcmask 1048512
    %v3729 = vsel %vm3728, %v3727, %v3722
    %v3730 = vlaneseq
    %v3731 = vshrl.u32 %v3730, 7
    %v3732 = vsub.s32 %v3620, %v3731
    %v3733 = vrot.slane %v3573, %v3732
    %v3734 = vlaneseq
    %v3735 = vshrl.u32 %v3734, 7
    %v3736 = vsub.s32 %v3625, %v3735
    %v3737 = vrot.slane %v3576, %v3736
    %v3738 = vsel %vm3630, %v3737, %v3733
    %v3739 = vlaneseq
    %v3740 = vshrl.u32 %v3739, 7
    %v3741 = vsub.s32 %v3632, %v3740
    %v3742 = vrot.slane %v3579, %v3741
    %v3743 = vsel %vm3637, %v3742, %v3738
    %v3744 = vlaneseq
    %v3745 = vshrl.u32 %v3744, 7
    %v3746 = vsub.s32 %v3639, %v3745
    %v3747 = vrot.slane %v3582, %v3746
    %v3748 = vsel %vm3644, %v3747, %v3743
    %v3749 = vlaneseq
    %v3750 = vshrl.u32 %v3749, 7
    %v3751 = vsub.s32 %v3646, %v3750
    %v3752 = vrot.slane %v3585, %v3751
    %v3753 = vsel %vm3651, %v3752, %v3748
    %v3754 = vlaneseq
    %v3755 = vshrl.u32 %v3754, 7
    %v3756 = vsub.s32 %v3653, %v3755
    %v3757 = vrot.slane %v3588, %v3756
    %v3758 = vsel %vm3658, %v3757, %v3753
    %v3759 = vlaneseq
    %v3760 = vshrl.u32 %v3759, 7
    %v3761 = vsub.s32 %v3660, %v3760
    %v3762 = vrot.slane %v3591, %v3761
    %v3763 = vsel %vm3665, %v3762, %v3758
    %v3764 = vlaneseq
    %v3765 = vshrl.u32 %v3764, 7
    %v3766 = vsub.s32 %v3667, %v3765
    %v3767 = vrot.slane %v3594, %v3766
    %v3768 = vsel %vm3672, %v3767, %v3763
    %v3769 = vlaneseq
    %v3770 = vshrl.u32 %v3769, 7
    %v3771 = vsub.s32 %v3674, %v3770
    %v3772 = vrot.slane %v3597, %v3771
    %v3773 = vsel %vm3679, %v3772, %v3768
    %v3774 = vlaneseq
    %v3775 = vshrl.u32 %v3774, 7
    %v3776 = vsub.s32 %v3681, %v3775
    %v3777 = vrot.slane %v3600, %v3776
    %v3778 = vsel %vm3686, %v3777, %v3773
    %v3779 = vlaneseq
    %v3780 = vshrl.u32 %v3779, 7
    %v3781 = vsub.s32 %v3688, %v3780
    %v3782 = vrot.slane %v3603, %v3781
    %v3783 = vsel %vm3693, %v3782, %v3778
    %v3784 = vlaneseq
    %v3785 = vshrl.u32 %v3784, 7
    %v3786 = vsub.s32 %v3695, %v3785
    %v3787 = vrot.slane %v3606, %v3786
    %v3788 = vsel %vm3700, %v3787, %v3783
    %v3789 = vlaneseq
    %v3790 = vshrl.u32 %v3789, 7
    %v3791 = vsub.s32 %v3702, %v3790
    %v3792 = vrot.slane %v3609, %v3791
    %v3793 = vsel %vm3707, %v3792, %v3788
    %v3794 = vlaneseq
    %v3795 = vshrl.u32 %v3794, 7
    %v3796 = vsub.s32 %v3709, %v3795
    %v3797 = vrot.slane %v3612, %v3796
    %v3798 = vsel %vm3714, %v3797, %v3793
    %v3799 = vlaneseq
    %v3800 = vshrl.u32 %v3799, 7
    %v3801 = vsub.s32 %v3716, %v3800
    %v3802 = vrot.slane %v3615, %v3801
    %v3803 = vsel %vm3721, %v3802, %v3798
    %v3804 = vlaneseq
    %v3805 = vshrl.u32 %v3804, 7
    %v3806 = vsub.s32 %v3723, %v3805
    %v3807 = vrot.slane %v3618, %v3806
    %v3808 = vsel %vm3728, %v3807, %v3803
    %v3809 = vcombine.low %v3729, %v3808
    %v3811 = vunpack.c.l.s4 1966171168
    %v3812 = vunpack.c.0.s8 %v3811
    %v3813 = vlaneseq
    %v3814 = vshrl.u32 %v3813, 7
    %v3815 = vsub.s32 %v3812, %v3814
    %v3816 = vrot.slane %v3809, %v3815
    %v3818 = vunpack.c.l.s4 1966171168
    %v3819 = vunpack.c.0.s8 %v3818
    %v3820 = vlaneseq
    %v3821 = vshrl.u32 %v3820, 7
    %v3822 = vsub.s32 %v3819, %v3821
    %v3823 = vrot.slane %v3816, %v3822
    %v3825 = vlaneseq
    %vm3826 = vcmp.ge.s32.totalorder %v3825, 0
    %vm3827 = vcmp.lt.s32.totalorder %v3825, 256
    %vm3828 = vmand %vm3826, %vm3827
    %3829 = vst.msk [vmem:[#allocation2] sm:$0x3] %vm3828, %v3823
    // Predicated region
    $region26: #{tpu_custom_call.1} parent=1 // pred_check
      _
    $region27: #{tpu_custom_call.1} parent=1 // pred_check_branch
      %3831 = sbr.rel (0) target = $region29
    $region28: #{tpu_custom_call.1} parent=1 // pred_region
      %s3833 = ssub.s32 32, 32
      %3834 = vsyncadd [#allocation3], %s3833
      %s3836 = sshll.u32 [#allocation2], 4
      %s3837 = int_to_ptr.vmem [resolvable:$true] %s3836
      %3839 = dma.vmem_to_hbm [thread:$0]  %s3837, 32, %s6, [#allocation3]
    $region29: #{tpu_custom_call.1} parent=1 // pred_fallthru
      _
    // Predicated region
    $region30: #{tpu_custom_call.1} parent=1 // pred_check
      _
    $region31: #{tpu_custom_call.1} parent=1 // pred_check_branch
      %3841 = sbr.rel (0) target = $region33
    $region32: #{tpu_custom_call.1} parent=1 // pred_region
      %3842 = dma.done [#allocation3], 32
    $region33: #{tpu_custom_call.1} parent=1 // pred_fallthru
      _
    %3843 = vsyncpa [#allocation3], 1

</llo_original>
